<compile_context>
chip_gen: v5e
topology: v5e:2x2
jax: 0.10.0
libtpu: 0.0.40
codegen_flags: <defaults>
</compile_context>

<pallas_src>
import functools
import math

import jax
import jax.numpy as jnp
from jax import lax
from jax.experimental import pallas as pl
from jax.experimental.pallas import tpu as pltpu

_MXU_DTYPE = jnp.bfloat16  # MXU operand dtype; accumulation stays f32.


def _rup(x, m):
    return (x + m - 1) // m * m


_PAR1 = pltpu.CompilerParams(dimension_semantics=("parallel",))
_PAR2 = pltpu.CompilerParams(dimension_semantics=("parallel", "parallel"))


# ----------------------------- Pallas kernels -----------------------------

def _mm_bias_kernel(a_ref, b_ref, bias_ref, o_ref):
    o_ref[...] = (jnp.dot(a_ref[...].astype(_MXU_DTYPE), b_ref[...],
                          preferred_element_type=jnp.float32) + bias_ref[...])


def _mm_bias_res_ln_kernel(a_ref, b_ref, bias_ref, res_ref, g_ref, beta_ref, o_ref,
                           *, n_valid, eps):
    x = (jnp.dot(a_ref[...].astype(_MXU_DTYPE), b_ref[...],
                 preferred_element_type=jnp.float32)
         + bias_ref[...] + res_ref[...])
    col = lax.broadcasted_iota(jnp.int32, x.shape, 1)
    mask = col < n_valid
    denom = jnp.float32(n_valid)
    mean = jnp.sum(jnp.where(mask, x, 0.0), axis=1, keepdims=True) / denom
    d = jnp.where(mask, x - mean, 0.0)
    var = jnp.sum(d * d, axis=1, keepdims=True) / denom
    o_ref[...] = d * lax.rsqrt(var + eps) * g_ref[...] + beta_ref[...]


def _prelu_mm_bias_kernel(a_ref, alpha_ref, b_ref, bias_ref, o_ref):
    x = a_ref[...]
    x = jnp.maximum(x, 0.0) + alpha_ref[0, 0] * jnp.minimum(x, 0.0)
    o_ref[...] = (jnp.dot(x.astype(_MXU_DTYPE), b_ref[...],
                          preferred_element_type=jnp.float32) + bias_ref[...])


def _head_dec_kernel(x_ref, w_ref, b_ref, e_ref, dw_ref, o_ref, *, half):
    # 1x1 output & gate convs -> tanh * sigmoid -> ReLU -> * encoded -> decoder projection.
    y = (jnp.dot(x_ref[...].astype(_MXU_DTYPE), w_ref[...],
                 preferred_element_type=jnp.float32) + b_ref[...])
    g = jnp.maximum(jnp.tanh(y[:, :half]) * jax.nn.sigmoid(y[:, half:]), 0.0)
    xe = (g * e_ref[...]).astype(_MXU_DTYPE)
    o_ref[...] = jnp.dot(xe, dw_ref[...], preferred_element_type=jnp.float32)


# ----------------------------- Pallas wrappers -----------------------------

def _m_tiling(M, tm_max=1024):
    """Row tiling: big tiles, ragged last tile via cdiv grid, >=2 tiles when possible (v7x)."""
    if M >= 2 * tm_max:
        tm = tm_max
    elif M >= 16:
        tm = _rup((M + 1) // 2, 8)   # two tiles -> both TensorCores busy on v7x
    else:
        tm = M                       # single tiny block (equals full dim)
    return tm, pl.cdiv(M, tm)


def pallas_matmul_bias(a, b, bias):
    """(M, K) f32 @ (K, N) bf16 + bias(1, N) f32 -> (M, N) f32."""
    M, K = a.shape
    _, N = b.shape
    TM, nblk = _m_tiling(M)
    return pl.pallas_call(
        _mm_bias_kernel,
        out_shape=jax.ShapeDtypeStruct((M, N), jnp.float32),
        grid=(nblk,),
        in_specs=[pl.BlockSpec((TM, K), lambda i: (i, 0)),
                  pl.BlockSpec((K, N), lambda i: (0, 0)),
                  pl.BlockSpec((1, N), lambda i: (0, 0))],
        out_specs=pl.BlockSpec((TM, N), lambda i: (i, 0)),
        compiler_params=_PAR1,
    )(a, b, bias)


def pallas_matmul_res_ln(a, b, bias, res, gamma, beta, n_valid, eps=1e-5):
    """LayerNorm(a @ b + bias + res), reduction masked to the first n_valid lanes."""
    M, K = a.shape
    _, N = b.shape
    TM, nblk = _m_tiling(M)
    return pl.pallas_call(
        functools.partial(_mm_bias_res_ln_kernel, n_valid=n_valid, eps=eps),
        out_shape=jax.ShapeDtypeStruct((M, N), jnp.float32),
        grid=(nblk,),
        in_specs=[pl.BlockSpec((TM, K), lambda i: (i, 0)),
                  pl.BlockSpec((K, N), lambda i: (0, 0)),
                  pl.BlockSpec((1, N), lambda i: (0, 0)),
                  pl.BlockSpec((TM, N), lambda i: (i, 0)),
                  pl.BlockSpec((1, N), lambda i: (0, 0)),
                  pl.BlockSpec((1, N), lambda i: (0, 0))],
        out_specs=pl.BlockSpec((TM, N), lambda i: (i, 0)),
        compiler_params=_PAR1,
    )(a, b, bias, res, gamma, beta)


def pallas_prelu_matmul_bias(a, alpha, b, bias):
    """(PReLU(a)) @ b + bias, PReLU fused as a prologue."""
    M, K = a.shape
    _, N = b.shape
    TM, nblk = _m_tiling(M)
    return pl.pallas_call(
        _prelu_mm_bias_kernel,
        out_shape=jax.ShapeDtypeStruct((M, N), jnp.float32),
        grid=(nblk,),
        in_specs=[pl.BlockSpec((TM, K), lambda i: (i, 0)),
                  pl.BlockSpec((1, 1), lambda i: (0, 0)),
                  pl.BlockSpec((K, N), lambda i: (0, 0)),
                  pl.BlockSpec((1, N), lambda i: (0, 0))],
        out_specs=pl.BlockSpec((TM, N), lambda i: (i, 0)),
        compiler_params=_PAR1,
    )(a, alpha, b, bias)


def pallas_head_decode(x2, head_w, head_b, enc2, dec_w, Fp):
    """Per-speaker: gate head + multiply-by-encoded + decoder projection, fused.

    x2:   (M, 2*Fp) separated features (speaker slab s = lanes [s*Fp, (s+1)*Fp))
    enc2: (M, Fp)   encoder output (shared by both speakers)
    out:  (2, M, K) decoder taps per speaker
    """
    M = x2.shape[0]
    K = dec_w.shape[1]
    TM, nblk = _m_tiling(M)
    return pl.pallas_call(
        functools.partial(_head_dec_kernel, half=Fp),
        out_shape=jax.ShapeDtypeStruct((2, M, K), jnp.float32),
        grid=(nblk, 2),
        in_specs=[pl.BlockSpec((TM, Fp), lambda i, s: (i, s)),       # speaker slab
                  pl.BlockSpec((Fp, 2 * Fp), lambda i, s: (0, 0)),   # shared head weights
                  pl.BlockSpec((1, 2 * Fp), lambda i, s: (0, 0)),
                  pl.BlockSpec((TM, Fp), lambda i, s: (i, 0)),       # encoded rows
                  pl.BlockSpec((Fp, K), lambda i, s: (0, 0))],
        out_specs=pl.BlockSpec((None, TM, K), lambda i, s: (s, i, 0)),
        compiler_params=_PAR2,
    )(x2, head_w, head_b, enc2, dec_w)


# ----------------------------- dense chunking / overlap-add (no scatters) -----------------------------

def split_to_folds_cl(x, chunk, step):
    """(B, T, n) -> (B, S, chunk, n).  Dense slab concat when step divides chunk."""
    B, T, n = x.shape
    if T <= chunk:
        pad = chunk - T
    else:
        rem = (T - chunk) % step
        pad = 0 if rem == 0 else step - rem
    xp = jnp.pad(x, ((0, 0), (0, pad), (0, 0)))
    S = (T + pad - chunk) // step + 1
    if chunk % step == 0:
        r = chunk // step
        frames = xp.reshape(B, (T + pad) // step, step, n)           # (B, S+r-1, step, n)
        return jnp.concatenate([frames[:, j:j + S] for j in range(r)], axis=2)
    # TODO(synk): gather fallback for chunk % step != 0 (never hit with standard DPRNN configs).
    idx = (jnp.arange(S) * step)[:, None] + jnp.arange(chunk)[None, :]
    return xp[:, idx]


def overlap_add_chunks_cl(x, step):
    """(B, S, C, n) -> (B, (S-1)*step + C, n) via dense shifted adds when step divides C."""
    B, S, C, n = x.shape
    T = (S - 1) * step + C
    if C % step == 0:
        r = C // step
        acc = None
        for j in range(r):
            slab = jnp.pad(x[:, :, j * step:(j + 1) * step, :],
                           ((0, 0), (j, r - 1 - j), (0, 0), (0, 0)))
            acc = slab if acc is None else acc + slab
        return acc.reshape(B, T, n)
    # TODO(synk): scatter fallback for C % step != 0.
    idx = ((jnp.arange(S) * step)[:, None] + jnp.arange(C)[None, :]).reshape(-1)
    return jnp.zeros((B, T, n), x.dtype).at[:, idx].add(x.reshape(B, S * C, n))


def conv_transpose_overlap_add(y, stride):
    """(..., L, K) decoder taps -> (..., (L-1)*stride + K) via dense shifted adds."""
    *lead, L, K = y.shape
    T = (L - 1) * stride + K
    if K % stride == 0:
        r = K // stride
        acc = None
        for j in range(r):
            slab = y[..., j * stride:(j + 1) * stride]
            pad_cfg = [(0, 0)] * len(lead) + [(j, r - 1 - j), (0, 0)]
            slab = jnp.pad(slab, pad_cfg)
            acc = slab if acc is None else acc + slab
        return acc.reshape(*lead, T)
    # TODO(synk): scatter fallback for K % stride != 0.
    idx = ((jnp.arange(L) * stride)[:, None] + jnp.arange(K)[None, :]).reshape(-1)
    return jnp.zeros((*lead, T), y.dtype).at[..., idx].add(y.reshape(*lead, L * K))


def pad_or_crop_axis(x, axis, left, right):
    """Mimics F.pad on one axis; negative padding crops.  left/right are static ints."""
    axis = axis % x.ndim
    if left < 0:
        x = lax.slice_in_dim(x, -left, x.shape[axis], axis=axis)
        left = 0
    if right < 0:
        x = lax.slice_in_dim(x, 0, x.shape[axis] + right, axis=axis)
        right = 0
    if left or right:
        cfg = [(0, 0)] * x.ndim
        cfg[axis] = (left, right)
        x = jnp.pad(x, cfg)
    return x


# ----------------------------- model forward (glue in JAX) -----------------------------

def mha_context(p, x, num_heads, F, Fp):
    """Self-attention context before the output projection. x: (Bb, L, Fp)."""
    Bb, L, _ = x.shape
    d = F // num_heads
    qkv = pallas_matmul_bias(x.reshape(Bb * L, Fp), p['qkv_w'], p['qkv_b'])  # (M, 3*Fp)

    def heads(s):
        return qkv[:, s * Fp:s * Fp + F].reshape(Bb, L, num_heads, d).transpose(0, 2, 1, 3)

    q, k, v = heads(0), heads(1), heads(2)            # 1/sqrt(d) already folded into Q weights
    scores = jnp.einsum('bhld,bhmd->bhlm', q, k)
    attn = jax.nn.softmax(scores, axis=-1)            # dropout off (eval mode)
    ctx = jnp.einsum('bhlm,bhmd->bhld', attn, v)
    return ctx.transpose(0, 2, 1, 3).reshape(Bb * L, F)


def lstm_forward(p, x):
    """Merged fwd/bwd LSTM: one fused lane-dense input projection, one scan. x: (Bb, L, Fp)."""
    Bb, L, Fp = x.shape
    w_hh_T = p['lstm_w_hh_T']                          # (ndir, H, 4H), pre-transposed
    ndir, H, _ = w_hh_T.shape
    Gp = p['lstm_w_in'].shape[1] // ndir               # lane-dense gate slab per direction
    pre = pallas_matmul_bias(x.reshape(Bb * L, Fp), p['lstm_w_in'], p['lstm_b'])
    pre = pre.reshape(Bb, L, ndir, Gp)[..., :4 * H]    # drop lane padding of the gate slab
    pre = pre.transpose(1, 2, 0, 3)                    # (L, ndir, Bb, 4H)
    if ndir == 2:
        pre = jnp.concatenate([pre[:, :1], pre[::-1, 1:]], axis=1)   # reverse time for bwd dir

    def step(carry, gx):
        h, c = carry                                   # (ndir, Bb, H)
        gates = gx + jnp.einsum('dbh,dhk->dbk', h, w_hh_T)
        i = jax.nn.sigmoid(gates[..., :H])
        f = jax.nn.sigmoid(gates[..., H:2 * H])
        g = jnp.tanh(gates[..., 2 * H:3 * H])
        o = jax.nn.sigmoid(gates[..., 3 * H:])
        c = f * c + i * g
        h = o * jnp.tanh(c)
        return (h, c), h

    init = (jnp.zeros((ndir, Bb, H), jnp.float32), jnp.zeros((ndir, Bb, H), jnp.float32))
    _, ys = lax.scan(step, init, pre)                  # (L, ndir, Bb, H)
    outs = [ys[:, 0]]
    if ndir == 2:
        outs.append(ys[::-1, 1])
    return jnp.concatenate(outs, axis=-1).transpose(1, 0, 2)   # (Bb, L, ndir*H)


def transformer_dprnn(p, x, num_heads, F, Fp):
    Bb, L, _ = x.shape
    x2 = x.reshape(Bb * L, Fp)
    ctx = mha_context(p, x, num_heads, F, Fp)
    x2 = pallas_matmul_res_ln(ctx, p['attn_out_w'], p['attn_out_b'], x2,
                              p['ln1_g'], p['ln1_b'], n_valid=F)
    r = jnp.maximum(lstm_forward(p, x2.reshape(Bb, L, Fp)), 0.0)   # ffn = ReLU -> Linear
    x2 = pallas_matmul_res_ln(r.reshape(Bb * L, r.shape[-1]), p['ffn_w'], p['ffn_b'], x2,
                              p['ln2_g'], p['ln2_b'], n_valid=F)
    return x2.reshape(Bb, L, Fp)


def dptn_forward(p, encoded, chunk, step, num_heads, F, Fp):
    """encoded: (B, T, Fp) channels-last.  Returns separated features (B, T, 2*Fp)."""
    B, T, _ = encoded.shape
    x = split_to_folds_cl(encoded, chunk, step)        # (B, S, C, Fp)
    _, S, C, _ = x.shape
    for blk in p['blocks']:
        # intra: rows grouped (b, s), sequence = chunk -> no transpose needed
        xi = transformer_dprnn(blk['intra'], x.reshape(B * S, C, Fp), num_heads, F, Fp)
        xi = xi.reshape(B, S, C, Fp)
        # inter: rows grouped (b, c), sequence = S -> two transposes per block
        xt = xi.transpose(0, 2, 1, 3).reshape(B * C, S, Fp)
        xo = transformer_dprnn(blk['inter'], xt, num_heads, F, Fp)
        x = xo.reshape(B, C, S, Fp).transpose(0, 2, 1, 3)
    # speakers_separation: PReLU + 1x1 Conv2d(F -> 2F), fused in one Pallas kernel
    y = pallas_prelu_matmul_bias(x.reshape(B * S * C, Fp), p['prelu'], p['sep_w'], p['sep_b'])
    y = y.reshape(B, S, C, 2 * Fp)
    y = overlap_add_chunks_cl(y, step)                 # (B, T_ola, 2*Fp)
    pad_needed = T - y.shape[1]
    return pad_or_crop_axis(y, 1, pad_needed // 2, pad_needed - pad_needed // 2)   # (B, T, 2*Fp)


def encoder_forward(mix, enc_w, K, stride):
    """Conv1d(1, F, K, stride, bias=False), channels-last output (B, L, Fp).
    K is tiny (default 2), so this is K broadcast multiply-adds on the VPU, not an MXU matmul."""
    B, T = mix.shape
    L = (T - K) // stride + 1
    out = None
    for k in range(K):
        tap = lax.slice_in_dim(mix, k, k + (L - 1) * stride + 1, stride=stride, axis=1)  # (B, L)
        term = tap[:, :, None] * enc_w[k][None, None, :]
        out = term if out is None else out + term
    return out                                         # (B, L, Fp), padded lanes = 0


def dptn_encdec_forward(pp, mix, cfg):
    B, ts_wav = mix.shape
    K = cfg['kernel_size_enc']
    stride = K // 2
    F = cfg['num_features']
    Fp = _rup(F, 128)
    encoded = encoder_forward(mix, pp['enc_w'], K, stride)              # (B, L, Fp)
    L = encoded.shape[1]
    sep = dptn_forward(pp['dptn'], encoded, cfg['chunk_size'], cfg['step_size'],
                       cfg['num_heads'], F, Fp)                         # (B, L, 2*Fp)
    # Fused per-speaker head (gate) + multiply-by-encoded + decoder projection
    dec = pallas_head_decode(sep.reshape(B * L, 2 * Fp), pp['dptn']['head_w'],
                             pp['dptn']['head_b'], encoded.reshape(B * L, Fp),
                             pp['dec_w'], Fp)                           # (2, B*L, K)
    dec = dec.reshape(2, B, L, K)
    wav = conv_transpose_overlap_add(dec, stride)                       # (2, B, (L-1)*stride+K)
    pad_needed = ts_wav - wav.shape[-1]
    wav = pad_or_crop_axis(wav, -1, pad_needed // 2, pad_needed - pad_needed // 2)
    return {'s1_pred': wav[0], 's2_pred': wav[1]}


# ----------------------------- deterministic parameter init (PyTorch-shaped) -----------------------------

def _init_linear(key, out_dim, in_dim, scale=0.2):
    kw, kb = jax.random.split(key)
    return (scale * jax.random.normal(kw, (out_dim, in_dim), jnp.float32),
            scale * jax.random.normal(kb, (out_dim,), jnp.float32))


def init_transformer_dprnn(key, F, hidden, bidir):
    keys = jax.random.split(key, 4)
    in_w, in_b = _init_linear(keys[0], 3 * F, F)
    out_w, out_b = _init_linear(keys[1], F, F)
    D = hidden * (2 if bidir else 1)
    ffn_w, ffn_b = _init_linear(keys[2], F, D)
    n_dir = 2 if bidir else 1
    dkeys = jax.random.split(keys[3], n_dir)
    w_ih, w_hh, b_ih, b_hh = [], [], [], []
    for dk in dkeys:
        k1, k2, k3, k4 = jax.random.split(dk, 4)
        w_ih.append(0.2 * jax.random.normal(k1, (4 * hidden, F), jnp.float32))
        w_hh.append(0.2 * jax.random.normal(k2, (4 * hidden, hidden), jnp.float32))
        b_ih.append(0.2 * jax.random.normal(k3, (4 * hidden,), jnp.float32))
        b_hh.append(0.2 * jax.random.normal(k4, (4 * hidden,), jnp.float32))
    return {
        'mha': {'in_w': in_w, 'in_b': in_b, 'out_w': out_w, 'out_b': out_b},
        'ln1_g': jnp.ones((F,), jnp.float32), 'ln1_b': jnp.zeros((F,), jnp.float32),
        'lstm': {'w_ih': w_ih, 'w_hh': w_hh, 'b_ih': b_ih, 'b_hh': b_hh},
        'ffn_w': ffn_w, 'ffn_b': ffn_b,
        'ln2_g': jnp.ones((F,), jnp.float32), 'ln2_b': jnp.zeros((F,), jnp.float32),
    }


def init_params(key, cfg):
    F, H, K = cfg['num_features'], cfg['hidden_dim'], cfg['kernel_size_enc']
    keys = jax.random.split(key, cfg['num_blocks'] + 5)
    blocks = []
    for i in range(cfg['num_blocks']):
        k_intra, k_inter = jax.random.split(keys[i])
        blocks.append({
            'intra': init_transformer_dprnn(k_intra, F, H, True),          # intra: always bidir
            'inter': init_transformer_dprnn(k_inter, F, H, cfg['bidir']),
        })
    kb = keys[cfg['num_blocks']:]
    sep_w, sep_b = _init_linear(kb[0], 2 * F, F)
    gate_w, gate_b = _init_linear(kb[1], F, F)
    out_w, out_b = _init_linear(kb[2], F, F)
    enc_w = 0.2 * jax.random.normal(kb[3], (F, 1, K), jnp.float32)
    dec_w = 0.2 * jax.random.normal(kb[4], (F, 1, K), jnp.float32)
    return {
        'enc_w': enc_w, 'dec_w': dec_w,
        'dptn': {
            'blocks': blocks,
            'prelu': jnp.float32(0.25),   # nn.PReLU() default single parameter
            'sep_w': sep_w, 'sep_b': sep_b,
            'gate_w': gate_w, 'gate_b': gate_b,
            'out_w': out_w, 'out_b': out_b,
        },
    }


# ----------------------------- one-time weight preparation (pad once, bf16, fuse) -----------------------------

def prepare_params(params, cfg):
    F, H, K = cfg['num_features'], cfg['hidden_dim'], cfg['kernel_size_enc']
    nh = cfg['num_heads']
    Fp = _rup(F, 128)
    q_scale = 1.0 / math.sqrt(F // nh)

    def prep_tf(p):
        nd = len(p['lstm']['w_ih'])
        Gp = _rup(4 * H, 128)                    # lane-dense gate slab per direction
        qkv_w = jnp.zeros((Fp, 3 * Fp), jnp.float32)
        qkv_b = jnp.zeros((1, 3 * Fp), jnp.float32)
        for s in range(3):
            scale = q_scale if s == 0 else 1.0   # fold 1/sqrt(head_dim) into Q
            qkv_w = qkv_w.at[:F, s * Fp:s * Fp + F].set(scale * p['mha']['in_w'][s * F:(s + 1) * F].T)
            qkv_b = qkv_b.at[0, s * Fp:s * Fp + F].set(scale * p['mha']['in_b'][s * F:(s + 1) * F])
        attn_out_w = jnp.zeros((F, Fp), jnp.float32).at[:, :F].set(p['mha']['out_w'].T)
        attn_out_b = jnp.zeros((1, Fp), jnp.float32).at[0, :F].set(p['mha']['out_b'])
        lstm_w_in = jnp.zeros((Fp, nd * Gp), jnp.float32)
        lstm_b = jnp.zeros((1, nd * Gp), jnp.float32)
        w_hh_T = []
        for d in range(nd):
            lstm_w_in = lstm_w_in.at[:F, d * Gp:d * Gp + 4 * H].set(p['lstm']['w_ih'][d].T)
            lstm_b = lstm_b.at[0, d * Gp:d * Gp + 4 * H].set(p['lstm']['b_ih'][d] + p['lstm']['b_hh'][d])
            w_hh_T.append(p['lstm']['w_hh'][d].T)
        D = nd * H
        ffn_w = jnp.zeros((D, Fp), jnp.float32).at[:, :F].set(p['ffn_w'].T)
        ffn_b = jnp.zeros((1, Fp), jnp.float32).at[0, :F].set(p['ffn_b'])
        return {
            'qkv_w': qkv_w.astype(_MXU_DTYPE), 'qkv_b': qkv_b,
            'attn_out_w': attn_out_w.astype(_MXU_DTYPE), 'attn_out_b': attn_out_b,
            'ln1_g': jnp.zeros((1, Fp), jnp.float32).at[0, :F].set(p['ln1_g']),
            'ln1_b': jnp.zeros((1, Fp), jnp.float32).at[0, :F].set(p['ln1_b']),
            'lstm_w_in': lstm_w_in.astype(_MXU_DTYPE), 'lstm_b': lstm_b,
            'lstm_w_hh_T': jnp.stack(w_hh_T),
            'ffn_w': ffn_w.astype(_MXU_DTYPE), 'ffn_b': ffn_b,
            'ln2_g': jnp.zeros((1, Fp), jnp.float32).at[0, :F].set(p['ln2_g']),
            'ln2_b': jnp.zeros((1, Fp), jnp.float32).at[0, :F].set(p['ln2_b']),
        }

    dp = params['dptn']
    sep_w = jnp.zeros((Fp, 2 * Fp), jnp.float32)
    sep_w = sep_w.at[:F, :F].set(dp['sep_w'][:F].T)                  # speaker 0 slab
    sep_w = sep_w.at[:F, Fp:Fp + F].set(dp['sep_w'][F:2 * F].T)      # speaker 1 slab
    sep_b = jnp.zeros((1, 2 * Fp), jnp.float32)
    sep_b = sep_b.at[0, :F].set(dp['sep_b'][:F]).at[0, Fp:Fp + F].set(dp['sep_b'][F:2 * F])
    head_w = jnp.zeros((Fp, 2 * Fp), jnp.float32)
    head_w = head_w.at[:F, :F].set(dp['out_w'].T)                    # tanh branch ("output")
    head_w = head_w.at[:F, Fp:Fp + F].set(dp['gate_w'].T)            # sigmoid branch ("gate")
    head_b = jnp.zeros((1, 2 * Fp), jnp.float32)
    head_b = head_b.at[0, :F].set(dp['out_b']).at[0, Fp:Fp + F].set(dp['gate_b'])
    enc_w = jnp.zeros((K, Fp), jnp.float32).at[:, :F].set(params['enc_w'][:, 0, :].T)
    dec_w = jnp.zeros((Fp, K), jnp.float32).at[:F, :].set(params['dec_w'][:, 0, :])
    return {
        'enc_w': enc_w,
        'dec_w': dec_w.astype(_MXU_DTYPE),
        'dptn': {
            'blocks': [{'intra': prep_tf(b['intra']), 'inter': prep_tf(b['inter'])}
                       for b in dp['blocks']],
            'prelu': jnp.full((1, 1), dp['prelu'], jnp.float32),
            'sep_w': sep_w.astype(_MXU_DTYPE), 'sep_b': sep_b,
            'head_w': head_w.astype(_MXU_DTYPE), 'head_b': head_b,
        },
    }


if __name__ == "__main__":
    cfg = dict(num_features=16, kernel_size_enc=2, hidden_dim=8, num_blocks=2,
               chunk_size=8, step_size=4, num_heads=4, dropout=0.1, bidir=True)
    key = jax.random.PRNGKey(0)
    kp, kx = jax.random.split(key)
    params = init_params(kp, cfg)
    pparams = prepare_params(params, cfg)

    batch, ts = 2, 64
    mix = jax.random.normal(kx, (batch, ts), jnp.float32)

    fwd = jax.jit(lambda p, m: dptn_encdec_forward(p, m, cfg))
    out = fwd(pparams, mix)
    jax.block_until_ready(out)
    assert out['s1_pred'].shape == (batch, ts)
    assert out['s2_pred'].shape == (batch, ts)
    assert bool(jnp.all(jnp.isfinite(out['s1_pred']))) and bool(jnp.all(jnp.isfinite(out['s2_pred'])))
    print("KERNEL_OK")
</pallas_src>

<mosaic_0001>
module attributes {stable_mosaic.version = 11 : i64} {
  func.func @_mm_bias_kernel(%arg0: i32, %arg1: memref<120x128xf32, #tpu.memory_space<vmem>>, %arg2: memref<128x384xbf16, #tpu.memory_space<vmem>>, %arg3: memref<1x384xf32, #tpu.memory_space<vmem>>, %arg4: memref<120x384xf32, #tpu.memory_space<vmem>>) attributes {dimension_semantics = [#tpu.dimension_semantics<parallel>], iteration_bounds = array<i64: 2>, scalar_prefetch = 0 : i64, scratch_operands = 0 : i64, tpu.core_type = #tpu.core_type<tc>, window_params = [{transform_indices = @transform_0, window_bounds = array<i64: 120, 128>}, {pipeline_mode = #tpu.pipeline_mode<synchronous>, transform_indices = @transform_1, window_bounds = array<i64: 128, 384>}, {pipeline_mode = #tpu.pipeline_mode<synchronous>, transform_indices = @transform_2, window_bounds = array<i64: 1, 384>}, {transform_indices = @transform_3, window_bounds = array<i64: 120, 384>}]} {
    %c0 = arith.constant 0 : index
    %c0_0 = arith.constant 0 : index
    %0 = vector.load %arg1[%c0, %c0_0] : memref<120x128xf32, #tpu.memory_space<vmem>>, vector<120x128xf32>
    %1 = arith.truncf %0 : vector<120x128xf32> to vector<120x128xbf16>
    %c0_1 = arith.constant 0 : index
    %c0_2 = arith.constant 0 : index
    %2 = vector.load %arg2[%c0_1, %c0_2] : memref<128x384xbf16, #tpu.memory_space<vmem>>, vector<128x384xbf16>
    %cst = arith.constant dense<0.000000e+00> : vector<120x384xf32>
    %3 = tpu.matmul %1, %2, %cst {dimension_numbers = #tpu.dot_dimension_numbers<[1], [0], [0], [1], [0, 0, 1, 1], [], []>} : vector<120x128xbf16>, vector<128x384xbf16>, vector<120x384xf32> -> vector<120x384xf32>
    %c0_3 = arith.constant 0 : index
    %c0_4 = arith.constant 0 : index
    %4 = vector.load %arg3[%c0_3, %c0_4] : memref<1x384xf32, #tpu.memory_space<vmem>>, vector<1x384xf32>
    %5 = vector.broadcast %4 : vector<1x384xf32> to vector<120x384xf32>
    %6 = arith.addf %3, %5 : vector<120x384xf32>
    %c0_5 = arith.constant 0 : index
    %c0_6 = arith.constant 0 : index
    %7 = vector.load %arg4[%c0_5, %c0_6] : memref<120x384xf32, #tpu.memory_space<vmem>>, vector<120x384xf32>
    tpu.vector_store %arg4[%c0_5, %c0_6], %6 {strides = array<i32>} : memref<120x384xf32, #tpu.memory_space<vmem>>, vector<120x384xf32>,
    return
  }
  func.func @transform_0(%arg0: i32) -> (i32, i32) {
    %c0_i32 = arith.constant 0 : i32
    %c0_i32_0 = arith.constant 0 : i32
    return %arg0, %c0_i32 : i32, i32
  }
  func.func @transform_1(%arg0: i32) -> (i32, i32) {
    %c0_i32 = arith.constant 0 : i32
    %c0_i32_0 = arith.constant 0 : i32
    %c0_i32_1 = arith.constant 0 : i32
    return %c0_i32, %c0_i32_0 : i32, i32
  }
  func.func @transform_2(%arg0: i32) -> (i32, i32) {
    %c0_i32 = arith.constant 0 : i32
    %c0_i32_0 = arith.constant 0 : i32
    %c0_i32_1 = arith.constant 0 : i32
    return %c0_i32, %c0_i32_0 : i32, i32
  }
  func.func @transform_3(%arg0: i32) -> (i32, i32) {
    %c0_i32 = arith.constant 0 : i32
    %c0_i32_0 = arith.constant 0 : i32
    return %arg0, %c0_i32 : i32, i32
  }
}

module attributes {stable_mosaic.version = 11 : i64} {
  func.func @_mm_bias_res_ln_kernel(%arg0: i32, %arg1: memref<120x16xf32, #tpu.memory_space<vmem>>, %arg2: memref<16x128xbf16, #tpu.memory_space<vmem>>, %arg3: memref<1x128xf32, #tpu.memory_space<vmem>>, %arg4: memref<120x128xf32, #tpu.memory_space<vmem>>, %arg5: memref<1x128xf32, #tpu.memory_space<vmem>>, %arg6: memref<1x128xf32, #tpu.memory_space<vmem>>, %arg7: memref<120x128xf32, #tpu.memory_space<vmem>>) attributes {dimension_semantics = [#tpu.dimension_semantics<parallel>], iteration_bounds = array<i64: 2>, scalar_prefetch = 0 : i64, scratch_operands = 0 : i64, tpu.core_type = #tpu.core_type<tc>, window_params = [{transform_indices = @transform_0, window_bounds = array<i64: 120, 16>}, {pipeline_mode = #tpu.pipeline_mode<synchronous>, transform_indices = @transform_1, window_bounds = array<i64: 16, 128>}, {pipeline_mode = #tpu.pipeline_mode<synchronous>, transform_indices = @transform_2, window_bounds = array<i64: 1, 128>}, {transform_indices = @transform_3, window_bounds = array<i64: 120, 128>}, {pipeline_mode = #tpu.pipeline_mode<synchronous>, transform_indices = @transform_4, window_bounds = array<i64: 1, 128>}, {pipeline_mode = #tpu.pipeline_mode<synchronous>, transform_indices = @transform_5, window_bounds = array<i64: 1, 128>}, {transform_indices = @transform_6, window_bounds = array<i64: 120, 128>}]} {
    %c0 = arith.constant 0 : index
    %c0_0 = arith.constant 0 : index
    %0 = vector.load %arg1[%c0, %c0_0] : memref<120x16xf32, #tpu.memory_space<vmem>>, vector<120x16xf32>
    %1 = arith.truncf %0 : vector<120x16xf32> to vector<120x16xbf16>
    %c0_1 = arith.constant 0 : index
    %c0_2 = arith.constant 0 : index
    %2 = vector.load %arg2[%c0_1, %c0_2] : memref<16x128xbf16, #tpu.memory_space<vmem>>, vector<16x128xbf16>
    %cst = arith.constant dense<0.000000e+00> : vector<120x128xf32>
    %3 = tpu.matmul %1, %2, %cst {dimension_numbers = #tpu.dot_dimension_numbers<[1], [0], [0], [1], [0, 0, 1, 1], [], []>} : vector<120x16xbf16>, vector<16x128xbf16>, vector<120x128xf32> -> vector<120x128xf32>
    %c0_3 = arith.constant 0 : index
    %c0_4 = arith.constant 0 : index
    %4 = vector.load %arg3[%c0_3, %c0_4] : memref<1x128xf32, #tpu.memory_space<vmem>>, vector<1x128xf32>
    %5 = vector.broadcast %4 : vector<1x128xf32> to vector<120x128xf32>
    %6 = arith.addf %3, %5 : vector<120x128xf32>
    %c0_5 = arith.constant 0 : index
    %c0_6 = arith.constant 0 : index
    %7 = vector.load %arg4[%c0_5, %c0_6] : memref<120x128xf32, #tpu.memory_space<vmem>>, vector<120x128xf32>
    %8 = arith.addf %6, %7 : vector<120x128xf32>
    %9 = tpu.iota {dimensions = array<i32: 1>} : vector<120x128xi32>
    %c16_i32 = arith.constant 16 : i32
    %10 = vector.broadcast %c16_i32 : i32 to vector<120x128xi32>
    %11 = arith.cmpi slt, %9, %10 : vector<120x128xi32>
    %cst_7 = arith.constant 0.000000e+00 : f32
    %12 = vector.broadcast %cst_7 : f32 to vector<120x128xf32>
    %13 = arith.select %11, %8, %12 : vector<120x128xi1>, vector<120x128xf32>
    %cst_8 = arith.constant dense<0.000000e+00> : vector<120xf32>
    %14 = vector.multi_reduction <add>, %13, %cst_8 [1] : vector<120x128xf32> to vector<120xf32>
    %15 = vector.shape_cast %14 : vector<120xf32> to vector<120x1xf32>
    %cst_9 = arith.constant 1.600000e+01 : f32
    %16 = vector.broadcast %cst_9 : f32 to vector<120x1xf32>
    %17 = arith.divf %15, %16 : vector<120x1xf32>
    %18 = vector.broadcast %17 : vector<120x1xf32> to vector<120x128xf32>
    %19 = arith.subf %8, %18 : vector<120x128xf32>
    %cst_10 = arith.constant 0.000000e+00 : f32
    %20 = vector.broadcast %cst_10 : f32 to vector<120x128xf32>
    %21 = arith.select %11, %19, %20 : vector<120x128xi1>, vector<120x128xf32>
    %22 = arith.mulf %21, %21 : vector<120x128xf32>
    %cst_11 = arith.constant dense<0.000000e+00> : vector<120xf32>
    %23 = vector.multi_reduction <add>, %22, %cst_11 [1] : vector<120x128xf32> to vector<120xf32>
    %24 = vector.shape_cast %23 : vector<120xf32> to vector<120x1xf32>
    %cst_12 = arith.constant 1.600000e+01 : f32
    %25 = vector.broadcast %cst_12 : f32 to vector<120x1xf32>
    %26 = arith.divf %24, %25 : vector<120x1xf32>
    %cst_13 = arith.constant 9.99999974E-6 : f32
    %27 = vector.broadcast %cst_13 : f32 to vector<120x1xf32>
    %28 = arith.addf %26, %27 : vector<120x1xf32>
    %29 = math.rsqrt %28 : vector<120x1xf32>
    %30 = vector.broadcast %29 : vector<120x1xf32> to vector<120x128xf32>
    %31 = arith.mulf %21, %30 : vector<120x128xf32>
    %c0_14 = arith.constant 0 : index
    %c0_15 = arith.constant 0 : index
    %32 = vector.load %arg5[%c0_14, %c0_15] : memref<1x128xf32, #tpu.memory_space<vmem>>, vector<1x128xf32>
    %33 = vector.broadcast %32 : vector<1x128xf32> to vector<120x128xf32>
    %34 = arith.mulf %31, %33 : vector<120x128xf32>
    %c0_16 = arith.constant 0 : index
    %c0_17 = arith.constant 0 : index
    %35 = vector.load %arg6[%c0_16, %c0_17] : memref<1x128xf32, #tpu.memory_space<vmem>>, vector<1x128xf32>
    %36 = vector.broadcast %35 : vector<1x128xf32> to vector<120x128xf32>
    %37 = arith.addf %34, %36 : vector<120x128xf32>
    %c0_18 = arith.constant 0 : index
    %c0_19 = arith.constant 0 : index
    %38 = vector.load %arg7[%c0_18, %c0_19] : memref<120x128xf32, #tpu.memory_space<vmem>>, vector<120x128xf32>
    tpu.vector_store %arg7[%c0_18, %c0_19], %37 {strides = array<i32>} : memref<120x128xf32, #tpu.memory_space<vmem>>, vector<120x128xf32>,
    return
  }
  func.func @transform_0(%arg0: i32) -> (i32, i32) {
    %c0_i32 = arith.constant 0 : i32
    %c0_i32_0 = arith.constant 0 : i32
    return %arg0, %c0_i32 : i32, i32
  }
  func.func @transform_1(%arg0: i32) -> (i32, i32) {
    %c0_i32 = arith.constant 0 : i32
    %c0_i32_0 = arith.constant 0 : i32
    %c0_i32_1 = arith.constant 0 : i32
    return %c0_i32, %c0_i32_0 : i32, i32
  }
  func.func @transform_2(%arg0: i32) -> (i32, i32) {
    %c0_i32 = arith.constant 0 : i32
    %c0_i32_0 = arith.constant 0 : i32
    %c0_i32_1 = arith.constant 0 : i32
    return %c0_i32, %c0_i32_0 : i32, i32
  }
  func.func @transform_3(%arg0: i32) -> (i32, i32) {
    %c0_i32 = arith.constant 0 : i32
    %c0_i32_0 = arith.constant 0 : i32
    return %arg0, %c0_i32 : i32, i32
  }
  func.func @transform_4(%arg0: i32) -> (i32, i32) {
    %c0_i32 = arith.constant 0 : i32
    %c0_i32_0 = arith.constant 0 : i32
    %c0_i32_1 = arith.constant 0 : i32
    return %c0_i32, %c0_i32_0 : i32, i32
  }
  func.func @transform_5(%arg0: i32) -> (i32, i32) {
    %c0_i32 = arith.constant 0 : i32
    %c0_i32_0 = arith.constant 0 : i32
    %c0_i32_1 = arith.constant 0 : i32
    return %c0_i32, %c0_i32_0 : i32, i32
  }
  func.func @transform_6(%arg0: i32) -> (i32, i32) {
    %c0_i32 = arith.constant 0 : i32
    %c0_i32_0 = arith.constant 0 : i32
    return %arg0, %c0_i32 : i32, i32
  }
}

module attributes {stable_mosaic.version = 11 : i64} {
  func.func @_mm_bias_kernel(%arg0: i32, %arg1: memref<120x128xf32, #tpu.memory_space<vmem>>, %arg2: memref<128x256xbf16, #tpu.memory_space<vmem>>, %arg3: memref<1x256xf32, #tpu.memory_space<vmem>>, %arg4: memref<120x256xf32, #tpu.memory_space<vmem>>) attributes {dimension_semantics = [#tpu.dimension_semantics<parallel>], iteration_bounds = array<i64: 2>, scalar_prefetch = 0 : i64, scratch_operands = 0 : i64, tpu.core_type = #tpu.core_type<tc>, window_params = [{transform_indices = @transform_0, window_bounds = array<i64: 120, 128>}, {pipeline_mode = #tpu.pipeline_mode<synchronous>, transform_indices = @transform_1, window_bounds = array<i64: 128, 256>}, {pipeline_mode = #tpu.pipeline_mode<synchronous>, transform_indices = @transform_2, window_bounds = array<i64: 1, 256>}, {transform_indices = @transform_3, window_bounds = array<i64: 120, 256>}]} {
    %c0 = arith.constant 0 : index
    %c0_0 = arith.constant 0 : index
    %0 = vector.load %arg1[%c0, %c0_0] : memref<120x128xf32, #tpu.memory_space<vmem>>, vector<120x128xf32>
    %1 = arith.truncf %0 : vector<120x128xf32> to vector<120x128xbf16>
    %c0_1 = arith.constant 0 : index
    %c0_2 = arith.constant 0 : index
    %2 = vector.load %arg2[%c0_1, %c0_2] : memref<128x256xbf16, #tpu.memory_space<vmem>>, vector<128x256xbf16>
    %cst = arith.constant dense<0.000000e+00> : vector<120x256xf32>
    %3 = tpu.matmul %1, %2, %cst {dimension_numbers = #tpu.dot_dimension_numbers<[1], [0], [0], [1], [0, 0, 1, 1], [], []>} : vector<120x128xbf16>, vector<128x256xbf16>, vector<120x256xf32> -> vector<120x256xf32>
    %c0_3 = arith.constant 0 : index
    %c0_4 = arith.constant 0 : index
    %4 = vector.load %arg3[%c0_3, %c0_4] : memref<1x256xf32, #tpu.memory_space<vmem>>, vector<1x256xf32>
    %5 = vector.broadcast %4 : vector<1x256xf32> to vector<120x256xf32>
    %6 = arith.addf %3, %5 : vector<120x256xf32>
    %c0_5 = arith.constant 0 : index
    %c0_6 = arith.constant 0 : index
    %7 = vector.load %arg4[%c0_5, %c0_6] : memref<120x256xf32, #tpu.memory_space<vmem>>, vector<120x256xf32>
    tpu.vector_store %arg4[%c0_5, %c0_6], %6 {strides = array<i32>} : memref<120x256xf32, #tpu.memory_space<vmem>>, vector<120x256xf32>,
    return
  }
  func.func @transform_0(%arg0: i32) -> (i32, i32) {
    %c0_i32 = arith.constant 0 : i32
    %c0_i32_0 = arith.constant 0 : i32
    return %arg0, %c0_i32 : i32, i32
  }
  func.func @transform_1(%arg0: i32) -> (i32, i32) {
    %c0_i32 = arith.constant 0 : i32
    %c0_i32_0 = arith.constant 0 : i32
    %c0_i32_1 = arith.constant 0 : i32
    return %c0_i32, %c0_i32_0 : i32, i32
  }
  func.func @transform_2(%arg0: i32) -> (i32, i32) {
    %c0_i32 = arith.constant 0 : i32
    %c0_i32_0 = arith.constant 0 : i32
    %c0_i32_1 = arith.constant 0 : i32
    return %c0_i32, %c0_i32_0 : i32, i32
  }
  func.func @transform_3(%arg0: i32) -> (i32, i32) {
    %c0_i32 = arith.constant 0 : i32
    %c0_i32_0 = arith.constant 0 : i32
    return %arg0, %c0_i32 : i32, i32
  }
}

module attributes {stable_mosaic.version = 11 : i64} {
  func.func @_prelu_mm_bias_kernel(%arg0: i32, %arg1: memref<120x128xf32, #tpu.memory_space<vmem>>, %arg2: memref<1x1xf32, #tpu.memory_space<vmem>>, %arg3: memref<128x256xbf16, #tpu.memory_space<vmem>>, %arg4: memref<1x256xf32, #tpu.memory_space<vmem>>, %arg5: memref<120x256xf32, #tpu.memory_space<vmem>>) attributes {dimension_semantics = [#tpu.dimension_semantics<parallel>], iteration_bounds = array<i64: 2>, scalar_prefetch = 0 : i64, scratch_operands = 0 : i64, tpu.core_type = #tpu.core_type<tc>, window_params = [{transform_indices = @transform_0, window_bounds = array<i64: 120, 128>}, {pipeline_mode = #tpu.pipeline_mode<synchronous>, transform_indices = @transform_1, window_bounds = array<i64: 1, 1>}, {pipeline_mode = #tpu.pipeline_mode<synchronous>, transform_indices = @transform_2, window_bounds = array<i64: 128, 256>}, {pipeline_mode = #tpu.pipeline_mode<synchronous>, transform_indices = @transform_3, window_bounds = array<i64: 1, 256>}, {transform_indices = @transform_4, window_bounds = array<i64: 120, 256>}]} {
    %c0 = arith.constant 0 : index
    %c0_0 = arith.constant 0 : index
    %0 = vector.load %arg1[%c0, %c0_0] : memref<120x128xf32, #tpu.memory_space<vmem>>, vector<120x128xf32>
    %cst = arith.constant 0.000000e+00 : f32
    %1 = vector.broadcast %cst : f32 to vector<120x128xf32>
    %2 = arith.maximumf %0, %1 : vector<120x128xf32>
    %c0_1 = arith.constant 0 : index
    %c0_2 = arith.constant 0 : index
    %3 = vector.load %arg2[%c0_1, %c0_2] : memref<1x1xf32, #tpu.memory_space<vmem>>, vector<1x1xf32>
    %4 = vector.extract %3[0, 0] : f32 from vector<1x1xf32>
    %cst_3 = arith.constant 0.000000e+00 : f32
    %5 = vector.broadcast %cst_3 : f32 to vector<120x128xf32>
    %6 = arith.minimumf %0, %5 : vector<120x128xf32>
    %7 = vector.broadcast %4 : f32 to vector<120x128xf32>
    %8 = arith.mulf %7, %6 : vector<120x128xf32>
    %9 = arith.addf %2, %8 : vector<120x128xf32>
    %10 = arith.truncf %9 : vector<120x128xf32> to vector<120x128xbf16>
    %c0_4 = arith.constant 0 : index
    %c0_5 = arith.constant 0 : index
    %11 = vector.load %arg3[%c0_4, %c0_5] : memref<128x256xbf16, #tpu.memory_space<vmem>>, vector<128x256xbf16>
    %cst_6 = arith.constant dense<0.000000e+00> : vector<120x256xf32>
    %12 = tpu.matmul %10, %11, %cst_6 {dimension_numbers = #tpu.dot_dimension_numbers<[1], [0], [0], [1], [0, 0, 1, 1], [], []>} : vector<120x128xbf16>, vector<128x256xbf16>, vector<120x256xf32> -> vector<120x256xf32>
    %c0_7 = arith.constant 0 : index
    %c0_8 = arith.constant 0 : index
    %13 = vector.load %arg4[%c0_7, %c0_8] : memref<1x256xf32, #tpu.memory_space<vmem>>, vector<1x256xf32>
    %14 = vector.broadcast %13 : vector<1x256xf32> to vector<120x256xf32>
    %15 = arith.addf %12, %14 : vector<120x256xf32>
    %c0_9 = arith.constant 0 : index
    %c0_10 = arith.constant 0 : index
    %16 = vector.load %arg5[%c0_9, %c0_10] : memref<120x256xf32, #tpu.memory_space<vmem>>, vector<120x256xf32>
    tpu.vector_store %arg5[%c0_9, %c0_10], %15 {strides = array<i32>} : memref<120x256xf32, #tpu.memory_space<vmem>>, vector<120x256xf32>,
    return
  }
  func.func @transform_0(%arg0: i32) -> (i32, i32) {
    %c0_i32 = arith.constant 0 : i32
    %c0_i32_0 = arith.constant 0 : i32
    return %arg0, %c0_i32 : i32, i32
  }
  func.func @transform_1(%arg0: i32) -> (i32, i32) {
    %c0_i32 = arith.constant 0 : i32
    %c0_i32_0 = arith.constant 0 : i32
    %c0_i32_1 = arith.constant 0 : i32
    return %c0_i32, %c0_i32_0 : i32, i32
  }
  func.func @transform_2(%arg0: i32) -> (i32, i32) {
    %c0_i32 = arith.constant 0 : i32
    %c0_i32_0 = arith.constant 0 : i32
    %c0_i32_1 = arith.constant 0 : i32
    return %c0_i32, %c0_i32_0 : i32, i32
  }
  func.func @transform_3(%arg0: i32) -> (i32, i32) {
    %c0_i32 = arith.constant 0 : i32
    %c0_i32_0 = arith.constant 0 : i32
    %c0_i32_1 = arith.constant 0 : i32
    return %c0_i32, %c0_i32_0 : i32, i32
  }
  func.func @transform_4(%arg0: i32) -> (i32, i32) {
    %c0_i32 = arith.constant 0 : i32
    %c0_i32_0 = arith.constant 0 : i32
    return %arg0, %c0_i32 : i32, i32
  }
}

module attributes {stable_mosaic.version = 11 : i64} {
  func.func @_head_dec_kernel(%arg0: i32, %arg1: i32, %arg2: memref<64x128xf32, #tpu.memory_space<vmem>>, %arg3: memref<128x256xbf16, #tpu.memory_space<vmem>>, %arg4: memref<1x256xf32, #tpu.memory_space<vmem>>, %arg5: memref<64x128xf32, #tpu.memory_space<vmem>>, %arg6: memref<128x2xbf16, #tpu.memory_space<vmem>>, %arg7: memref<1x64x2xf32, #tpu.memory_space<vmem>>) attributes {dimension_semantics = [#tpu.dimension_semantics<parallel>, #tpu.dimension_semantics<parallel>], iteration_bounds = array<i64: 2, 2>, scalar_prefetch = 0 : i64, scratch_operands = 0 : i64, tpu.core_type = #tpu.core_type<tc>, window_params = [{transform_indices = @transform_0, window_bounds = array<i64: 64, 128>}, {pipeline_mode = #tpu.pipeline_mode<synchronous>, transform_indices = @transform_1, window_bounds = array<i64: 128, 256>}, {pipeline_mode = #tpu.pipeline_mode<synchronous>, transform_indices = @transform_2, window_bounds = array<i64: 1, 256>}, {transform_indices = @transform_3, window_bounds = array<i64: 64, 128>}, {pipeline_mode = #tpu.pipeline_mode<synchronous>, transform_indices = @transform_4, window_bounds = array<i64: 128, 2>}, {transform_indices = @transform_5, window_bounds = array<i64: 1, 64, 2>}]} {
    %c0 = arith.constant 0 : index
    %c0_0 = arith.constant 0 : index
    %0 = vector.load %arg2[%c0, %c0_0] : memref<64x128xf32, #tpu.memory_space<vmem>>, vector<64x128xf32>
    %1 = arith.truncf %0 : vector<64x128xf32> to vector<64x128xbf16>
    %c0_1 = arith.constant 0 : index
    %c0_2 = arith.constant 0 : index
    %2 = vector.load %arg3[%c0_1, %c0_2] : memref<128x256xbf16, #tpu.memory_space<vmem>>, vector<128x256xbf16>
    %cst = arith.constant dense<0.000000e+00> : vector<64x256xf32>
    %3 = tpu.matmul %1, %2, %cst {dimension_numbers = #tpu.dot_dimension_numbers<[1], [0], [0], [1], [0, 0, 1, 1], [], []>} : vector<64x128xbf16>, vector<128x256xbf16>, vector<64x256xf32> -> vector<64x256xf32>
    %c0_3 = arith.constant 0 : index
    %c0_4 = arith.constant 0 : index
    %4 = vector.load %arg4[%c0_3, %c0_4] : memref<1x256xf32, #tpu.memory_space<vmem>>, vector<1x256xf32>
    %5 = vector.broadcast %4 : vector<1x256xf32> to vector<64x256xf32>
    %6 = arith.addf %3, %5 : vector<64x256xf32>
    %7 = vector.extract_strided_slice %6 {offsets = [0, 0], sizes = [64, 128], strides = [1, 1]} : vector<64x256xf32> to vector<64x128xf32>
    %8 = math.tanh %7 : vector<64x128xf32>
    %9 = vector.extract_strided_slice %6 {offsets = [0, 128], sizes = [64, 128], strides = [1, 1]} : vector<64x256xf32> to vector<64x128xf32>
    %10 = arith.negf %9 : vector<64x128xf32>
    %11 = math.exp %10 : vector<64x128xf32>
    %cst_5 = arith.constant 1.000000e+00 : f32
    %12 = vector.broadcast %cst_5 : f32 to vector<64x128xf32>
    %13 = arith.addf %12, %11 : vector<64x128xf32>
    %14 = arith.divf %12, %13 : vector<64x128xf32>
    %15 = arith.mulf %8, %14 : vector<64x128xf32>
    %cst_6 = arith.constant 0.000000e+00 : f32
    %16 = vector.broadcast %cst_6 : f32 to vector<64x128xf32>
    %17 = arith.maximumf %15, %16 : vector<64x128xf32>
    %c0_7 = arith.constant 0 : index
    %c0_8 = arith.constant 0 : index
    %18 = vector.load %arg5[%c0_7, %c0_8] : memref<64x128xf32, #tpu.memory_space<vmem>>, vector<64x128xf32>
    %19 = arith.mulf %17, %18 : vector<64x128xf32>
    %20 = arith.truncf %19 : vector<64x128xf32> to vector<64x128xbf16>
    %c0_9 = arith.constant 0 : index
    %c0_10 = arith.constant 0 : index
    %21 = vector.load %arg6[%c0_9, %c0_10] : memref<128x2xbf16, #tpu.memory_space<vmem>>, vector<128x2xbf16>
    %cst_11 = arith.constant dense<0.000000e+00> : vector<64x2xf32>
    %22 = tpu.matmul %20, %21, %cst_11 {dimension_numbers = #tpu.dot_dimension_numbers<[1], [0], [0], [1], [0, 0, 1, 1], [], []>} : vector<64x128xbf16>, vector<128x2xbf16>, vector<64x2xf32> -> vector<64x2xf32>
    %c0_12 = arith.constant 0 : index
    %c0_13 = arith.constant 0 : index
    %c0_14 = arith.constant 0 : index
    %23 = vector.load %arg7[%c0_12, %c0_13, %c0_14] : memref<1x64x2xf32, #tpu.memory_space<vmem>>, vector<1x64x2xf32>
    %24 = vector.shape_cast %23 : vector<1x64x2xf32> to vector<64x2xf32>
    %25 = vector.shape_cast %22 : vector<64x2xf32> to vector<1x64x2xf32>
    tpu.vector_store %arg7[%c0_12, %c0_13, %c0_14], %25 {strides = array<i32>} : memref<1x64x2xf32, #tpu.memory_space<vmem>>, vector<1x64x2xf32>,
    return
  }
  func.func @transform_0(%arg0: i32, %arg1: i32) -> (i32, i32) {
    %c0_i32 = arith.constant 0 : i32
    return %arg0, %arg1 : i32, i32
  }
  func.func @transform_1(%arg0: i32, %arg1: i32) -> (i32, i32) {
    %c0_i32 = arith.constant 0 : i32
    %c0_i32_0 = arith.constant 0 : i32
    %c0_i32_1 = arith.constant 0 : i32
    return %c0_i32, %c0_i32_0 : i32, i32
  }
  func.func @transform_2(%arg0: i32, %arg1: i32) -> (i32, i32) {
    %c0_i32 = arith.constant 0 : i32
    %c0_i32_0 = arith.constant 0 : i32
    %c0_i32_1 = arith.constant 0 : i32
    return %c0_i32, %c0_i32_0 : i32, i32
  }
  func.func @transform_3(%arg0: i32, %arg1: i32) -> (i32, i32) {
    %c0_i32 = arith.constant 0 : i32
    %c0_i32_0 = arith.constant 0 : i32
    return %arg0, %c0_i32 : i32, i32
  }
  func.func @transform_4(%arg0: i32, %arg1: i32) -> (i32, i32) {
    %c0_i32 = arith.constant 0 : i32
    %c0_i32_0 = arith.constant 0 : i32
    %c0_i32_1 = arith.constant 0 : i32
    return %c0_i32, %c0_i32_0 : i32, i32
  }
  func.func @transform_5(%arg0: i32, %arg1: i32) -> (i32, i32, i32) {
    %c0_i32 = arith.constant 0 : i32
    %c0_i32_0 = arith.constant 0 : i32
    return %arg1, %arg0, %c0_i32 : i32, i32, i32
  }
}

</mosaic_0001>

<llo_original>
// kernel: _lambda_.18
$region0: #{_lambda_.18}
  #allocation0 [shape = 'u32[]', space=smem, size = 0x4, offset = 0x4, fixed_abs, tag = 'smem constant byte address 0x4 - core index']
  #allocation1 [shape = 'u32[72,128]{1,0:T(1,128)}', space=vmem, size = 0x9000, scoped, tag = 'internal scratch']
  %s0 = inlined_call_operand.vmem [shape: f32[240,128], index: 0, kind: input, shape index: {}]
  %s1 = inlined_call_operand.vmem [shape: bf16[128,384], index: 1, kind: input, shape index: {}]
  %s2 = inlined_call_operand.vmem [shape: f32[1,384], index: 2, kind: input, shape index: {}]
  %s3 = inlined_call_operand.vmem [shape: f32[240,384], index: 3, kind: output, shape index: {}]
  %s4 = sld [smem:[#allocation0]]
  $region45: #{_lambda_.18} parent=0
    _
  %s6 = ssub.s32 1, %s4
  %s7 = scalar_select 0, %s6, %s4
  loop: start=0, step=1, limit=4
  $region2: #{_lambda_.18} parent=0 // loop_pre_header
    _
  $region3: #{_lambda_.18} parent=0 // loop_header
    %s9 = sphi 0, %s13
    %p10 = scmp.ge.s32.totalorder %s9, 4
    %s19 = sphi 0, %s21
    %s22 = sphi 0, %s19
    %s23 = sphi 0, %s22
    %s39 = sphi 0, %s23
    %s43 = sphi 0, %s43
    %s45 = sphi 0, %s43
    %s46 = sphi 0, %s45
    %s60 = sphi 0, %s46
    %s64 = sphi 0, %s64
    %s66 = sphi 0, %s64
    %s67 = sphi 0, %s66
    %s81 = sphi 0, %s67
    %s87 = sphi 0, %s89
    %s90 = sphi 0, %s87
    %s91 = sphi 0, %s90
    %s107 = sphi 0, %s91
  $region4: #{_lambda_.18} parent=0 // loop_header_branch
    %12 = sbr.rel (%p10) target = $region8
  $region5: #{_lambda_.18} parent=0 // loop_body
    %s14 = ssub.s32 %s9, 1
    %s15 = ssub.s32 %s9, 2
    %s16 = sadd.s32 %s9, 1
    %s17 = ssub.s32 %s9, %s16
    %p18 = scmp.eq.s32.totalorder %s17, 0
    %s20 = sadd.s32 %s19, 1
    %s21 = scalar_select %p18, %s19, %s20
    %p24 = pneg %p18
    %p25 = scmp.eq.s32.totalorder %s9, 1
    %p26 = por %p24, %p25
    %p27 = scmp.ne.s32.totalorder %s19, %s22
    %p28 = scmp.eq.s32.totalorder %s9, 0
    %p29 = por %p27, %p28
    %p30 = scmp.ne.s32.totalorder %s19, %s22
    %p31 = scmp.eq.s32.totalorder %s14, 1
    %p32 = por %p30, %p31
    %p33 = scmp.ne.s32.totalorder %s22, %s23
    %p34 = scmp.eq.s32.totalorder %s14, 0
    %p35 = por %p33, %p34
    %p36 = scmp.ne.s32.totalorder %s22, %s23
    %p37 = scmp.eq.s32.totalorder %s15, 1
    %p38 = por %p36, %p37
    %p40 = scmp.ne.s32.totalorder %s23, %s39
    %p41 = scmp.eq.s32.totalorder %s15, 0
    %p42 = por %p40, %p41
    %s44 = sadd.s32 %s43, 1
    %p47 = scmp.eq.s32.totalorder %s9, 1
    %p48 = scmp.ne.s32.totalorder %s43, %s45
    %p49 = scmp.eq.s32.totalorder %s9, 0
    %p50 = por %p48, %p49
    %p51 = scmp.ne.s32.totalorder %s43, %s45
    %p52 = scmp.eq.s32.totalorder %s14, 1
    %p53 = por %p51, %p52
    %p54 = scmp.ne.s32.totalorder %s45, %s46
    %p55 = scmp.eq.s32.totalorder %s14, 0
    %p56 = por %p54, %p55
    %p57 = scmp.ne.s32.totalorder %s45, %s46
    %p58 = scmp.eq.s32.totalorder %s15, 1
    %p59 = por %p57, %p58
    %p61 = scmp.ne.s32.totalorder %s46, %s60
    %p62 = scmp.eq.s32.totalorder %s15, 0
    %p63 = por %p61, %p62
    %s65 = sadd.s32 %s64, 1
    %p68 = scmp.eq.s32.totalorder %s9, 1
    %p69 = scmp.ne.s32.totalorder %s64, %s66
    %p70 = scmp.eq.s32.totalorder %s9, 0
    %p71 = por %p69, %p70
    %p72 = scmp.ne.s32.totalorder %s64, %s66
    %p73 = scmp.eq.s32.totalorder %s14, 1
    %p74 = por %p72, %p73
    %p75 = scmp.ne.s32.totalorder %s66, %s67
    %p76 = scmp.eq.s32.totalorder %s14, 0
    %p77 = por %p75, %p76
    %p78 = scmp.ne.s32.totalorder %s66, %s67
    %p79 = scmp.eq.s32.totalorder %s15, 1
    %p80 = por %p78, %p79
    %p82 = scmp.ne.s32.totalorder %s67, %s81
    %p83 = scmp.eq.s32.totalorder %s15, 0
    %p84 = por %p82, %p83
    %s85 = ssub.s32 %s9, %s16
    %p86 = scmp.eq.s32.totalorder %s85, 0
    %s88 = sadd.s32 %s87, 1
    %s89 = scalar_select %p86, %s87, %s88
    %p92 = pneg %p86
    %p93 = scmp.eq.s32.totalorder %s9, 1
    %p94 = por %p92, %p93
    %p95 = scmp.ne.s32.totalorder %s87, %s90
    %p96 = scmp.eq.s32.totalorder %s9, 0
    %p97 = por %p95, %p96
    %p98 = scmp.ne.s32.totalorder %s87, %s90
    %p99 = scmp.eq.s32.totalorder %s14, 1
    %p100 = por %p98, %p99
    %p101 = scmp.ne.s32.totalorder %s90, %s91
    %p102 = scmp.eq.s32.totalorder %s14, 0
    %p103 = por %p101, %p102
    %p104 = scmp.ne.s32.totalorder %s90, %s91
    %p105 = scmp.eq.s32.totalorder %s15, 1
    %p106 = por %p104, %p105
    %p108 = scmp.ne.s32.totalorder %s91, %s107
    %p109 = scmp.eq.s32.totalorder %s15, 0
    %p110 = por %p108, %p109
    %p111 = scmp.le.s32.totalorder 1, %s9
    %p112 = scmp.lt.s32.totalorder %s9, 3
    %p113 = pnand %p111, %p112
    %p114 = pneg %p113
    // Predicated region
    $region9: #{_lambda_.18} parent=5 // pred_check
      _
    $region10: #{_lambda_.18} parent=5 // pred_check_branch
      %116 = sbr.rel (%p113) target = $region12
    $region11: #{_lambda_.18} parent=5 // pred_region
      %s117 = ssub.s32 %s9, 1
      // Predicated region
      $region13: #{_lambda_.18} parent=11 // pred_check
        %p118 = pneg %p56
      $region14: #{_lambda_.18} parent=11 // pred_check_branch
        %120 = sbr.rel (%p118) target = $region16
      $region15: #{_lambda_.18} parent=11 // pred_region
        _
      $region16: #{_lambda_.18} parent=11 // pred_fallthru
        _
      // Predicated region
      $region17: #{_lambda_.18} parent=11 // pred_check
        %p121 = pneg %p77
      $region18: #{_lambda_.18} parent=11 // pred_check_branch
        %123 = sbr.rel (%p121) target = $region20
      $region19: #{_lambda_.18} parent=11 // pred_region
        _
      $region20: #{_lambda_.18} parent=11 // pred_fallthru
        _
    $region12: #{_lambda_.18} parent=5 // pred_fallthru
      _
    %p124 = scmp.lt.s32.totalorder %s9, 2
    // Predicated region
    $region21: #{_lambda_.18} parent=5 // pred_check
      %p125 = pneg %p124
    $region22: #{_lambda_.18} parent=5 // pred_check_branch
      %127 = sbr.rel (%p125) target = $region24
    $region23: #{_lambda_.18} parent=5 // pred_region
      // Predicated region
      $region25: #{_lambda_.18} parent=23 // pred_check
        %p128 = pneg %p29
      $region26: #{_lambda_.18} parent=23 // pred_check_branch
        %130 = sbr.rel (%p128) target = $region28
      $region27: #{_lambda_.18} parent=23 // pred_region
        %s131 = smul.u32 15, %s9
        %p132 = scmp.lt.s32.totalorder %s131, 29
        %s133 = scalar_select %p132, %s131, 29
        %s134 = smul.addr %s133, 8
        %s135 = scalar_lea.vmem %s0, %s134
        %s136 = smul.u32 15, %s9
      $region28: #{_lambda_.18} parent=23 // pred_fallthru
        _
    $region24: #{_lambda_.18} parent=5 // pred_fallthru
      _
    %p137 = scmp.le.s32.totalorder 1, %s9
    %p138 = scmp.lt.s32.totalorder %s9, 3
    %p139 = pnand %p137, %p138
    %p140 = pneg %p139
    // Predicated region
    $region29: #{_lambda_.18} parent=5 // pred_check
      _
    $region30: #{_lambda_.18} parent=5 // pred_check_branch
      %142 = sbr.rel (%p139) target = $region32
    $region31: #{_lambda_.18} parent=5 // pred_region
      %s143 = ssub.s32 %s9, 1
      %s144 = smul.u32 15, %s14
      %p145 = scmp.lt.s32.totalorder %s144, 29
      %s146 = scalar_select %p145, %s144, 29
      %s147 = smul.addr %s146, 8
      %s148 = scalar_lea.vmem %s0, %s147
      %p149 = pneg %p35
      %p150 = pneg %p32
      %p151 = pneg %p56
      %p152 = pneg %p53
      %p153 = pneg %p77
      %p154 = pneg %p74
      %p155 = pneg %p103
      %p156 = pneg %p100
      %s157 = smul.u32 15, %s14
      %p158 = scmp.lt.s32.totalorder %s157, 29
      %s159 = scalar_select %p158, %s157, 29
      %s160 = smul.addr %s159, 3
      %s161 = smul.addr %s160, 8
      %s162 = scalar_lea.vmem %s3, %s161
      %s163 = smul.u32 15, %s14
      %p164 = scmp.lt.s32.totalorder %s163, 29
      %s165 = scalar_select %p164, %s163, 29
      %s166 = smul.addr %s165, 8
      %s167 = scalar_lea.vmem %s0, %s166
      %s168 = smul.u32 15, %s14
      %s169 = smul.u32 15, %s14
      %p170 = scmp.lt.s32.totalorder %s169, 29
      %s171 = scalar_select %p170, %s169, 29
      %s172 = smul.addr %s171, 3
      %s173 = smul.addr %s172, 8
      %s174 = scalar_lea.vmem %s3, %s173
      %s175 = smul.u32 15, %s14
      %v176 = vld [vmem:[%s167] sm:$0xff]
      %v177 = vld [vmem:[%s167 + $0x8] sm:$0xff]
      %v178 = vld [vmem:[%s167 + $0x10] sm:$0xff]
      %v179 = vld [vmem:[%s167 + $0x18] sm:$0xff]
      %v180 = vld [vmem:[%s167 + $0x20] sm:$0xff]
      %v181 = vld [vmem:[%s167 + $0x28] sm:$0xff]
      %v182 = vld [vmem:[%s167 + $0x30] sm:$0xff]
      %v183 = vld [vmem:[%s167 + $0x38] sm:$0xff]
      %v184 = vld [vmem:[%s167 + $0x40] sm:$0xff]
      %v185 = vld [vmem:[%s167 + $0x48] sm:$0xff]
      %v186 = vld [vmem:[%s167 + $0x50] sm:$0xff]
      %v187 = vld [vmem:[%s167 + $0x58] sm:$0xff]
      %v188 = vld [vmem:[%s167 + $0x60] sm:$0xff]
      %v189 = vld [vmem:[%s167 + $0x68] sm:$0xff]
      %v190 = vld [vmem:[%s167 + $0x70] sm:$0xff]
      %v191 = vpack.c.bf16 %v177, %v176
      %v192 = vpack.c.bf16 %v179, %v178
      %v193 = vpack.c.bf16 %v181, %v180
      %v194 = vpack.c.bf16 %v183, %v182
      %v195 = vpack.c.bf16 %v185, %v184
      %v196 = vpack.c.bf16 %v187, %v186
      %v197 = vpack.c.bf16 %v189, %v188
      %v198 = vpack.c.bf16 %v190, %v190
      %v199 = vld [vmem:[%s1] sm:$0xff]
      %v200 = vld [vmem:[%s1 + $0x8] sm:$0xf]
      %v201 = vld [vmem:[%s1 + $0xc] sm:$0xff]
      %v202 = vld [vmem:[%s1 + $0x14] sm:$0xf]
      %v203 = vld [vmem:[%s1 + $0x18] sm:$0xff]
      %v204 = vld [vmem:[%s1 + $0x20] sm:$0xf]
      %v205 = vld [vmem:[%s1 + $0x24] sm:$0xff]
      %v206 = vld [vmem:[%s1 + $0x2c] sm:$0xf]
      %v207 = vld [vmem:[%s1 + $0x30] sm:$0xff]
      %v208 = vld [vmem:[%s1 + $0x38] sm:$0xf]
      %v209 = vld [vmem:[%s1 + $0x3c] sm:$0xff]
      %v210 = vld [vmem:[%s1 + $0x44] sm:$0xf]
      %v211 = vld [vmem:[%s1 + $0x48] sm:$0xff]
      %v212 = vld [vmem:[%s1 + $0x50] sm:$0xf]
      %v213 = vld [vmem:[%s1 + $0x54] sm:$0xff]
      %v214 = vld [vmem:[%s1 + $0x5c] sm:$0xf]
      %v215 = vld [vmem:[%s1 + $0x60] sm:$0xff]
      %v216 = vld [vmem:[%s1 + $0x68] sm:$0xf]
      %v217 = vld [vmem:[%s1 + $0x6c] sm:$0xff]
      %v218 = vld [vmem:[%s1 + $0x74] sm:$0xf]
      %v219 = vld [vmem:[%s1 + $0x78] sm:$0xff]
      %v220 = vld [vmem:[%s1 + $0x80] sm:$0xf]
      %v221 = vld [vmem:[%s1 + $0x84] sm:$0xff]
      %v222 = vld [vmem:[%s1 + $0x8c] sm:$0xf]
      %v223 = vld [vmem:[%s1 + $0x90] sm:$0xff]
      %v224 = vld [vmem:[%s1 + $0x98] sm:$0xf]
      %v225 = vld [vmem:[%s1 + $0x9c] sm:$0xff]
      %v226 = vld [vmem:[%s1 + $0xa4] sm:$0xf]
      %v227 = vld [vmem:[%s1 + $0xa8] sm:$0xff]
      %v228 = vld [vmem:[%s1 + $0xb0] sm:$0xf]
      %v229 = vld [vmem:[%s1 + $0xb4] sm:$0xff]
      %v230 = vld [vmem:[%s1 + $0xbc] sm:$0xf]
      %v231 = vld [vmem:[%s2] sm:$0x7]
      %v233 = vperm.slane %v231, 0
      %v234 = vperm.slane %v231, 1
      %v235 = vperm.slane %v231, 2
      %v271 = vunpack.c.l.b16 %v199
      %v272 = vunpack.c.h.b16 %v199
      %v273 = vunpack.c.l.b16 %v200
      %v274 = vunpack.c.l.b16 %v201
      %v275 = vunpack.c.h.b16 %v201
      %v276 = vunpack.c.l.b16 %v202
      %v277 = vunpack.c.l.b16 %v203
      %v278 = vunpack.c.h.b16 %v203
      %v279 = vunpack.c.l.b16 %v204
      %v280 = vunpack.c.l.b16 %v205
      %v281 = vunpack.c.h.b16 %v205
      %v282 = vunpack.c.l.b16 %v206
      %v283 = vunpack.c.l.b16 %v207
      %v284 = vunpack.c.h.b16 %v207
      %v285 = vunpack.c.l.b16 %v208
      %v286 = vunpack.c.l.b16 %v209
      %v287 = vunpack.c.h.b16 %v209
      %v288 = vunpack.c.l.b16 %v210
      %v289 = vunpack.c.l.b16 %v211
      %v290 = vunpack.c.h.b16 %v211
      %v291 = vunpack.c.l.b16 %v212
      %v292 = vunpack.c.l.b16 %v213
      %v293 = vunpack.c.h.b16 %v213
      %v294 = vunpack.c.l.b16 %v214
      %v295 = vunpack.c.l.b16 %v215
      %v296 = vunpack.c.h.b16 %v215
      %v297 = vunpack.c.l.b16 %v216
      %v298 = vunpack.c.l.b16 %v217
      %v299 = vunpack.c.h.b16 %v217
      %v300 = vunpack.c.l.b16 %v218
      %v301 = vunpack.c.l.b16 %v219
      %v302 = vunpack.c.h.b16 %v219
      %v303 = vunpack.c.l.b16 %v220
      %v304 = vunpack.c.l.b16 %v221
      %v305 = vunpack.c.h.b16 %v221
      %v306 = vunpack.c.l.b16 %v222
      %v307 = vunpack.c.l.b16 %v223
      %v308 = vunpack.c.h.b16 %v223
      %v309 = vunpack.c.l.b16 %v224
      %v310 = vunpack.c.l.b16 %v225
      %v311 = vunpack.c.h.b16 %v225
      %v312 = vunpack.c.l.b16 %v226
      %v313 = vunpack.c.l.b16 %v227
      %v314 = vunpack.c.h.b16 %v227
      %v315 = vunpack.c.l.b16 %v228
      %v316 = vunpack.c.l.b16 %v229
      %v317 = vunpack.c.h.b16 %v229
      %v318 = vunpack.c.l.b16 %v230
      %v319 = vpack.c.b16 %v274, %v271
      %v320 = vpack.c.b16 %v275, %v272
      %v321 = vpack.c.b16 %v276, %v273
      %v322 = vpack.c.b16 %v280, %v277
      %v323 = vpack.c.b16 %v281, %v278
      %v324 = vpack.c.b16 %v282, %v279
      %v325 = vpack.c.b16 %v286, %v283
      %v326 = vpack.c.b16 %v287, %v284
      %v327 = vpack.c.b16 %v288, %v285
      %v328 = vpack.c.b16 %v292, %v289
      %v329 = vpack.c.b16 %v293, %v290
      %v330 = vpack.c.b16 %v294, %v291
      %v331 = vpack.c.b16 %v298, %v295
      %v332 = vpack.c.b16 %v299, %v296
      %v333 = vpack.c.b16 %v300, %v297
      %v334 = vpack.c.b16 %v304, %v301
      %v335 = vpack.c.b16 %v305, %v302
      %v336 = vpack.c.b16 %v306, %v303
      %v337 = vpack.c.b16 %v310, %v307
      %v338 = vpack.c.b16 %v311, %v308
      %v339 = vpack.c.b16 %v312, %v309
      %v340 = vpack.c.b16 %v316, %v313
      %v341 = vpack.c.b16 %v317, %v314
      %v342 = vpack.c.b16 %v318, %v315
      %367 = vmatpush.bf16.msra.mxu0 %v340
      %368 = vmatpush.bf16.msra.mxu0 %v337
      %369 = vmatpush.bf16.msra.mxu0 %v334
      %370 = vmatpush.bf16.msra.mxu0 %v331
      %371 = vmatpush.bf16.msra.mxu0 %v328
      %372 = vmatpush.bf16.msra.mxu0 %v325
      %373 = vmatpush.bf16.msra.mxu0 %v322
      %374 = vmatpush.bf16.msra.mxu0 %v319
      %375 = vmatmul.bf16.gmra.mxu0 %v191
      %v376 = vpop.f32.mrf.mxu0
      %v377 = vadd.f32 %v233, %v376
      %v378 = vpop.f32.mrf.mxu0
      %v379 = vadd.f32 %v233, %v378
      %380 = vmatmul.bf16.gmra.mxu0 %v192
      %v381 = vpop.f32.mrf.mxu0
      %v382 = vadd.f32 %v233, %v381
      %v383 = vpop.f32.mrf.mxu0
      %v384 = vadd.f32 %v233, %v383
      %385 = vmatmul.bf16.gmra.mxu0 %v193
      %v386 = vpop.f32.mrf.mxu0
      %v387 = vadd.f32 %v233, %v386
      %v388 = vpop.f32.mrf.mxu0
      %v389 = vadd.f32 %v233, %v388
      %390 = vmatmul.bf16.gmra.mxu0 %v194
      %v391 = vpop.f32.mrf.mxu0
      %v392 = vadd.f32 %v233, %v391
      %v393 = vpop.f32.mrf.mxu0
      %v394 = vadd.f32 %v233, %v393
      %395 = vmatmul.bf16.gmra.mxu0 %v195
      %v396 = vpop.f32.mrf.mxu0
      %v397 = vadd.f32 %v233, %v396
      %v398 = vpop.f32.mrf.mxu0
      %v399 = vadd.f32 %v233, %v398
      %400 = vmatmul.bf16.gmra.mxu0 %v196
      %v401 = vpop.f32.mrf.mxu0
      %v402 = vadd.f32 %v233, %v401
      %v403 = vpop.f32.mrf.mxu0
      %v404 = vadd.f32 %v233, %v403
      %405 = vmatmul.bf16.gmra.mxu0 %v197
      %v406 = vpop.f32.mrf.mxu0
      %v407 = vadd.f32 %v233, %v406
      %v408 = vpop.f32.mrf.mxu0
      %v409 = vadd.f32 %v233, %v408
      %410 = vmatmul.bf16.gmra.mxu0 %v198
      %v411 = vpop.f32.mrf.mxu0
      %v412 = vadd.f32 %v233, %v411
      %v413 = vpop.f32.mrf.mxu0
      %414 = vdwg.mxu0
      %415 = vmatpush.bf16.msra.mxu0 %v341
      %416 = vmatpush.bf16.msra.mxu0 %v338
      %417 = vmatpush.bf16.msra.mxu0 %v335
      %418 = vmatpush.bf16.msra.mxu0 %v332
      %419 = vmatpush.bf16.msra.mxu0 %v329
      %420 = vmatpush.bf16.msra.mxu0 %v326
      %421 = vmatpush.bf16.msra.mxu0 %v323
      %422 = vmatpush.bf16.msra.mxu0 %v320
      %423 = vmatmul.bf16.gmra.mxu0 %v191
      %v424 = vpop.f32.mrf.mxu0
      %v425 = vadd.f32 %v234, %v424
      %v426 = vpop.f32.mrf.mxu0
      %v427 = vadd.f32 %v234, %v426
      %428 = vmatmul.bf16.gmra.mxu0 %v192
      %v429 = vpop.f32.mrf.mxu0
      %v430 = vadd.f32 %v234, %v429
      %v431 = vpop.f32.mrf.mxu0
      %v432 = vadd.f32 %v234, %v431
      %433 = vmatmul.bf16.gmra.mxu0 %v193
      %v434 = vpop.f32.mrf.mxu0
      %v435 = vadd.f32 %v234, %v434
      %v436 = vpop.f32.mrf.mxu0
      %v437 = vadd.f32 %v234, %v436
      %438 = vmatmul.bf16.gmra.mxu0 %v194
      %v439 = vpop.f32.mrf.mxu0
      %v440 = vadd.f32 %v234, %v439
      %v441 = vpop.f32.mrf.mxu0
      %v442 = vadd.f32 %v234, %v441
      %443 = vmatmul.bf16.gmra.mxu0 %v195
      %v444 = vpop.f32.mrf.mxu0
      %v445 = vadd.f32 %v234, %v444
      %v446 = vpop.f32.mrf.mxu0
      %v447 = vadd.f32 %v234, %v446
      %448 = vmatmul.bf16.gmra.mxu0 %v196
      %v449 = vpop.f32.mrf.mxu0
      %v450 = vadd.f32 %v234, %v449
      %v451 = vpop.f32.mrf.mxu0
      %v452 = vadd.f32 %v234, %v451
      %453 = vmatmul.bf16.gmra.mxu0 %v197
      %v454 = vpop.f32.mrf.mxu0
      %v455 = vadd.f32 %v234, %v454
      %v456 = vpop.f32.mrf.mxu0
      %v457 = vadd.f32 %v234, %v456
      %458 = vmatmul.bf16.gmra.mxu0 %v198
      %v459 = vpop.f32.mrf.mxu0
      %v460 = vadd.f32 %v234, %v459
      %v461 = vpop.f32.mrf.mxu0
      %462 = vdwg.mxu0
      %463 = vmatpush.bf16.msra.mxu0 %v342
      %464 = vmatpush.bf16.msra.mxu0 %v339
      %465 = vmatpush.bf16.msra.mxu0 %v336
      %466 = vmatpush.bf16.msra.mxu0 %v333
      %467 = vmatpush.bf16.msra.mxu0 %v330
      %468 = vmatpush.bf16.msra.mxu0 %v327
      %469 = vmatpush.bf16.msra.mxu0 %v324
      %470 = vmatpush.bf16.msra.mxu0 %v321
      %471 = vmatmul.bf16.gmra.mxu0 %v191
      %v472 = vpop.f32.mrf.mxu0
      %v473 = vadd.f32 %v235, %v472
      %v474 = vpop.f32.mrf.mxu0
      %v475 = vadd.f32 %v235, %v474
      %476 = vmatmul.bf16.gmra.mxu0 %v192
      %v477 = vpop.f32.mrf.mxu0
      %v478 = vadd.f32 %v235, %v477
      %v479 = vpop.f32.mrf.mxu0
      %v480 = vadd.f32 %v235, %v479
      %481 = vmatmul.bf16.gmra.mxu0 %v193
      %v482 = vpop.f32.mrf.mxu0
      %v483 = vadd.f32 %v235, %v482
      %v484 = vpop.f32.mrf.mxu0
      %v485 = vadd.f32 %v235, %v484
      %486 = vmatmul.bf16.gmra.mxu0 %v194
      %v487 = vpop.f32.mrf.mxu0
      %v488 = vadd.f32 %v235, %v487
      %v489 = vpop.f32.mrf.mxu0
      %v490 = vadd.f32 %v235, %v489
      %491 = vmatmul.bf16.gmra.mxu0 %v195
      %v492 = vpop.f32.mrf.mxu0
      %v493 = vadd.f32 %v235, %v492
      %v494 = vpop.f32.mrf.mxu0
      %v495 = vadd.f32 %v235, %v494
      %496 = vmatmul.bf16.gmra.mxu0 %v196
      %v497 = vpop.f32.mrf.mxu0
      %v498 = vadd.f32 %v235, %v497
      %v499 = vpop.f32.mrf.mxu0
      %v500 = vadd.f32 %v235, %v499
      %501 = vmatmul.bf16.gmra.mxu0 %v197
      %v502 = vpop.f32.mrf.mxu0
      %v503 = vadd.f32 %v235, %v502
      %v504 = vpop.f32.mrf.mxu0
      %v505 = vadd.f32 %v235, %v504
      %506 = vmatmul.bf16.gmra.mxu0 %v198
      %v507 = vpop.f32.mrf.mxu0
      %v508 = vadd.f32 %v235, %v507
      %v509 = vpop.f32.mrf.mxu0
      %510 = vdwg.mxu0
      %511 = vst [vmem:[%s174] sm:$0xff] %v377
      %512 = vst [vmem:[%s174 + $0x8] sm:$0xff] %v425
      %513 = vst [vmem:[%s174 + $0x10] sm:$0xff] %v473
      %514 = vst [vmem:[%s174 + $0x18] sm:$0xff] %v379
      %515 = vst [vmem:[%s174 + $0x20] sm:$0xff] %v427
      %516 = vst [vmem:[%s174 + $0x28] sm:$0xff] %v475
      %517 = vst [vmem:[%s174 + $0x30] sm:$0xff] %v382
      %518 = vst [vmem:[%s174 + $0x38] sm:$0xff] %v430
      %519 = vst [vmem:[%s174 + $0x40] sm:$0xff] %v478
      %520 = vst [vmem:[%s174 + $0x48] sm:$0xff] %v384
      %521 = vst [vmem:[%s174 + $0x50] sm:$0xff] %v432
      %522 = vst [vmem:[%s174 + $0x58] sm:$0xff] %v480
      %523 = vst [vmem:[%s174 + $0x60] sm:$0xff] %v387
      %524 = vst [vmem:[%s174 + $0x68] sm:$0xff] %v435
      %525 = vst [vmem:[%s174 + $0x70] sm:$0xff] %v483
      %526 = vst [vmem:[%s174 + $0x78] sm:$0xff] %v389
      %527 = vst [vmem:[%s174 + $0x80] sm:$0xff] %v437
      %528 = vst [vmem:[%s174 + $0x88] sm:$0xff] %v485
      %529 = vst [vmem:[%s174 + $0x90] sm:$0xff] %v392
      %530 = vst [vmem:[%s174 + $0x98] sm:$0xff] %v440
      %531 = vst [vmem:[%s174 + $0xa0] sm:$0xff] %v488
      %532 = vst [vmem:[%s174 + $0xa8] sm:$0xff] %v394
      %533 = vst [vmem:[%s174 + $0xb0] sm:$0xff] %v442
      %534 = vst [vmem:[%s174 + $0xb8] sm:$0xff] %v490
      %535 = vst [vmem:[%s174 + $0xc0] sm:$0xff] %v397
      %536 = vst [vmem:[%s174 + $0xc8] sm:$0xff] %v445
      %537 = vst [vmem:[%s174 + $0xd0] sm:$0xff] %v493
      %538 = vst [vmem:[%s174 + $0xd8] sm:$0xff] %v399
      %539 = vst [vmem:[%s174 + $0xe0] sm:$0xff] %v447
      %540 = vst [vmem:[%s174 + $0xe8] sm:$0xff] %v495
      %541 = vst [vmem:[%s174 + $0xf0] sm:$0xff] %v402
      %542 = vst [vmem:[%s174 + $0xf8] sm:$0xff] %v450
      %543 = vst [vmem:[%s174 + $0x100] sm:$0xff] %v498
      %544 = vst [vmem:[%s174 + $0x108] sm:$0xff] %v404
      %545 = vst [vmem:[%s174 + $0x110] sm:$0xff] %v452
      %546 = vst [vmem:[%s174 + $0x118] sm:$0xff] %v500
      %547 = vst [vmem:[%s174 + $0x120] sm:$0xff] %v407
      %548 = vst [vmem:[%s174 + $0x128] sm:$0xff] %v455
      %549 = vst [vmem:[%s174 + $0x130] sm:$0xff] %v503
      %550 = vst [vmem:[%s174 + $0x138] sm:$0xff] %v409
      %551 = vst [vmem:[%s174 + $0x140] sm:$0xff] %v457
      %552 = vst [vmem:[%s174 + $0x148] sm:$0xff] %v505
      %553 = vst [vmem:[%s174 + $0x150] sm:$0xff] %v412
      %554 = vst [vmem:[%s174 + $0x158] sm:$0xff] %v460
      %555 = vst [vmem:[%s174 + $0x160] sm:$0xff] %v508
      %s556 = smul.u32 15, %s14
      %p557 = scmp.lt.s32.totalorder %s556, 29
      %s558 = scalar_select %p557, %s556, 29
      %s559 = smul.addr %s558, 3
      %s560 = smul.addr %s559, 8
      %s561 = scalar_lea.vmem %s3, %s560
      // Predicated region
      $region33: #{_lambda_.18} parent=31 // pred_check
        %p562 = pneg %p100
      $region34: #{_lambda_.18} parent=31 // pred_check_branch
        %564 = sbr.rel (%p562) target = $region36
      $region35: #{_lambda_.18} parent=31 // pred_region
        %s565 = smul.u32 15, %s14
      $region36: #{_lambda_.18} parent=31 // pred_fallthru
        _
    $region32: #{_lambda_.18} parent=5 // pred_fallthru
      _
    %p566 = scmp.le.s32.totalorder 2, %s9
    // Predicated region
    $region37: #{_lambda_.18} parent=5 // pred_check
      %p567 = pneg %p566
    $region38: #{_lambda_.18} parent=5 // pred_check_branch
      %569 = sbr.rel (%p567) target = $region40
    $region39: #{_lambda_.18} parent=5 // pred_region
      %s570 = ssub.s32 %s9, 2
      // Predicated region
      $region41: #{_lambda_.18} parent=39 // pred_check
        %p571 = pneg %p106
      $region42: #{_lambda_.18} parent=39 // pred_check_branch
        %573 = sbr.rel (%p571) target = $region44
      $region43: #{_lambda_.18} parent=39 // pred_region
        %s574 = smul.u32 15, %s15
        %p575 = scmp.lt.s32.totalorder %s574, 29
        %s576 = scalar_select %p575, %s574, 29
        %s577 = smul.addr %s576, 3
        %s578 = smul.addr %s577, 8
        %s579 = scalar_lea.vmem %s3, %s578
      $region44: #{_lambda_.18} parent=39 // pred_fallthru
        _
    $region40: #{_lambda_.18} parent=5 // pred_fallthru
      _
  $region6: #{_lambda_.18} parent=0 // loop_footer
    %s13 = sadd.s32 1, %s9
  $region7: #{_lambda_.18} parent=0 // loop_footer_branch
    %8 = sbr.rel target = $region3
  $region8: #{_lambda_.18} parent=0 // loop_exit
    _

// kernel: _lambda_.19
$region0: #{_lambda_.19}
  #allocation0 [shape = 'u32[]', space=smem, size = 0x4, offset = 0x4, fixed_abs, tag = 'smem constant byte address 0x4 - core index']
  #allocation1 [shape = 'u32[72,128]{1,0:T(1,128)}', space=vmem, size = 0x9000, scoped, tag = 'internal scratch']
  %s0 = inlined_call_operand.vmem [shape: f32[240,16], index: 0, kind: input, shape index: {}]
  %s1 = inlined_call_operand.vmem [shape: bf16[16,128], index: 1, kind: input, shape index: {}]
  %s2 = inlined_call_operand.vmem [shape: f32[1,128], index: 2, kind: input, shape index: {}]
  %s3 = inlined_call_operand.vmem [shape: f32[240,128], index: 3, kind: input, shape index: {}]
  %s4 = inlined_call_operand.vmem [shape: f32[1,128], index: 4, kind: input, shape index: {}]
  %s5 = inlined_call_operand.vmem [shape: f32[1,128], index: 5, kind: input, shape index: {}]
  %s6 = inlined_call_operand.vmem [shape: f32[240,128], index: 6, kind: output, shape index: {}]
  %s7 = sld [smem:[#allocation0]]
  $region57: #{_lambda_.19} parent=0
    _
  %s9 = ssub.s32 1, %s7
  %s10 = scalar_select 0, %s9, %s7
  loop: start=0, step=1, limit=4
  $region2: #{_lambda_.19} parent=0 // loop_pre_header
    _
  $region3: #{_lambda_.19} parent=0 // loop_header
    %s12 = sphi 0, %s16
    %p13 = scmp.ge.s32.totalorder %s12, 4
    %s22 = sphi 0, %s24
    %s25 = sphi 0, %s22
    %s26 = sphi 0, %s25
    %s42 = sphi 0, %s26
    %s46 = sphi 0, %s46
    %s48 = sphi 0, %s46
    %s49 = sphi 0, %s48
    %s63 = sphi 0, %s49
    %s67 = sphi 0, %s67
    %s69 = sphi 0, %s67
    %s70 = sphi 0, %s69
    %s84 = sphi 0, %s70
    %s90 = sphi 0, %s92
    %s93 = sphi 0, %s90
    %s94 = sphi 0, %s93
    %s110 = sphi 0, %s94
    %s114 = sphi 0, %s114
    %s116 = sphi 0, %s114
    %s117 = sphi 0, %s116
    %s131 = sphi 0, %s117
    %s135 = sphi 0, %s135
    %s137 = sphi 0, %s135
    %s138 = sphi 0, %s137
    %s152 = sphi 0, %s138
    %s158 = sphi 0, %s160
    %s161 = sphi 0, %s158
    %s162 = sphi 0, %s161
    %s178 = sphi 0, %s162
  $region4: #{_lambda_.19} parent=0 // loop_header_branch
    %15 = sbr.rel (%p13) target = $region8
  $region5: #{_lambda_.19} parent=0 // loop_body
    %s17 = ssub.s32 %s12, 1
    %s18 = ssub.s32 %s12, 2
    %s19 = sadd.s32 %s12, 1
    %s20 = ssub.s32 %s12, %s19
    %p21 = scmp.eq.s32.totalorder %s20, 0
    %s23 = sadd.s32 %s22, 1
    %s24 = scalar_select %p21, %s22, %s23
    %p27 = pneg %p21
    %p28 = scmp.eq.s32.totalorder %s12, 1
    %p29 = por %p27, %p28
    %p30 = scmp.ne.s32.totalorder %s22, %s25
    %p31 = scmp.eq.s32.totalorder %s12, 0
    %p32 = por %p30, %p31
    %p33 = scmp.ne.s32.totalorder %s22, %s25
    %p34 = scmp.eq.s32.totalorder %s17, 1
    %p35 = por %p33, %p34
    %p36 = scmp.ne.s32.totalorder %s25, %s26
    %p37 = scmp.eq.s32.totalorder %s17, 0
    %p38 = por %p36, %p37
    %p39 = scmp.ne.s32.totalorder %s25, %s26
    %p40 = scmp.eq.s32.totalorder %s18, 1
    %p41 = por %p39, %p40
    %p43 = scmp.ne.s32.totalorder %s26, %s42
    %p44 = scmp.eq.s32.totalorder %s18, 0
    %p45 = por %p43, %p44
    %s47 = sadd.s32 %s46, 1
    %p50 = scmp.eq.s32.totalorder %s12, 1
    %p51 = scmp.ne.s32.totalorder %s46, %s48
    %p52 = scmp.eq.s32.totalorder %s12, 0
    %p53 = por %p51, %p52
    %p54 = scmp.ne.s32.totalorder %s46, %s48
    %p55 = scmp.eq.s32.totalorder %s17, 1
    %p56 = por %p54, %p55
    %p57 = scmp.ne.s32.totalorder %s48, %s49
    %p58 = scmp.eq.s32.totalorder %s17, 0
    %p59 = por %p57, %p58
    %p60 = scmp.ne.s32.totalorder %s48, %s49
    %p61 = scmp.eq.s32.totalorder %s18, 1
    %p62 = por %p60, %p61
    %p64 = scmp.ne.s32.totalorder %s49, %s63
    %p65 = scmp.eq.s32.totalorder %s18, 0
    %p66 = por %p64, %p65
    %s68 = sadd.s32 %s67, 1
    %p71 = scmp.eq.s32.totalorder %s12, 1
    %p72 = scmp.ne.s32.totalorder %s67, %s69
    %p73 = scmp.eq.s32.totalorder %s12, 0
    %p74 = por %p72, %p73
    %p75 = scmp.ne.s32.totalorder %s67, %s69
    %p76 = scmp.eq.s32.totalorder %s17, 1
    %p77 = por %p75, %p76
    %p78 = scmp.ne.s32.totalorder %s69, %s70
    %p79 = scmp.eq.s32.totalorder %s17, 0
    %p80 = por %p78, %p79
    %p81 = scmp.ne.s32.totalorder %s69, %s70
    %p82 = scmp.eq.s32.totalorder %s18, 1
    %p83 = por %p81, %p82
    %p85 = scmp.ne.s32.totalorder %s70, %s84
    %p86 = scmp.eq.s32.totalorder %s18, 0
    %p87 = por %p85, %p86
    %s88 = ssub.s32 %s12, %s19
    %p89 = scmp.eq.s32.totalorder %s88, 0
    %s91 = sadd.s32 %s90, 1
    %s92 = scalar_select %p89, %s90, %s91
    %p95 = pneg %p89
    %p96 = scmp.eq.s32.totalorder %s12, 1
    %p97 = por %p95, %p96
    %p98 = scmp.ne.s32.totalorder %s90, %s93
    %p99 = scmp.eq.s32.totalorder %s12, 0
    %p100 = por %p98, %p99
    %p101 = scmp.ne.s32.totalorder %s90, %s93
    %p102 = scmp.eq.s32.totalorder %s17, 1
    %p103 = por %p101, %p102
    %p104 = scmp.ne.s32.totalorder %s93, %s94
    %p105 = scmp.eq.s32.totalorder %s17, 0
    %p106 = por %p104, %p105
    %p107 = scmp.ne.s32.totalorder %s93, %s94
    %p108 = scmp.eq.s32.totalorder %s18, 1
    %p109 = por %p107, %p108
    %p111 = scmp.ne.s32.totalorder %s94, %s110
    %p112 = scmp.eq.s32.totalorder %s18, 0
    %p113 = por %p111, %p112
    %s115 = sadd.s32 %s114, 1
    %p118 = scmp.eq.s32.totalorder %s12, 1
    %p119 = scmp.ne.s32.totalorder %s114, %s116
    %p120 = scmp.eq.s32.totalorder %s12, 0
    %p121 = por %p119, %p120
    %p122 = scmp.ne.s32.totalorder %s114, %s116
    %p123 = scmp.eq.s32.totalorder %s17, 1
    %p124 = por %p122, %p123
    %p125 = scmp.ne.s32.totalorder %s116, %s117
    %p126 = scmp.eq.s32.totalorder %s17, 0
    %p127 = por %p125, %p126
    %p128 = scmp.ne.s32.totalorder %s116, %s117
    %p129 = scmp.eq.s32.totalorder %s18, 1
    %p130 = por %p128, %p129
    %p132 = scmp.ne.s32.totalorder %s117, %s131
    %p133 = scmp.eq.s32.totalorder %s18, 0
    %p134 = por %p132, %p133
    %s136 = sadd.s32 %s135, 1
    %p139 = scmp.eq.s32.totalorder %s12, 1
    %p140 = scmp.ne.s32.totalorder %s135, %s137
    %p141 = scmp.eq.s32.totalorder %s12, 0
    %p142 = por %p140, %p141
    %p143 = scmp.ne.s32.totalorder %s135, %s137
    %p144 = scmp.eq.s32.totalorder %s17, 1
    %p145 = por %p143, %p144
    %p146 = scmp.ne.s32.totalorder %s137, %s138
    %p147 = scmp.eq.s32.totalorder %s17, 0
    %p148 = por %p146, %p147
    %p149 = scmp.ne.s32.totalorder %s137, %s138
    %p150 = scmp.eq.s32.totalorder %s18, 1
    %p151 = por %p149, %p150
    %p153 = scmp.ne.s32.totalorder %s138, %s152
    %p154 = scmp.eq.s32.totalorder %s18, 0
    %p155 = por %p153, %p154
    %s156 = ssub.s32 %s12, %s19
    %p157 = scmp.eq.s32.totalorder %s156, 0
    %s159 = sadd.s32 %s158, 1
    %s160 = scalar_select %p157, %s158, %s159
    %p163 = pneg %p157
    %p164 = scmp.eq.s32.totalorder %s12, 1
    %p165 = por %p163, %p164
    %p166 = scmp.ne.s32.totalorder %s158, %s161
    %p167 = scmp.eq.s32.totalorder %s12, 0
    %p168 = por %p166, %p167
    %p169 = scmp.ne.s32.totalorder %s158, %s161
    %p170 = scmp.eq.s32.totalorder %s17, 1
    %p171 = por %p169, %p170
    %p172 = scmp.ne.s32.totalorder %s161, %s162
    %p173 = scmp.eq.s32.totalorder %s17, 0
    %p174 = por %p172, %p173
    %p175 = scmp.ne.s32.totalorder %s161, %s162
    %p176 = scmp.eq.s32.totalorder %s18, 1
    %p177 = por %p175, %p176
    %p179 = scmp.ne.s32.totalorder %s162, %s178
    %p180 = scmp.eq.s32.totalorder %s18, 0
    %p181 = por %p179, %p180
    %p182 = scmp.le.s32.totalorder 1, %s12
    %p183 = scmp.lt.s32.totalorder %s12, 3
    %p184 = pnand %p182, %p183
    %p185 = pneg %p184
    // Predicated region
    $region9: #{_lambda_.19} parent=5 // pred_check
      _
    $region10: #{_lambda_.19} parent=5 // pred_check_branch
      %187 = sbr.rel (%p184) target = $region12
    $region11: #{_lambda_.19} parent=5 // pred_region
      %s188 = ssub.s32 %s12, 1
      // Predicated region
      $region13: #{_lambda_.19} parent=11 // pred_check
        %p189 = pneg %p59
      $region14: #{_lambda_.19} parent=11 // pred_check_branch
        %191 = sbr.rel (%p189) target = $region16
      $region15: #{_lambda_.19} parent=11 // pred_region
        _
      $region16: #{_lambda_.19} parent=11 // pred_fallthru
        _
      // Predicated region
      $region17: #{_lambda_.19} parent=11 // pred_check
        %p192 = pneg %p80
      $region18: #{_lambda_.19} parent=11 // pred_check_branch
        %194 = sbr.rel (%p192) target = $region20
      $region19: #{_lambda_.19} parent=11 // pred_region
        _
      $region20: #{_lambda_.19} parent=11 // pred_fallthru
        _
      // Predicated region
      $region21: #{_lambda_.19} parent=11 // pred_check
        %p195 = pneg %p127
      $region22: #{_lambda_.19} parent=11 // pred_check_branch
        %197 = sbr.rel (%p195) target = $region24
      $region23: #{_lambda_.19} parent=11 // pred_region
        _
      $region24: #{_lambda_.19} parent=11 // pred_fallthru
        _
      // Predicated region
      $region25: #{_lambda_.19} parent=11 // pred_check
        %p198 = pneg %p148
      $region26: #{_lambda_.19} parent=11 // pred_check_branch
        %200 = sbr.rel (%p198) target = $region28
      $region27: #{_lambda_.19} parent=11 // pred_region
        _
      $region28: #{_lambda_.19} parent=11 // pred_fallthru
        _
    $region12: #{_lambda_.19} parent=5 // pred_fallthru
      _
    %p201 = scmp.lt.s32.totalorder %s12, 2
    // Predicated region
    $region29: #{_lambda_.19} parent=5 // pred_check
      %p202 = pneg %p201
    $region30: #{_lambda_.19} parent=5 // pred_check_branch
      %204 = sbr.rel (%p202) target = $region32
    $region31: #{_lambda_.19} parent=5 // pred_region
      // Predicated region
      $region33: #{_lambda_.19} parent=31 // pred_check
        %p205 = pneg %p32
      $region34: #{_lambda_.19} parent=31 // pred_check_branch
        %207 = sbr.rel (%p205) target = $region36
      $region35: #{_lambda_.19} parent=31 // pred_region
        %s208 = smul.u32 15, %s12
        %p209 = scmp.lt.s32.totalorder %s208, 29
        %s210 = scalar_select %p209, %s208, 29
        %s211 = smul.addr %s210, 8
        %s212 = scalar_lea.vmem %s0, %s211
        %s213 = smul.u32 15, %s12
      $region36: #{_lambda_.19} parent=31 // pred_fallthru
        _
      // Predicated region
      $region37: #{_lambda_.19} parent=31 // pred_check
        %p214 = pneg %p100
      $region38: #{_lambda_.19} parent=31 // pred_check_branch
        %216 = sbr.rel (%p214) target = $region40
      $region39: #{_lambda_.19} parent=31 // pred_region
        %s217 = smul.u32 15, %s12
        %p218 = scmp.lt.s32.totalorder %s217, 29
        %s219 = scalar_select %p218, %s217, 29
        %s220 = smul.addr %s219, 8
        %s221 = scalar_lea.vmem %s3, %s220
        %s222 = smul.u32 15, %s12
      $region40: #{_lambda_.19} parent=31 // pred_fallthru
        _
    $region32: #{_lambda_.19} parent=5 // pred_fallthru
      _
    %p223 = scmp.le.s32.totalorder 1, %s12
    %p224 = scmp.lt.s32.totalorder %s12, 3
    %p225 = pnand %p223, %p224
    %p226 = pneg %p225
    // Predicated region
    $region41: #{_lambda_.19} parent=5 // pred_check
      _
    $region42: #{_lambda_.19} parent=5 // pred_check_branch
      %228 = sbr.rel (%p225) target = $region44
    $region43: #{_lambda_.19} parent=5 // pred_region
      %s229 = ssub.s32 %s12, 1
      %s230 = smul.u32 15, %s17
      %p231 = scmp.lt.s32.totalorder %s230, 29
      %s232 = scalar_select %p231, %s230, 29
      %s233 = smul.addr %s232, 8
      %s234 = scalar_lea.vmem %s0, %s233
      %p235 = pneg %p38
      %p236 = pneg %p35
      %p237 = pneg %p59
      %p238 = pneg %p56
      %p239 = pneg %p80
      %p240 = pneg %p77
      %s241 = smul.u32 15, %s17
      %p242 = scmp.lt.s32.totalorder %s241, 29
      %s243 = scalar_select %p242, %s241, 29
      %s244 = smul.addr %s243, 8
      %s245 = scalar_lea.vmem %s3, %s244
      %p246 = pneg %p106
      %p247 = pneg %p103
      %p248 = pneg %p127
      %p249 = pneg %p124
      %p250 = pneg %p148
      %p251 = pneg %p145
      %p252 = pneg %p174
      %p253 = pneg %p171
      %s254 = smul.u32 15, %s17
      %p255 = scmp.lt.s32.totalorder %s254, 29
      %s256 = scalar_select %p255, %s254, 29
      %s257 = smul.addr %s256, 8
      %s258 = scalar_lea.vmem %s6, %s257
      %s259 = smul.u32 15, %s17
      %p260 = scmp.lt.s32.totalorder %s259, 29
      %s261 = scalar_select %p260, %s259, 29
      %s262 = smul.addr %s261, 8
      %s263 = scalar_lea.vmem %s0, %s262
      %s264 = smul.u32 15, %s17
      %s265 = smul.u32 15, %s17
      %p266 = scmp.lt.s32.totalorder %s265, 29
      %s267 = scalar_select %p266, %s265, 29
      %s268 = smul.addr %s267, 8
      %s269 = scalar_lea.vmem %s3, %s268
      %s270 = smul.u32 15, %s17
      %s271 = smul.u32 15, %s17
      %p272 = scmp.lt.s32.totalorder %s271, 29
      %s273 = scalar_select %p272, %s271, 29
      %s274 = smul.addr %s273, 8
      %s275 = scalar_lea.vmem %s6, %s274
      %s276 = smul.u32 15, %s17
      %v278 = vld [vmem:[%s263] sm:$0xff]
      %v279 = vld [vmem:[%s263 + $0x8] sm:$0xff]
      %v280 = vld [vmem:[%s263 + $0x10] sm:$0xff]
      %v281 = vld [vmem:[%s263 + $0x18] sm:$0xff]
      %v282 = vld [vmem:[%s263 + $0x20] sm:$0xff]
      %v283 = vld [vmem:[%s263 + $0x28] sm:$0xff]
      %v284 = vld [vmem:[%s263 + $0x30] sm:$0xff]
      %v285 = vld [vmem:[%s263 + $0x38] sm:$0xff]
      %v286 = vld [vmem:[%s263 + $0x40] sm:$0xff]
      %v287 = vld [vmem:[%s263 + $0x48] sm:$0xff]
      %v288 = vld [vmem:[%s263 + $0x50] sm:$0xff]
      %v289 = vld [vmem:[%s263 + $0x58] sm:$0xff]
      %v290 = vld [vmem:[%s263 + $0x60] sm:$0xff]
      %v291 = vld [vmem:[%s263 + $0x68] sm:$0xff]
      %v292 = vld [vmem:[%s263 + $0x70] sm:$0xff]
      %v293 = vpack.c.bf16 %v279, %v278
      %v294 = vpack.c.bf16 %v281, %v280
      %v295 = vpack.c.bf16 %v283, %v282
      %v296 = vpack.c.bf16 %v285, %v284
      %v297 = vpack.c.bf16 %v287, %v286
      %v298 = vpack.c.bf16 %v289, %v288
      %v299 = vpack.c.bf16 %v291, %v290
      %v300 = vpack.c.bf16 %v292, %v292
      %v301 = vld [vmem:[%s1] sm:$0xf]
      %v302 = vld [vmem:[%s1 + $0x4] sm:$0xf]
      %v303 = vld [vmem:[%s2] sm:$0x1]
      %v305 = vperm.slane %v303, 0
      %v309 = vunpack.c.l.b16 %v301
      %v310 = vunpack.c.l.b16 %v302
      %v311 = vpack.c.b16 %v310, %v309
      %vm313 = vcmask 130048
      %v315 = vsel %vm313, %v293, 0
      %v318 = vsel %vm313, %v294, 0
      %v321 = vsel %vm313, %v295, 0
      %v324 = vsel %vm313, %v296, 0
      %v327 = vsel %vm313, %v297, 0
      %v330 = vsel %vm313, %v298, 0
      %v333 = vsel %vm313, %v299, 0
      %v336 = vsel %vm313, %v300, 0
      %338 = vmatpush.bf16.msra.mxu0 0
      %339 = vmatpush.bf16.msra.mxu0 0
      %340 = vmatpush.bf16.msra.mxu0 0
      %341 = vmatpush.bf16.msra.mxu0 0
      %342 = vmatpush.bf16.msra.mxu0 0
      %343 = vmatpush.bf16.msra.mxu0 0
      %344 = vmatpush.bf16.msra.mxu0 0
      %345 = vmatpush.bf16.msra.mxu0 %v311
      %346 = vmatmul.bf16.gmra.mxu0 %v315
      %v347 = vpop.f32.mrf.mxu0
      %v348 = vadd.f32 %v305, %v347
      %v349 = vpop.f32.mrf.mxu0
      %v350 = vadd.f32 %v305, %v349
      %351 = vmatmul.bf16.gmra.mxu0 %v318
      %v352 = vpop.f32.mrf.mxu0
      %v353 = vadd.f32 %v305, %v352
      %v354 = vpop.f32.mrf.mxu0
      %v355 = vadd.f32 %v305, %v354
      %356 = vmatmul.bf16.gmra.mxu0 %v321
      %v357 = vpop.f32.mrf.mxu0
      %v358 = vadd.f32 %v305, %v357
      %v359 = vpop.f32.mrf.mxu0
      %v360 = vadd.f32 %v305, %v359
      %361 = vmatmul.bf16.gmra.mxu0 %v324
      %v362 = vpop.f32.mrf.mxu0
      %v363 = vadd.f32 %v305, %v362
      %v364 = vpop.f32.mrf.mxu0
      %v365 = vadd.f32 %v305, %v364
      %366 = vmatmul.bf16.gmra.mxu0 %v327
      %v367 = vpop.f32.mrf.mxu0
      %v368 = vadd.f32 %v305, %v367
      %v369 = vpop.f32.mrf.mxu0
      %v370 = vadd.f32 %v305, %v369
      %371 = vmatmul.bf16.gmra.mxu0 %v330
      %v372 = vpop.f32.mrf.mxu0
      %v373 = vadd.f32 %v305, %v372
      %v374 = vpop.f32.mrf.mxu0
      %v375 = vadd.f32 %v305, %v374
      %376 = vmatmul.bf16.gmra.mxu0 %v333
      %v377 = vpop.f32.mrf.mxu0
      %v378 = vadd.f32 %v305, %v377
      %v379 = vpop.f32.mrf.mxu0
      %v380 = vadd.f32 %v305, %v379
      %381 = vmatmul.bf16.gmra.mxu0 %v336
      %v382 = vpop.f32.mrf.mxu0
      %v383 = vadd.f32 %v305, %v382
      %v384 = vpop.f32.mrf.mxu0
      %385 = vdwg.mxu0
      %v386 = vld [vmem:[%s269] sm:$0xff]
      %v387 = vld [vmem:[%s269 + $0x8] sm:$0xff]
      %v388 = vld [vmem:[%s269 + $0x10] sm:$0xff]
      %v389 = vld [vmem:[%s269 + $0x18] sm:$0xff]
      %v390 = vld [vmem:[%s269 + $0x20] sm:$0xff]
      %v391 = vld [vmem:[%s269 + $0x28] sm:$0xff]
      %v392 = vld [vmem:[%s269 + $0x30] sm:$0xff]
      %v393 = vld [vmem:[%s269 + $0x38] sm:$0xff]
      %v394 = vld [vmem:[%s269 + $0x40] sm:$0xff]
      %v395 = vld [vmem:[%s269 + $0x48] sm:$0xff]
      %v396 = vld [vmem:[%s269 + $0x50] sm:$0xff]
      %v397 = vld [vmem:[%s269 + $0x58] sm:$0xff]
      %v398 = vld [vmem:[%s269 + $0x60] sm:$0xff]
      %v399 = vld [vmem:[%s269 + $0x68] sm:$0xff]
      %v400 = vld [vmem:[%s269 + $0x70] sm:$0xff]
      %v401 = vadd.f32 %v348, %v386
      %v402 = vadd.f32 %v350, %v387
      %v403 = vadd.f32 %v353, %v388
      %v404 = vadd.f32 %v355, %v389
      %v405 = vadd.f32 %v358, %v390
      %v406 = vadd.f32 %v360, %v391
      %v407 = vadd.f32 %v363, %v392
      %v408 = vadd.f32 %v365, %v393
      %v409 = vadd.f32 %v368, %v394
      %v410 = vadd.f32 %v370, %v395
      %v411 = vadd.f32 %v373, %v396
      %v412 = vadd.f32 %v375, %v397
      %v413 = vadd.f32 %v378, %v398
      %v414 = vadd.f32 %v380, %v399
      %v415 = vadd.f32 %v383, %v400
      %v416 = vlaneseq
      %v417 = vand.u32 %v416, 127
      %vm418 = vcmp.lt.s32.totalorder %v417, 16
      %v419 = vsel %vm418, %v401, 0.0
      %v420 = vsel %vm418, %v402, 0.0
      %v421 = vsel %vm418, %v403, 0.0
      %v422 = vsel %vm418, %v404, 0.0
      %v423 = vsel %vm418, %v405, 0.0
      %v424 = vsel %vm418, %v406, 0.0
      %v425 = vsel %vm418, %v407, 0.0
      %v426 = vsel %vm418, %v408, 0.0
      %v427 = vsel %vm418, %v409, 0.0
      %v428 = vsel %vm418, %v410, 0.0
      %v429 = vsel %vm418, %v411, 0.0
      %v430 = vsel %vm418, %v412, 0.0
      %v431 = vsel %vm418, %v413, 0.0
      %v432 = vsel %vm418, %v414, 0.0
      %v433 = vsel %vm418, %v415, 0.0
      %434 = vadd.xlane.f32.xlu0 %v419
      %v435 = vpop.xlane.xlu0 %434
      %436 = vadd.xlane.f32.xlu0 %v420
      %v437 = vpop.xlane.xlu0 %436
      %438 = vadd.xlane.f32.xlu0 %v421
      %v439 = vpop.xlane.xlu0 %438
      %440 = vadd.xlane.f32.xlu0 %v422
      %v441 = vpop.xlane.xlu0 %440
      %442 = vadd.xlane.f32.xlu0 %v423
      %v443 = vpop.xlane.xlu0 %442
      %444 = vadd.xlane.f32.xlu0 %v424
      %v445 = vpop.xlane.xlu0 %444
      %446 = vadd.xlane.f32.xlu0 %v425
      %v447 = vpop.xlane.xlu0 %446
      %448 = vadd.xlane.f32.xlu0 %v426
      %v449 = vpop.xlane.xlu0 %448
      %450 = vadd.xlane.f32.xlu0 %v427
      %v451 = vpop.xlane.xlu0 %450
      %452 = vadd.xlane.f32.xlu0 %v428
      %v453 = vpop.xlane.xlu0 %452
      %454 = vadd.xlane.f32.xlu0 %v429
      %v455 = vpop.xlane.xlu0 %454
      %456 = vadd.xlane.f32.xlu0 %v430
      %v457 = vpop.xlane.xlu0 %456
      %458 = vadd.xlane.f32.xlu0 %v431
      %v459 = vpop.xlane.xlu0 %458
      %460 = vadd.xlane.f32.xlu0 %v432
      %v461 = vpop.xlane.xlu0 %460
      %462 = vadd.xlane.f32.xlu0 %v433
      %v463 = vpop.xlane.xlu0 %462
      %v464 = vrcp.pop 16.0
      %v465 = vmul.f32 16.0, %v464
      %v466 = vsub.f32 1.0, %v465
      %v467 = vmul.f32 %v464, %v466
      %v468 = vadd.f32 %v464, %v467
      %vm469 = vweird.f32 %v464
      %v470 = vsel %vm469, %v464, %v468
      %v471 = vmul.f32 %v435, %v470
      %v472 = vmul.f32 %v437, %v470
      %v473 = vmul.f32 %v439, %v470
      %v474 = vmul.f32 %v441, %v470
      %v475 = vmul.f32 %v443, %v470
      %v476 = vmul.f32 %v445, %v470
      %v477 = vmul.f32 %v447, %v470
      %v478 = vmul.f32 %v449, %v470
      %v479 = vmul.f32 %v451, %v470
      %v480 = vmul.f32 %v453, %v470
      %v481 = vmul.f32 %v455, %v470
      %v482 = vmul.f32 %v457, %v470
      %v483 = vmul.f32 %v459, %v470
      %v484 = vmul.f32 %v461, %v470
      %v485 = vmul.f32 %v463, %v470
      %v486 = vsub.f32 %v401, %v471
      %v487 = vsub.f32 %v402, %v472
      %v488 = vsub.f32 %v403, %v473
      %v489 = vsub.f32 %v404, %v474
      %v490 = vsub.f32 %v405, %v475
      %v491 = vsub.f32 %v406, %v476
      %v492 = vsub.f32 %v407, %v477
      %v493 = vsub.f32 %v408, %v478
      %v494 = vsub.f32 %v409, %v479
      %v495 = vsub.f32 %v410, %v480
      %v496 = vsub.f32 %v411, %v481
      %v497 = vsub.f32 %v412, %v482
      %v498 = vsub.f32 %v413, %v483
      %v499 = vsub.f32 %v414, %v484
      %v500 = vsub.f32 %v415, %v485
      %v501 = vsel %vm418, %v486, 0.0
      %v502 = vsel %vm418, %v487, 0.0
      %v503 = vsel %vm418, %v488, 0.0
      %v504 = vsel %vm418, %v489, 0.0
      %v505 = vsel %vm418, %v490, 0.0
      %v506 = vsel %vm418, %v491, 0.0
      %v507 = vsel %vm418, %v492, 0.0
      %v508 = vsel %vm418, %v493, 0.0
      %v509 = vsel %vm418, %v494, 0.0
      %v510 = vsel %vm418, %v495, 0.0
      %v511 = vsel %vm418, %v496, 0.0
      %v512 = vsel %vm418, %v497, 0.0
      %v513 = vsel %vm418, %v498, 0.0
      %v514 = vsel %vm418, %v499, 0.0
      %v515 = vsel %vm418, %v500, 0.0
      %v516 = vmul.f32 %v501, %v501
      %v517 = vmul.f32 %v502, %v502
      %v518 = vmul.f32 %v503, %v503
      %v519 = vmul.f32 %v504, %v504
      %v520 = vmul.f32 %v505, %v505
      %v521 = vmul.f32 %v506, %v506
      %v522 = vmul.f32 %v507, %v507
      %v523 = vmul.f32 %v508, %v508
      %v524 = vmul.f32 %v509, %v509
      %v525 = vmul.f32 %v510, %v510
      %v526 = vmul.f32 %v511, %v511
      %v527 = vmul.f32 %v512, %v512
      %v528 = vmul.f32 %v513, %v513
      %v529 = vmul.f32 %v514, %v514
      %v530 = vmul.f32 %v515, %v515
      %531 = vadd.xlane.f32.xlu0 %v516
      %v532 = vpop.xlane.xlu0 %531
      %533 = vadd.xlane.f32.xlu0 %v517
      %v534 = vpop.xlane.xlu0 %533
      %535 = vadd.xlane.f32.xlu0 %v518
      %v536 = vpop.xlane.xlu0 %535
      %537 = vadd.xlane.f32.xlu0 %v519
      %v538 = vpop.xlane.xlu0 %537
      %539 = vadd.xlane.f32.xlu0 %v520
      %v540 = vpop.xlane.xlu0 %539
      %541 = vadd.xlane.f32.xlu0 %v521
      %v542 = vpop.xlane.xlu0 %541
      %543 = vadd.xlane.f32.xlu0 %v522
      %v544 = vpop.xlane.xlu0 %543
      %545 = vadd.xlane.f32.xlu0 %v523
      %v546 = vpop.xlane.xlu0 %545
      %547 = vadd.xlane.f32.xlu0 %v524
      %v548 = vpop.xlane.xlu0 %547
      %549 = vadd.xlane.f32.xlu0 %v525
      %v550 = vpop.xlane.xlu0 %549
      %551 = vadd.xlane.f32.xlu0 %v526
      %v552 = vpop.xlane.xlu0 %551
      %553 = vadd.xlane.f32.xlu0 %v527
      %v554 = vpop.xlane.xlu0 %553
      %555 = vadd.xlane.f32.xlu0 %v528
      %v556 = vpop.xlane.xlu0 %555
      %557 = vadd.xlane.f32.xlu0 %v529
      %v558 = vpop.xlane.xlu0 %557
      %559 = vadd.xlane.f32.xlu0 %v530
      %v560 = vpop.xlane.xlu0 %559
      %v561 = vmul.f32 %v532, %v470
      %v562 = vmul.f32 %v534, %v470
      %v563 = vmul.f32 %v536, %v470
      %v564 = vmul.f32 %v538, %v470
      %v565 = vmul.f32 %v540, %v470
      %v566 = vmul.f32 %v542, %v470
      %v567 = vmul.f32 %v544, %v470
      %v568 = vmul.f32 %v546, %v470
      %v569 = vmul.f32 %v548, %v470
      %v570 = vmul.f32 %v550, %v470
      %v571 = vmul.f32 %v552, %v470
      %v572 = vmul.f32 %v554, %v470
      %v573 = vmul.f32 %v556, %v470
      %v574 = vmul.f32 %v558, %v470
      %v575 = vmul.f32 %v560, %v470
      %v576 = vadd.f32 %v561, 1e-05
      %v577 = vadd.f32 %v562, 1e-05
      %v578 = vadd.f32 %v563, 1e-05
      %v579 = vadd.f32 %v564, 1e-05
      %v580 = vadd.f32 %v565, 1e-05
      %v581 = vadd.f32 %v566, 1e-05
      %v582 = vadd.f32 %v567, 1e-05
      %v583 = vadd.f32 %v568, 1e-05
      %v584 = vadd.f32 %v569, 1e-05
      %v585 = vadd.f32 %v570, 1e-05
      %v586 = vadd.f32 %v571, 1e-05
      %v587 = vadd.f32 %v572, 1e-05
      %v588 = vadd.f32 %v573, 1e-05
      %v589 = vadd.f32 %v574, 1e-05
      %v590 = vadd.f32 %v575, 1e-05
      %v591 = vrsqrt.pop %v576
      %v592 = vmul.f32 %v591, %v576
      %v593 = vmul.f32 %v592, %v591
      %v594 = vmul.f32 0.5, %v593
      %v595 = vsub.f32 1.5, %v594
      %v596 = vmul.f32 %v591, %v595
      %vm597 = vweird.f32 %v576
      %vm598 = vweird.f32 %v591
      %vm599 = vmor %vm597, %vm598
      %v600 = vsel %vm599, %v591, %v596
      %v601 = vrsqrt.pop %v577
      %v602 = vmul.f32 %v601, %v577
      %v603 = vmul.f32 %v602, %v601
      %v604 = vmul.f32 0.5, %v603
      %v605 = vsub.f32 1.5, %v604
      %v606 = vmul.f32 %v601, %v605
      %vm607 = vweird.f32 %v577
      %vm608 = vweird.f32 %v601
      %vm609 = vmor %vm607, %vm608
      %v610 = vsel %vm609, %v601, %v606
      %v611 = vrsqrt.pop %v578
      %v612 = vmul.f32 %v611, %v578
      %v613 = vmul.f32 %v612, %v611
      %v614 = vmul.f32 0.5, %v613
      %v615 = vsub.f32 1.5, %v614
      %v616 = vmul.f32 %v611, %v615
      %vm617 = vweird.f32 %v578
      %vm618 = vweird.f32 %v611
      %vm619 = vmor %vm617, %vm618
      %v620 = vsel %vm619, %v611, %v616
      %v621 = vrsqrt.pop %v579
      %v622 = vmul.f32 %v621, %v579
      %v623 = vmul.f32 %v622, %v621
      %v624 = vmul.f32 0.5, %v623
      %v625 = vsub.f32 1.5, %v624
      %v626 = vmul.f32 %v621, %v625
      %vm627 = vweird.f32 %v579
      %vm628 = vweird.f32 %v621
      %vm629 = vmor %vm627, %vm628
      %v630 = vsel %vm629, %v621, %v626
      %v631 = vrsqrt.pop %v580
      %v632 = vmul.f32 %v631, %v580
      %v633 = vmul.f32 %v632, %v631
      %v634 = vmul.f32 0.5, %v633
      %v635 = vsub.f32 1.5, %v634
      %v636 = vmul.f32 %v631, %v635
      %vm637 = vweird.f32 %v580
      %vm638 = vweird.f32 %v631
      %vm639 = vmor %vm637, %vm638
      %v640 = vsel %vm639, %v631, %v636
      %v641 = vrsqrt.pop %v581
      %v642 = vmul.f32 %v641, %v581
      %v643 = vmul.f32 %v642, %v641
      %v644 = vmul.f32 0.5, %v643
      %v645 = vsub.f32 1.5, %v644
      %v646 = vmul.f32 %v641, %v645
      %vm647 = vweird.f32 %v581
      %vm648 = vweird.f32 %v641
      %vm649 = vmor %vm647, %vm648
      %v650 = vsel %vm649, %v641, %v646
      %v651 = vrsqrt.pop %v582
      %v652 = vmul.f32 %v651, %v582
      %v653 = vmul.f32 %v652, %v651
      %v654 = vmul.f32 0.5, %v653
      %v655 = vsub.f32 1.5, %v654
      %v656 = vmul.f32 %v651, %v655
      %vm657 = vweird.f32 %v582
      %vm658 = vweird.f32 %v651
      %vm659 = vmor %vm657, %vm658
      %v660 = vsel %vm659, %v651, %v656
      %v661 = vrsqrt.pop %v583
      %v662 = vmul.f32 %v661, %v583
      %v663 = vmul.f32 %v662, %v661
      %v664 = vmul.f32 0.5, %v663
      %v665 = vsub.f32 1.5, %v664
      %v666 = vmul.f32 %v661, %v665
      %vm667 = vweird.f32 %v583
      %vm668 = vweird.f32 %v661
      %vm669 = vmor %vm667, %vm668
      %v670 = vsel %vm669, %v661, %v666
      %v671 = vrsqrt.pop %v584
      %v672 = vmul.f32 %v671, %v584
      %v673 = vmul.f32 %v672, %v671
      %v674 = vmul.f32 0.5, %v673
      %v675 = vsub.f32 1.5, %v674
      %v676 = vmul.f32 %v671, %v675
      %vm677 = vweird.f32 %v584
      %vm678 = vweird.f32 %v671
      %vm679 = vmor %vm677, %vm678
      %v680 = vsel %vm679, %v671, %v676
      %v681 = vrsqrt.pop %v585
      %v682 = vmul.f32 %v681, %v585
      %v683 = vmul.f32 %v682, %v681
      %v684 = vmul.f32 0.5, %v683
      %v685 = vsub.f32 1.5, %v684
      %v686 = vmul.f32 %v681, %v685
      %vm687 = vweird.f32 %v585
      %vm688 = vweird.f32 %v681
      %vm689 = vmor %vm687, %vm688
      %v690 = vsel %vm689, %v681, %v686
      %v691 = vrsqrt.pop %v586
      %v692 = vmul.f32 %v691, %v586
      %v693 = vmul.f32 %v692, %v691
      %v694 = vmul.f32 0.5, %v693
      %v695 = vsub.f32 1.5, %v694
      %v696 = vmul.f32 %v691, %v695
      %vm697 = vweird.f32 %v586
      %vm698 = vweird.f32 %v691
      %vm699 = vmor %vm697, %vm698
      %v700 = vsel %vm699, %v691, %v696
      %v701 = vrsqrt.pop %v587
      %v702 = vmul.f32 %v701, %v587
      %v703 = vmul.f32 %v702, %v701
      %v704 = vmul.f32 0.5, %v703
      %v705 = vsub.f32 1.5, %v704
      %v706 = vmul.f32 %v701, %v705
      %vm707 = vweird.f32 %v587
      %vm708 = vweird.f32 %v701
      %vm709 = vmor %vm707, %vm708
      %v710 = vsel %vm709, %v701, %v706
      %v711 = vrsqrt.pop %v588
      %v712 = vmul.f32 %v711, %v588
      %v713 = vmul.f32 %v712, %v711
      %v714 = vmul.f32 0.5, %v713
      %v715 = vsub.f32 1.5, %v714
      %v716 = vmul.f32 %v711, %v715
      %vm717 = vweird.f32 %v588
      %vm718 = vweird.f32 %v711
      %vm719 = vmor %vm717, %vm718
      %v720 = vsel %vm719, %v711, %v716
      %v721 = vrsqrt.pop %v589
      %v722 = vmul.f32 %v721, %v589
      %v723 = vmul.f32 %v722, %v721
      %v724 = vmul.f32 0.5, %v723
      %v725 = vsub.f32 1.5, %v724
      %v726 = vmul.f32 %v721, %v725
      %vm727 = vweird.f32 %v589
      %vm728 = vweird.f32 %v721
      %vm729 = vmor %vm727, %vm728
      %v730 = vsel %vm729, %v721, %v726
      %v731 = vrsqrt.pop %v590
      %v732 = vmul.f32 %v731, %v590
      %v733 = vmul.f32 %v732, %v731
      %v734 = vmul.f32 0.5, %v733
      %v735 = vsub.f32 1.5, %v734
      %v736 = vmul.f32 %v731, %v735
      %vm737 = vweird.f32 %v590
      %vm738 = vweird.f32 %v731
      %vm739 = vmor %vm737, %vm738
      %v740 = vsel %vm739, %v731, %v736
      %v741 = vmul.f32 %v501, %v600
      %v742 = vmul.f32 %v502, %v610
      %v743 = vmul.f32 %v503, %v620
      %v744 = vmul.f32 %v504, %v630
      %v745 = vmul.f32 %v505, %v640
      %v746 = vmul.f32 %v506, %v650
      %v747 = vmul.f32 %v507, %v660
      %v748 = vmul.f32 %v508, %v670
      %v749 = vmul.f32 %v509, %v680
      %v750 = vmul.f32 %v510, %v690
      %v751 = vmul.f32 %v511, %v700
      %v752 = vmul.f32 %v512, %v710
      %v753 = vmul.f32 %v513, %v720
      %v754 = vmul.f32 %v514, %v730
      %v755 = vmul.f32 %v515, %v740
      %v756 = vld [vmem:[%s4] sm:$0x1]
      %v758 = vperm.slane %v756, 0
      %v760 = vmul.f32 %v741, %v758
      %v761 = vmul.f32 %v742, %v758
      %v762 = vmul.f32 %v743, %v758
      %v763 = vmul.f32 %v744, %v758
      %v764 = vmul.f32 %v745, %v758
      %v765 = vmul.f32 %v746, %v758
      %v766 = vmul.f32 %v747, %v758
      %v767 = vmul.f32 %v748, %v758
      %v768 = vmul.f32 %v749, %v758
      %v769 = vmul.f32 %v750, %v758
      %v770 = vmul.f32 %v751, %v758
      %v771 = vmul.f32 %v752, %v758
      %v772 = vmul.f32 %v753, %v758
      %v773 = vmul.f32 %v754, %v758
      %v774 = vmul.f32 %v755, %v758
      %v775 = vld [vmem:[%s5] sm:$0x1]
      %v777 = vperm.slane %v775, 0
      %v779 = vadd.f32 %v760, %v777
      %v780 = vadd.f32 %v761, %v777
      %v781 = vadd.f32 %v762, %v777
      %v782 = vadd.f32 %v763, %v777
      %v783 = vadd.f32 %v764, %v777
      %v784 = vadd.f32 %v765, %v777
      %v785 = vadd.f32 %v766, %v777
      %v786 = vadd.f32 %v767, %v777
      %v787 = vadd.f32 %v768, %v777
      %v788 = vadd.f32 %v769, %v777
      %v789 = vadd.f32 %v770, %v777
      %v790 = vadd.f32 %v771, %v777
      %v791 = vadd.f32 %v772, %v777
      %v792 = vadd.f32 %v773, %v777
      %v793 = vadd.f32 %v774, %v777
      %794 = vst [vmem:[%s275] sm:$0xff] %v779
      %795 = vst [vmem:[%s275 + $0x8] sm:$0xff] %v780
      %796 = vst [vmem:[%s275 + $0x10] sm:$0xff] %v781
      %797 = vst [vmem:[%s275 + $0x18] sm:$0xff] %v782
      %798 = vst [vmem:[%s275 + $0x20] sm:$0xff] %v783
      %799 = vst [vmem:[%s275 + $0x28] sm:$0xff] %v784
      %800 = vst [vmem:[%s275 + $0x30] sm:$0xff] %v785
      %801 = vst [vmem:[%s275 + $0x38] sm:$0xff] %v786
      %802 = vst [vmem:[%s275 + $0x40] sm:$0xff] %v787
      %803 = vst [vmem:[%s275 + $0x48] sm:$0xff] %v788
      %804 = vst [vmem:[%s275 + $0x50] sm:$0xff] %v789
      %805 = vst [vmem:[%s275 + $0x58] sm:$0xff] %v790
      %806 = vst [vmem:[%s275 + $0x60] sm:$0xff] %v791
      %807 = vst [vmem:[%s275 + $0x68] sm:$0xff] %v792
      %808 = vst [vmem:[%s275 + $0x70] sm:$0xff] %v793
      %s809 = smul.u32 15, %s17
      %p810 = scmp.lt.s32.totalorder %s809, 29
      %s811 = scalar_select %p810, %s809, 29
      %s812 = smul.addr %s811, 8
      %s813 = scalar_lea.vmem %s6, %s812
      // Predicated region
      $region45: #{_lambda_.19} parent=43 // pred_check
        %p814 = pneg %p171
      $region46: #{_lambda_.19} parent=43 // pred_check_branch
        %816 = sbr.rel (%p814) target = $region48
      $region47: #{_lambda_.19} parent=43 // pred_region
        %s817 = smul.u32 15, %s17
      $region48: #{_lambda_.19} parent=43 // pred_fallthru
        _
    $region44: #{_lambda_.19} parent=5 // pred_fallthru
      _
    %p818 = scmp.le.s32.totalorder 2, %s12
    // Predicated region
    $region49: #{_lambda_.19} parent=5 // pred_check
      %p819 = pneg %p818
    $region50: #{_lambda_.19} parent=5 // pred_check_branch
      %821 = sbr.rel (%p819) target = $region52
    $region51: #{_lambda_.19} parent=5 // pred_region
      %s822 = ssub.s32 %s12, 2
      // Predicated region
      $region53: #{_lambda_.19} parent=51 // pred_check
        %p823 = pneg %p177
      $region54: #{_lambda_.19} parent=51 // pred_check_branch
        %825 = sbr.rel (%p823) target = $region56
      $region55: #{_lambda_.19} parent=51 // pred_region
        %s826 = smul.u32 15, %s18
        %p827 = scmp.lt.s32.totalorder %s826, 29
        %s828 = scalar_select %p827, %s826, 29
        %s829 = smul.addr %s828, 8
        %s830 = scalar_lea.vmem %s6, %s829
      $region56: #{_lambda_.19} parent=51 // pred_fallthru
        _
    $region52: #{_lambda_.19} parent=5 // pred_fallthru
      _
  $region6: #{_lambda_.19} parent=0 // loop_footer
    %s16 = sadd.s32 1, %s12
  $region7: #{_lambda_.19} parent=0 // loop_footer_branch
    %11 = sbr.rel target = $region3
  $region8: #{_lambda_.19} parent=0 // loop_exit
    _

// kernel: _lambda_.20
$region0: #{_lambda_.20}
  #allocation0 [shape = 'u32[]', space=smem, size = 0x4, offset = 0x4, fixed_abs, tag = 'smem constant byte address 0x4 - core index']
  #allocation1 [shape = 'u32[72,128]{1,0:T(1,128)}', space=vmem, size = 0x9000, scoped, tag = 'internal scratch']
  %s0 = inlined_call_operand.vmem [shape: f32[240,128], index: 0, kind: input, shape index: {}]
  %s1 = inlined_call_operand.vmem [shape: bf16[128,256], index: 1, kind: input, shape index: {}]
  %s2 = inlined_call_operand.vmem [shape: f32[1,256], index: 2, kind: input, shape index: {}]
  %s3 = inlined_call_operand.vmem [shape: f32[240,256], index: 3, kind: output, shape index: {}]
  %s4 = sld [smem:[#allocation0]]
  $region45: #{_lambda_.20} parent=0
    _
  %s6 = ssub.s32 1, %s4
  %s7 = scalar_select 0, %s6, %s4
  loop: start=0, step=1, limit=4
  $region2: #{_lambda_.20} parent=0 // loop_pre_header
    _
  $region3: #{_lambda_.20} parent=0 // loop_header
    %s9 = sphi 0, %s13
    %p10 = scmp.ge.s32.totalorder %s9, 4
    %s19 = sphi 0, %s21
    %s22 = sphi 0, %s19
    %s23 = sphi 0, %s22
    %s39 = sphi 0, %s23
    %s43 = sphi 0, %s43
    %s45 = sphi 0, %s43
    %s46 = sphi 0, %s45
    %s60 = sphi 0, %s46
    %s64 = sphi 0, %s64
    %s66 = sphi 0, %s64
    %s67 = sphi 0, %s66
    %s81 = sphi 0, %s67
    %s87 = sphi 0, %s89
    %s90 = sphi 0, %s87
    %s91 = sphi 0, %s90
    %s107 = sphi 0, %s91
  $region4: #{_lambda_.20} parent=0 // loop_header_branch
    %12 = sbr.rel (%p10) target = $region8
  $region5: #{_lambda_.20} parent=0 // loop_body
    %s14 = ssub.s32 %s9, 1
    %s15 = ssub.s32 %s9, 2
    %s16 = sadd.s32 %s9, 1
    %s17 = ssub.s32 %s9, %s16
    %p18 = scmp.eq.s32.totalorder %s17, 0
    %s20 = sadd.s32 %s19, 1
    %s21 = scalar_select %p18, %s19, %s20
    %p24 = pneg %p18
    %p25 = scmp.eq.s32.totalorder %s9, 1
    %p26 = por %p24, %p25
    %p27 = scmp.ne.s32.totalorder %s19, %s22
    %p28 = scmp.eq.s32.totalorder %s9, 0
    %p29 = por %p27, %p28
    %p30 = scmp.ne.s32.totalorder %s19, %s22
    %p31 = scmp.eq.s32.totalorder %s14, 1
    %p32 = por %p30, %p31
    %p33 = scmp.ne.s32.totalorder %s22, %s23
    %p34 = scmp.eq.s32.totalorder %s14, 0
    %p35 = por %p33, %p34
    %p36 = scmp.ne.s32.totalorder %s22, %s23
    %p37 = scmp.eq.s32.totalorder %s15, 1
    %p38 = por %p36, %p37
    %p40 = scmp.ne.s32.totalorder %s23, %s39
    %p41 = scmp.eq.s32.totalorder %s15, 0
    %p42 = por %p40, %p41
    %s44 = sadd.s32 %s43, 1
    %p47 = scmp.eq.s32.totalorder %s9, 1
    %p48 = scmp.ne.s32.totalorder %s43, %s45
    %p49 = scmp.eq.s32.totalorder %s9, 0
    %p50 = por %p48, %p49
    %p51 = scmp.ne.s32.totalorder %s43, %s45
    %p52 = scmp.eq.s32.totalorder %s14, 1
    %p53 = por %p51, %p52
    %p54 = scmp.ne.s32.totalorder %s45, %s46
    %p55 = scmp.eq.s32.totalorder %s14, 0
    %p56 = por %p54, %p55
    %p57 = scmp.ne.s32.totalorder %s45, %s46
    %p58 = scmp.eq.s32.totalorder %s15, 1
    %p59 = por %p57, %p58
    %p61 = scmp.ne.s32.totalorder %s46, %s60
    %p62 = scmp.eq.s32.totalorder %s15, 0
    %p63 = por %p61, %p62
    %s65 = sadd.s32 %s64, 1
    %p68 = scmp.eq.s32.totalorder %s9, 1
    %p69 = scmp.ne.s32.totalorder %s64, %s66
    %p70 = scmp.eq.s32.totalorder %s9, 0
    %p71 = por %p69, %p70
    %p72 = scmp.ne.s32.totalorder %s64, %s66
    %p73 = scmp.eq.s32.totalorder %s14, 1
    %p74 = por %p72, %p73
    %p75 = scmp.ne.s32.totalorder %s66, %s67
    %p76 = scmp.eq.s32.totalorder %s14, 0
    %p77 = por %p75, %p76
    %p78 = scmp.ne.s32.totalorder %s66, %s67
    %p79 = scmp.eq.s32.totalorder %s15, 1
    %p80 = por %p78, %p79
    %p82 = scmp.ne.s32.totalorder %s67, %s81
    %p83 = scmp.eq.s32.totalorder %s15, 0
    %p84 = por %p82, %p83
    %s85 = ssub.s32 %s9, %s16
    %p86 = scmp.eq.s32.totalorder %s85, 0
    %s88 = sadd.s32 %s87, 1
    %s89 = scalar_select %p86, %s87, %s88
    %p92 = pneg %p86
    %p93 = scmp.eq.s32.totalorder %s9, 1
    %p94 = por %p92, %p93
    %p95 = scmp.ne.s32.totalorder %s87, %s90
    %p96 = scmp.eq.s32.totalorder %s9, 0
    %p97 = por %p95, %p96
    %p98 = scmp.ne.s32.totalorder %s87, %s90
    %p99 = scmp.eq.s32.totalorder %s14, 1
    %p100 = por %p98, %p99
    %p101 = scmp.ne.s32.totalorder %s90, %s91
    %p102 = scmp.eq.s32.totalorder %s14, 0
    %p103 = por %p101, %p102
    %p104 = scmp.ne.s32.totalorder %s90, %s91
    %p105 = scmp.eq.s32.totalorder %s15, 1
    %p106 = por %p104, %p105
    %p108 = scmp.ne.s32.totalorder %s91, %s107
    %p109 = scmp.eq.s32.totalorder %s15, 0
    %p110 = por %p108, %p109
    %p111 = scmp.le.s32.totalorder 1, %s9
    %p112 = scmp.lt.s32.totalorder %s9, 3
    %p113 = pnand %p111, %p112
    %p114 = pneg %p113
    // Predicated region
    $region9: #{_lambda_.20} parent=5 // pred_check
      _
    $region10: #{_lambda_.20} parent=5 // pred_check_branch
      %116 = sbr.rel (%p113) target = $region12
    $region11: #{_lambda_.20} parent=5 // pred_region
      %s117 = ssub.s32 %s9, 1
      // Predicated region
      $region13: #{_lambda_.20} parent=11 // pred_check
        %p118 = pneg %p56
      $region14: #{_lambda_.20} parent=11 // pred_check_branch
        %120 = sbr.rel (%p118) target = $region16
      $region15: #{_lambda_.20} parent=11 // pred_region
        _
      $region16: #{_lambda_.20} parent=11 // pred_fallthru
        _
      // Predicated region
      $region17: #{_lambda_.20} parent=11 // pred_check
        %p121 = pneg %p77
      $region18: #{_lambda_.20} parent=11 // pred_check_branch
        %123 = sbr.rel (%p121) target = $region20
      $region19: #{_lambda_.20} parent=11 // pred_region
        _
      $region20: #{_lambda_.20} parent=11 // pred_fallthru
        _
    $region12: #{_lambda_.20} parent=5 // pred_fallthru
      _
    %p124 = scmp.lt.s32.totalorder %s9, 2
    // Predicated region
    $region21: #{_lambda_.20} parent=5 // pred_check
      %p125 = pneg %p124
    $region22: #{_lambda_.20} parent=5 // pred_check_branch
      %127 = sbr.rel (%p125) target = $region24
    $region23: #{_lambda_.20} parent=5 // pred_region
      // Predicated region
      $region25: #{_lambda_.20} parent=23 // pred_check
        %p128 = pneg %p29
      $region26: #{_lambda_.20} parent=23 // pred_check_branch
        %130 = sbr.rel (%p128) target = $region28
      $region27: #{_lambda_.20} parent=23 // pred_region
        %s131 = smul.u32 15, %s9
        %p132 = scmp.lt.s32.totalorder %s131, 29
        %s133 = scalar_select %p132, %s131, 29
        %s134 = smul.addr %s133, 8
        %s135 = scalar_lea.vmem %s0, %s134
        %s136 = smul.u32 15, %s9
      $region28: #{_lambda_.20} parent=23 // pred_fallthru
        _
    $region24: #{_lambda_.20} parent=5 // pred_fallthru
      _
    %p137 = scmp.le.s32.totalorder 1, %s9
    %p138 = scmp.lt.s32.totalorder %s9, 3
    %p139 = pnand %p137, %p138
    %p140 = pneg %p139
    // Predicated region
    $region29: #{_lambda_.20} parent=5 // pred_check
      _
    $region30: #{_lambda_.20} parent=5 // pred_check_branch
      %142 = sbr.rel (%p139) target = $region32
    $region31: #{_lambda_.20} parent=5 // pred_region
      %s143 = ssub.s32 %s9, 1
      %s144 = smul.u32 15, %s14
      %p145 = scmp.lt.s32.totalorder %s144, 29
      %s146 = scalar_select %p145, %s144, 29
      %s147 = smul.addr %s146, 8
      %s148 = scalar_lea.vmem %s0, %s147
      %p149 = pneg %p35
      %p150 = pneg %p32
      %p151 = pneg %p56
      %p152 = pneg %p53
      %p153 = pneg %p77
      %p154 = pneg %p74
      %p155 = pneg %p103
      %p156 = pneg %p100
      %s157 = smul.u32 15, %s14
      %p158 = scmp.lt.s32.totalorder %s157, 29
      %s159 = scalar_select %p158, %s157, 29
      %s160 = smul.addr %s159, 2
      %s161 = smul.addr %s160, 8
      %s162 = scalar_lea.vmem %s3, %s161
      %s163 = smul.u32 15, %s14
      %p164 = scmp.lt.s32.totalorder %s163, 29
      %s165 = scalar_select %p164, %s163, 29
      %s166 = smul.addr %s165, 8
      %s167 = scalar_lea.vmem %s0, %s166
      %s168 = smul.u32 15, %s14
      %s169 = smul.u32 15, %s14
      %p170 = scmp.lt.s32.totalorder %s169, 29
      %s171 = scalar_select %p170, %s169, 29
      %s172 = smul.addr %s171, 2
      %s173 = smul.addr %s172, 8
      %s174 = scalar_lea.vmem %s3, %s173
      %s175 = smul.u32 15, %s14
      %v176 = vld [vmem:[%s167] sm:$0xff]
      %v177 = vld [vmem:[%s167 + $0x8] sm:$0xff]
      %v178 = vld [vmem:[%s167 + $0x10] sm:$0xff]
      %v179 = vld [vmem:[%s167 + $0x18] sm:$0xff]
      %v180 = vld [vmem:[%s167 + $0x20] sm:$0xff]
      %v181 = vld [vmem:[%s167 + $0x28] sm:$0xff]
      %v182 = vld [vmem:[%s167 + $0x30] sm:$0xff]
      %v183 = vld [vmem:[%s167 + $0x38] sm:$0xff]
      %v184 = vld [vmem:[%s167 + $0x40] sm:$0xff]
      %v185 = vld [vmem:[%s167 + $0x48] sm:$0xff]
      %v186 = vld [vmem:[%s167 + $0x50] sm:$0xff]
      %v187 = vld [vmem:[%s167 + $0x58] sm:$0xff]
      %v188 = vld [vmem:[%s167 + $0x60] sm:$0xff]
      %v189 = vld [vmem:[%s167 + $0x68] sm:$0xff]
      %v190 = vld [vmem:[%s167 + $0x70] sm:$0xff]
      %v191 = vpack.c.bf16 %v177, %v176
      %v192 = vpack.c.bf16 %v179, %v178
      %v193 = vpack.c.bf16 %v181, %v180
      %v194 = vpack.c.bf16 %v183, %v182
      %v195 = vpack.c.bf16 %v185, %v184
      %v196 = vpack.c.bf16 %v187, %v186
      %v197 = vpack.c.bf16 %v189, %v188
      %v198 = vpack.c.bf16 %v190, %v190
      %v199 = vld [vmem:[%s1] sm:$0xff]
      %v200 = vld [vmem:[%s1 + $0x8] sm:$0xff]
      %v201 = vld [vmem:[%s1 + $0x10] sm:$0xff]
      %v202 = vld [vmem:[%s1 + $0x18] sm:$0xff]
      %v203 = vld [vmem:[%s1 + $0x20] sm:$0xff]
      %v204 = vld [vmem:[%s1 + $0x28] sm:$0xff]
      %v205 = vld [vmem:[%s1 + $0x30] sm:$0xff]
      %v206 = vld [vmem:[%s1 + $0x38] sm:$0xff]
      %v207 = vld [vmem:[%s1 + $0x40] sm:$0xff]
      %v208 = vld [vmem:[%s1 + $0x48] sm:$0xff]
      %v209 = vld [vmem:[%s1 + $0x50] sm:$0xff]
      %v210 = vld [vmem:[%s1 + $0x58] sm:$0xff]
      %v211 = vld [vmem:[%s1 + $0x60] sm:$0xff]
      %v212 = vld [vmem:[%s1 + $0x68] sm:$0xff]
      %v213 = vld [vmem:[%s1 + $0x70] sm:$0xff]
      %v214 = vld [vmem:[%s1 + $0x78] sm:$0xff]
      %v215 = vld [vmem:[%s2] sm:$0x3]
      %v217 = vperm.slane %v215, 0
      %v218 = vperm.slane %v215, 1
      %v237 = vunpack.c.l.b16 %v199
      %v238 = vunpack.c.h.b16 %v199
      %v239 = vunpack.c.l.b16 %v200
      %v240 = vunpack.c.h.b16 %v200
      %v241 = vunpack.c.l.b16 %v201
      %v242 = vunpack.c.h.b16 %v201
      %v243 = vunpack.c.l.b16 %v202
      %v244 = vunpack.c.h.b16 %v202
      %v245 = vunpack.c.l.b16 %v203
      %v246 = vunpack.c.h.b16 %v203
      %v247 = vunpack.c.l.b16 %v204
      %v248 = vunpack.c.h.b16 %v204
      %v249 = vunpack.c.l.b16 %v205
      %v250 = vunpack.c.h.b16 %v205
      %v251 = vunpack.c.l.b16 %v206
      %v252 = vunpack.c.h.b16 %v206
      %v253 = vunpack.c.l.b16 %v207
      %v254 = vunpack.c.h.b16 %v207
      %v255 = vunpack.c.l.b16 %v208
      %v256 = vunpack.c.h.b16 %v208
      %v257 = vunpack.c.l.b16 %v209
      %v258 = vunpack.c.h.b16 %v209
      %v259 = vunpack.c.l.b16 %v210
      %v260 = vunpack.c.h.b16 %v210
      %v261 = vunpack.c.l.b16 %v211
      %v262 = vunpack.c.h.b16 %v211
      %v263 = vunpack.c.l.b16 %v212
      %v264 = vunpack.c.h.b16 %v212
      %v265 = vunpack.c.l.b16 %v213
      %v266 = vunpack.c.h.b16 %v213
      %v267 = vunpack.c.l.b16 %v214
      %v268 = vunpack.c.h.b16 %v214
      %v269 = vpack.c.b16 %v239, %v237
      %v270 = vpack.c.b16 %v240, %v238
      %v271 = vpack.c.b16 %v243, %v241
      %v272 = vpack.c.b16 %v244, %v242
      %v273 = vpack.c.b16 %v247, %v245
      %v274 = vpack.c.b16 %v248, %v246
      %v275 = vpack.c.b16 %v251, %v249
      %v276 = vpack.c.b16 %v252, %v250
      %v277 = vpack.c.b16 %v255, %v253
      %v278 = vpack.c.b16 %v256, %v254
      %v279 = vpack.c.b16 %v259, %v257
      %v280 = vpack.c.b16 %v260, %v258
      %v281 = vpack.c.b16 %v263, %v261
      %v282 = vpack.c.b16 %v264, %v262
      %v283 = vpack.c.b16 %v267, %v265
      %v284 = vpack.c.b16 %v268, %v266
      %301 = vmatpush.bf16.msra.mxu0 %v283
      %302 = vmatpush.bf16.msra.mxu0 %v281
      %303 = vmatpush.bf16.msra.mxu0 %v279
      %304 = vmatpush.bf16.msra.mxu0 %v277
      %305 = vmatpush.bf16.msra.mxu0 %v275
      %306 = vmatpush.bf16.msra.mxu0 %v273
      %307 = vmatpush.bf16.msra.mxu0 %v271
      %308 = vmatpush.bf16.msra.mxu0 %v269
      %309 = vmatmul.bf16.gmra.mxu0 %v191
      %v310 = vpop.f32.mrf.mxu0
      %v311 = vadd.f32 %v217, %v310
      %v312 = vpop.f32.mrf.mxu0
      %v313 = vadd.f32 %v217, %v312
      %314 = vmatmul.bf16.gmra.mxu0 %v192
      %v315 = vpop.f32.mrf.mxu0
      %v316 = vadd.f32 %v217, %v315
      %v317 = vpop.f32.mrf.mxu0
      %v318 = vadd.f32 %v217, %v317
      %319 = vmatmul.bf16.gmra.mxu0 %v193
      %v320 = vpop.f32.mrf.mxu0
      %v321 = vadd.f32 %v217, %v320
      %v322 = vpop.f32.mrf.mxu0
      %v323 = vadd.f32 %v217, %v322
      %324 = vmatmul.bf16.gmra.mxu0 %v194
      %v325 = vpop.f32.mrf.mxu0
      %v326 = vadd.f32 %v217, %v325
      %v327 = vpop.f32.mrf.mxu0
      %v328 = vadd.f32 %v217, %v327
      %329 = vmatmul.bf16.gmra.mxu0 %v195
      %v330 = vpop.f32.mrf.mxu0
      %v331 = vadd.f32 %v217, %v330
      %v332 = vpop.f32.mrf.mxu0
      %v333 = vadd.f32 %v217, %v332
      %334 = vmatmul.bf16.gmra.mxu0 %v196
      %v335 = vpop.f32.mrf.mxu0
      %v336 = vadd.f32 %v217, %v335
      %v337 = vpop.f32.mrf.mxu0
      %v338 = vadd.f32 %v217, %v337
      %339 = vmatmul.bf16.gmra.mxu0 %v197
      %v340 = vpop.f32.mrf.mxu0
      %v341 = vadd.f32 %v217, %v340
      %v342 = vpop.f32.mrf.mxu0
      %v343 = vadd.f32 %v217, %v342
      %344 = vmatmul.bf16.gmra.mxu0 %v198
      %v345 = vpop.f32.mrf.mxu0
      %v346 = vadd.f32 %v217, %v345
      %v347 = vpop.f32.mrf.mxu0
      %348 = vdwg.mxu0
      %349 = vmatpush.bf16.msra.mxu0 %v284
      %350 = vmatpush.bf16.msra.mxu0 %v282
      %351 = vmatpush.bf16.msra.mxu0 %v280
      %352 = vmatpush.bf16.msra.mxu0 %v278
      %353 = vmatpush.bf16.msra.mxu0 %v276
      %354 = vmatpush.bf16.msra.mxu0 %v274
      %355 = vmatpush.bf16.msra.mxu0 %v272
      %356 = vmatpush.bf16.msra.mxu0 %v270
      %357 = vmatmul.bf16.gmra.mxu0 %v191
      %v358 = vpop.f32.mrf.mxu0
      %v359 = vadd.f32 %v218, %v358
      %v360 = vpop.f32.mrf.mxu0
      %v361 = vadd.f32 %v218, %v360
      %362 = vmatmul.bf16.gmra.mxu0 %v192
      %v363 = vpop.f32.mrf.mxu0
      %v364 = vadd.f32 %v218, %v363
      %v365 = vpop.f32.mrf.mxu0
      %v366 = vadd.f32 %v218, %v365
      %367 = vmatmul.bf16.gmra.mxu0 %v193
      %v368 = vpop.f32.mrf.mxu0
      %v369 = vadd.f32 %v218, %v368
      %v370 = vpop.f32.mrf.mxu0
      %v371 = vadd.f32 %v218, %v370
      %372 = vmatmul.bf16.gmra.mxu0 %v194
      %v373 = vpop.f32.mrf.mxu0
      %v374 = vadd.f32 %v218, %v373
      %v375 = vpop.f32.mrf.mxu0
      %v376 = vadd.f32 %v218, %v375
      %377 = vmatmul.bf16.gmra.mxu0 %v195
      %v378 = vpop.f32.mrf.mxu0
      %v379 = vadd.f32 %v218, %v378
      %v380 = vpop.f32.mrf.mxu0
      %v381 = vadd.f32 %v218, %v380
      %382 = vmatmul.bf16.gmra.mxu0 %v196
      %v383 = vpop.f32.mrf.mxu0
      %v384 = vadd.f32 %v218, %v383
      %v385 = vpop.f32.mrf.mxu0
      %v386 = vadd.f32 %v218, %v385
      %387 = vmatmul.bf16.gmra.mxu0 %v197
      %v388 = vpop.f32.mrf.mxu0
      %v389 = vadd.f32 %v218, %v388
      %v390 = vpop.f32.mrf.mxu0
      %v391 = vadd.f32 %v218, %v390
      %392 = vmatmul.bf16.gmra.mxu0 %v198
      %v393 = vpop.f32.mrf.mxu0
      %v394 = vadd.f32 %v218, %v393
      %v395 = vpop.f32.mrf.mxu0
      %396 = vdwg.mxu0
      %397 = vst [vmem:[%s174] sm:$0xff] %v311
      %398 = vst [vmem:[%s174 + $0x8] sm:$0xff] %v359
      %399 = vst [vmem:[%s174 + $0x10] sm:$0xff] %v313
      %400 = vst [vmem:[%s174 + $0x18] sm:$0xff] %v361
      %401 = vst [vmem:[%s174 + $0x20] sm:$0xff] %v316
      %402 = vst [vmem:[%s174 + $0x28] sm:$0xff] %v364
      %403 = vst [vmem:[%s174 + $0x30] sm:$0xff] %v318
      %404 = vst [vmem:[%s174 + $0x38] sm:$0xff] %v366
      %405 = vst [vmem:[%s174 + $0x40] sm:$0xff] %v321
      %406 = vst [vmem:[%s174 + $0x48] sm:$0xff] %v369
      %407 = vst [vmem:[%s174 + $0x50] sm:$0xff] %v323
      %408 = vst [vmem:[%s174 + $0x58] sm:$0xff] %v371
      %409 = vst [vmem:[%s174 + $0x60] sm:$0xff] %v326
      %410 = vst [vmem:[%s174 + $0x68] sm:$0xff] %v374
      %411 = vst [vmem:[%s174 + $0x70] sm:$0xff] %v328
      %412 = vst [vmem:[%s174 + $0x78] sm:$0xff] %v376
      %413 = vst [vmem:[%s174 + $0x80] sm:$0xff] %v331
      %414 = vst [vmem:[%s174 + $0x88] sm:$0xff] %v379
      %415 = vst [vmem:[%s174 + $0x90] sm:$0xff] %v333
      %416 = vst [vmem:[%s174 + $0x98] sm:$0xff] %v381
      %417 = vst [vmem:[%s174 + $0xa0] sm:$0xff] %v336
      %418 = vst [vmem:[%s174 + $0xa8] sm:$0xff] %v384
      %419 = vst [vmem:[%s174 + $0xb0] sm:$0xff] %v338
      %420 = vst [vmem:[%s174 + $0xb8] sm:$0xff] %v386
      %421 = vst [vmem:[%s174 + $0xc0] sm:$0xff] %v341
      %422 = vst [vmem:[%s174 + $0xc8] sm:$0xff] %v389
      %423 = vst [vmem:[%s174 + $0xd0] sm:$0xff] %v343
      %424 = vst [vmem:[%s174 + $0xd8] sm:$0xff] %v391
      %425 = vst [vmem:[%s174 + $0xe0] sm:$0xff] %v346
      %426 = vst [vmem:[%s174 + $0xe8] sm:$0xff] %v394
      %s427 = smul.u32 15, %s14
      %p428 = scmp.lt.s32.totalorder %s427, 29
      %s429 = scalar_select %p428, %s427, 29
      %s430 = smul.addr %s429, 2
      %s431 = smul.addr %s430, 8
      %s432 = scalar_lea.vmem %s3, %s431
      // Predicated region
      $region33: #{_lambda_.20} parent=31 // pred_check
        %p433 = pneg %p100
      $region34: #{_lambda_.20} parent=31 // pred_check_branch
        %435 = sbr.rel (%p433) target = $region36
      $region35: #{_lambda_.20} parent=31 // pred_region
        %s436 = smul.u32 15, %s14
      $region36: #{_lambda_.20} parent=31 // pred_fallthru
        _
    $region32: #{_lambda_.20} parent=5 // pred_fallthru
      _
    %p437 = scmp.le.s32.totalorder 2, %s9
    // Predicated region
    $region37: #{_lambda_.20} parent=5 // pred_check
      %p438 = pneg %p437
    $region38: #{_lambda_.20} parent=5 // pred_check_branch
      %440 = sbr.rel (%p438) target = $region40
    $region39: #{_lambda_.20} parent=5 // pred_region
      %s441 = ssub.s32 %s9, 2
      // Predicated region
      $region41: #{_lambda_.20} parent=39 // pred_check
        %p442 = pneg %p106
      $region42: #{_lambda_.20} parent=39 // pred_check_branch
        %444 = sbr.rel (%p442) target = $region44
      $region43: #{_lambda_.20} parent=39 // pred_region
        %s445 = smul.u32 15, %s15
        %p446 = scmp.lt.s32.totalorder %s445, 29
        %s447 = scalar_select %p446, %s445, 29
        %s448 = smul.addr %s447, 2
        %s449 = smul.addr %s448, 8
        %s450 = scalar_lea.vmem %s3, %s449
      $region44: #{_lambda_.20} parent=39 // pred_fallthru
        _
    $region40: #{_lambda_.20} parent=5 // pred_fallthru
      _
  $region6: #{_lambda_.20} parent=0 // loop_footer
    %s13 = sadd.s32 1, %s9
  $region7: #{_lambda_.20} parent=0 // loop_footer_branch
    %8 = sbr.rel target = $region3
  $region8: #{_lambda_.20} parent=0 // loop_exit
    _

// kernel: custom-call.8
$region0: #{custom-call.8}
  %s0 = inlined_call_operand.vmem [shape: f32[8,2,30,8], index: 0, kind: output, shape index: {}]

// kernel: custom-call.1
$region0: #{custom-call.1}
  %s0 = inlined_call_operand.vmem [shape: f32[2,30,8], index: 0, kind: output, shape index: {}]

// kernel: custom-call
$region0: #{custom-call}
  %s0 = inlined_call_operand.vmem [shape: bf16[2,30,8], index: 0, kind: output, shape index: {}]

// kernel: custom-call.9
$region0: #{custom-call.9}
  %s0 = inlined_call_operand.vmem [shape: f32[15,2,16,8], index: 0, kind: output, shape index: {}]

// kernel: custom-call.3
$region0: #{custom-call.3}
  %s0 = inlined_call_operand.vmem [shape: f32[2,16,8], index: 0, kind: output, shape index: {}]

// kernel: custom-call.2
$region0: #{custom-call.2}
  %s0 = inlined_call_operand.vmem [shape: bf16[2,16,8], index: 0, kind: output, shape index: {}]

// kernel: custom-call.10
$region0: #{custom-call.10}
  %s0 = inlined_call_operand.vmem [shape: f32[8,2,30,8], index: 0, kind: output, shape index: {}]

// kernel: custom-call.11
$region0: #{custom-call.11}
  %s0 = inlined_call_operand.vmem [shape: f32[15,2,16,8], index: 0, kind: output, shape index: {}]

// kernel: _lambda_.34
$region0: #{_lambda_.34}
  #allocation0 [shape = 'u32[]', space=smem, size = 0x4, offset = 0x4, fixed_abs, tag = 'smem constant byte address 0x4 - core index']
  #allocation1 [shape = 'u32[72,128]{1,0:T(1,128)}', space=vmem, size = 0x9000, scoped, tag = 'internal scratch']
  #allocation2 [shape = 'f32[1,1]{1,0:T(1,128)S(1)}', space=vmem, size = 0x200, scoped, tag = 'scoped memory for _lambda_.34']
  %s0 = inlined_call_operand.vmem [shape: f32[240,128], index: 0, kind: input, shape index: {}]
  %s1 = inlined_call_operand.<no memory space> [shape: f32[1,1], index: 1, kind: input, shape index: {}]
  %s2 = inlined_call_operand.vmem [shape: bf16[128,256], index: 2, kind: input, shape index: {}]
  %s3 = inlined_call_operand.vmem [shape: f32[1,256], index: 3, kind: input, shape index: {}]
  %s4 = inlined_call_operand.vmem [shape: f32[240,256], index: 4, kind: output, shape index: {}]
  %s5 = sld [smem:[#allocation0]]
  $region49: #{_lambda_.34} parent=0
    _
  %s7 = ssub.s32 1, %s5
  %s8 = scalar_select 0, %s7, %s5
  %v9 = vstv %s1
  %10 = vst [vmem:[#allocation2] sm:$0x1] %v9
  loop: start=0, step=1, limit=4
  $region2: #{_lambda_.34} parent=0 // loop_pre_header
    _
  $region3: #{_lambda_.34} parent=0 // loop_header
    %s12 = sphi 0, %s16
    %p13 = scmp.ge.s32.totalorder %s12, 4
    %s22 = sphi 0, %s24
    %s25 = sphi 0, %s22
    %s26 = sphi 0, %s25
    %s42 = sphi 0, %s26
    %s46 = sphi 0, %s46
    %s48 = sphi 0, %s46
    %s49 = sphi 0, %s48
    %s63 = sphi 0, %s49
    %s67 = sphi 0, %s67
    %s69 = sphi 0, %s67
    %s70 = sphi 0, %s69
    %s84 = sphi 0, %s70
    %s88 = sphi 0, %s88
    %s90 = sphi 0, %s88
    %s91 = sphi 0, %s90
    %s105 = sphi 0, %s91
    %s111 = sphi 0, %s113
    %s114 = sphi 0, %s111
    %s115 = sphi 0, %s114
    %s131 = sphi 0, %s115
  $region4: #{_lambda_.34} parent=0 // loop_header_branch
    %15 = sbr.rel (%p13) target = $region8
  $region5: #{_lambda_.34} parent=0 // loop_body
    %s17 = ssub.s32 %s12, 1
    %s18 = ssub.s32 %s12, 2
    %s19 = sadd.s32 %s12, 1
    %s20 = ssub.s32 %s12, %s19
    %p21 = scmp.eq.s32.totalorder %s20, 0
    %s23 = sadd.s32 %s22, 1
    %s24 = scalar_select %p21, %s22, %s23
    %p27 = pneg %p21
    %p28 = scmp.eq.s32.totalorder %s12, 1
    %p29 = por %p27, %p28
    %p30 = scmp.ne.s32.totalorder %s22, %s25
    %p31 = scmp.eq.s32.totalorder %s12, 0
    %p32 = por %p30, %p31
    %p33 = scmp.ne.s32.totalorder %s22, %s25
    %p34 = scmp.eq.s32.totalorder %s17, 1
    %p35 = por %p33, %p34
    %p36 = scmp.ne.s32.totalorder %s25, %s26
    %p37 = scmp.eq.s32.totalorder %s17, 0
    %p38 = por %p36, %p37
    %p39 = scmp.ne.s32.totalorder %s25, %s26
    %p40 = scmp.eq.s32.totalorder %s18, 1
    %p41 = por %p39, %p40
    %p43 = scmp.ne.s32.totalorder %s26, %s42
    %p44 = scmp.eq.s32.totalorder %s18, 0
    %p45 = por %p43, %p44
    %s47 = sadd.s32 %s46, 1
    %p50 = scmp.eq.s32.totalorder %s12, 1
    %p51 = scmp.ne.s32.totalorder %s46, %s48
    %p52 = scmp.eq.s32.totalorder %s12, 0
    %p53 = por %p51, %p52
    %p54 = scmp.ne.s32.totalorder %s46, %s48
    %p55 = scmp.eq.s32.totalorder %s17, 1
    %p56 = por %p54, %p55
    %p57 = scmp.ne.s32.totalorder %s48, %s49
    %p58 = scmp.eq.s32.totalorder %s17, 0
    %p59 = por %p57, %p58
    %p60 = scmp.ne.s32.totalorder %s48, %s49
    %p61 = scmp.eq.s32.totalorder %s18, 1
    %p62 = por %p60, %p61
    %p64 = scmp.ne.s32.totalorder %s49, %s63
    %p65 = scmp.eq.s32.totalorder %s18, 0
    %p66 = por %p64, %p65
    %s68 = sadd.s32 %s67, 1
    %p71 = scmp.eq.s32.totalorder %s12, 1
    %p72 = scmp.ne.s32.totalorder %s67, %s69
    %p73 = scmp.eq.s32.totalorder %s12, 0
    %p74 = por %p72, %p73
    %p75 = scmp.ne.s32.totalorder %s67, %s69
    %p76 = scmp.eq.s32.totalorder %s17, 1
    %p77 = por %p75, %p76
    %p78 = scmp.ne.s32.totalorder %s69, %s70
    %p79 = scmp.eq.s32.totalorder %s17, 0
    %p80 = por %p78, %p79
    %p81 = scmp.ne.s32.totalorder %s69, %s70
    %p82 = scmp.eq.s32.totalorder %s18, 1
    %p83 = por %p81, %p82
    %p85 = scmp.ne.s32.totalorder %s70, %s84
    %p86 = scmp.eq.s32.totalorder %s18, 0
    %p87 = por %p85, %p86
    %s89 = sadd.s32 %s88, 1
    %p92 = scmp.eq.s32.totalorder %s12, 1
    %p93 = scmp.ne.s32.totalorder %s88, %s90
    %p94 = scmp.eq.s32.totalorder %s12, 0
    %p95 = por %p93, %p94
    %p96 = scmp.ne.s32.totalorder %s88, %s90
    %p97 = scmp.eq.s32.totalorder %s17, 1
    %p98 = por %p96, %p97
    %p99 = scmp.ne.s32.totalorder %s90, %s91
    %p100 = scmp.eq.s32.totalorder %s17, 0
    %p101 = por %p99, %p100
    %p102 = scmp.ne.s32.totalorder %s90, %s91
    %p103 = scmp.eq.s32.totalorder %s18, 1
    %p104 = por %p102, %p103
    %p106 = scmp.ne.s32.totalorder %s91, %s105
    %p107 = scmp.eq.s32.totalorder %s18, 0
    %p108 = por %p106, %p107
    %s109 = ssub.s32 %s12, %s19
    %p110 = scmp.eq.s32.totalorder %s109, 0
    %s112 = sadd.s32 %s111, 1
    %s113 = scalar_select %p110, %s111, %s112
    %p116 = pneg %p110
    %p117 = scmp.eq.s32.totalorder %s12, 1
    %p118 = por %p116, %p117
    %p119 = scmp.ne.s32.totalorder %s111, %s114
    %p120 = scmp.eq.s32.totalorder %s12, 0
    %p121 = por %p119, %p120
    %p122 = scmp.ne.s32.totalorder %s111, %s114
    %p123 = scmp.eq.s32.totalorder %s17, 1
    %p124 = por %p122, %p123
    %p125 = scmp.ne.s32.totalorder %s114, %s115
    %p126 = scmp.eq.s32.totalorder %s17, 0
    %p127 = por %p125, %p126
    %p128 = scmp.ne.s32.totalorder %s114, %s115
    %p129 = scmp.eq.s32.totalorder %s18, 1
    %p130 = por %p128, %p129
    %p132 = scmp.ne.s32.totalorder %s115, %s131
    %p133 = scmp.eq.s32.totalorder %s18, 0
    %p134 = por %p132, %p133
    %p135 = scmp.le.s32.totalorder 1, %s12
    %p136 = scmp.lt.s32.totalorder %s12, 3
    %p137 = pnand %p135, %p136
    %p138 = pneg %p137
    // Predicated region
    $region9: #{_lambda_.34} parent=5 // pred_check
      _
    $region10: #{_lambda_.34} parent=5 // pred_check_branch
      %140 = sbr.rel (%p137) target = $region12
    $region11: #{_lambda_.34} parent=5 // pred_region
      %s141 = ssub.s32 %s12, 1
      // Predicated region
      $region13: #{_lambda_.34} parent=11 // pred_check
        %p142 = pneg %p59
      $region14: #{_lambda_.34} parent=11 // pred_check_branch
        %144 = sbr.rel (%p142) target = $region16
      $region15: #{_lambda_.34} parent=11 // pred_region
        _
      $region16: #{_lambda_.34} parent=11 // pred_fallthru
        _
      // Predicated region
      $region17: #{_lambda_.34} parent=11 // pred_check
        %p145 = pneg %p80
      $region18: #{_lambda_.34} parent=11 // pred_check_branch
        %147 = sbr.rel (%p145) target = $region20
      $region19: #{_lambda_.34} parent=11 // pred_region
        _
      $region20: #{_lambda_.34} parent=11 // pred_fallthru
        _
      // Predicated region
      $region21: #{_lambda_.34} parent=11 // pred_check
        %p148 = pneg %p101
      $region22: #{_lambda_.34} parent=11 // pred_check_branch
        %150 = sbr.rel (%p148) target = $region24
      $region23: #{_lambda_.34} parent=11 // pred_region
        _
      $region24: #{_lambda_.34} parent=11 // pred_fallthru
        _
    $region12: #{_lambda_.34} parent=5 // pred_fallthru
      _
    %p151 = scmp.lt.s32.totalorder %s12, 2
    // Predicated region
    $region25: #{_lambda_.34} parent=5 // pred_check
      %p152 = pneg %p151
    $region26: #{_lambda_.34} parent=5 // pred_check_branch
      %154 = sbr.rel (%p152) target = $region28
    $region27: #{_lambda_.34} parent=5 // pred_region
      // Predicated region
      $region29: #{_lambda_.34} parent=27 // pred_check
        %p155 = pneg %p32
      $region30: #{_lambda_.34} parent=27 // pred_check_branch
        %157 = sbr.rel (%p155) target = $region32
      $region31: #{_lambda_.34} parent=27 // pred_region
        %s158 = smul.u32 15, %s12
        %p159 = scmp.lt.s32.totalorder %s158, 29
        %s160 = scalar_select %p159, %s158, 29
        %s161 = smul.addr %s160, 8
        %s162 = scalar_lea.vmem %s0, %s161
        %s163 = smul.u32 15, %s12
      $region32: #{_lambda_.34} parent=27 // pred_fallthru
        _
    $region28: #{_lambda_.34} parent=5 // pred_fallthru
      _
    %p164 = scmp.le.s32.totalorder 1, %s12
    %p165 = scmp.lt.s32.totalorder %s12, 3
    %p166 = pnand %p164, %p165
    %p167 = pneg %p166
    // Predicated region
    $region33: #{_lambda_.34} parent=5 // pred_check
      _
    $region34: #{_lambda_.34} parent=5 // pred_check_branch
      %169 = sbr.rel (%p166) target = $region36
    $region35: #{_lambda_.34} parent=5 // pred_region
      %s170 = ssub.s32 %s12, 1
      %s171 = smul.u32 15, %s17
      %p172 = scmp.lt.s32.totalorder %s171, 29
      %s173 = scalar_select %p172, %s171, 29
      %s174 = smul.addr %s173, 8
      %s175 = scalar_lea.vmem %s0, %s174
      %p176 = pneg %p38
      %p177 = pneg %p35
      %p178 = pneg %p59
      %p179 = pneg %p56
      %p180 = pneg %p80
      %p181 = pneg %p77
      %p182 = pneg %p101
      %p183 = pneg %p98
      %p184 = pneg %p127
      %p185 = pneg %p124
      %s186 = smul.u32 15, %s17
      %p187 = scmp.lt.s32.totalorder %s186, 29
      %s188 = scalar_select %p187, %s186, 29
      %s189 = smul.addr %s188, 2
      %s190 = smul.addr %s189, 8
      %s191 = scalar_lea.vmem %s4, %s190
      %s192 = smul.u32 15, %s17
      %p193 = scmp.lt.s32.totalorder %s192, 29
      %s194 = scalar_select %p193, %s192, 29
      %s195 = smul.addr %s194, 8
      %s196 = scalar_lea.vmem %s0, %s195
      %s197 = smul.u32 15, %s17
      %s198 = smul.u32 15, %s17
      %p199 = scmp.lt.s32.totalorder %s198, 29
      %s200 = scalar_select %p199, %s198, 29
      %s201 = smul.addr %s200, 2
      %s202 = smul.addr %s201, 8
      %s203 = scalar_lea.vmem %s4, %s202
      %s204 = smul.u32 15, %s17
      %v205 = vld [vmem:[%s196] sm:$0xff]
      %v206 = vld [vmem:[%s196 + $0x8] sm:$0xff]
      %v207 = vld [vmem:[%s196 + $0x10] sm:$0xff]
      %v208 = vld [vmem:[%s196 + $0x18] sm:$0xff]
      %v209 = vld [vmem:[%s196 + $0x20] sm:$0xff]
      %v210 = vld [vmem:[%s196 + $0x28] sm:$0xff]
      %v211 = vld [vmem:[%s196 + $0x30] sm:$0xff]
      %v212 = vld [vmem:[%s196 + $0x38] sm:$0xff]
      %v213 = vld [vmem:[%s196 + $0x40] sm:$0xff]
      %v214 = vld [vmem:[%s196 + $0x48] sm:$0xff]
      %v215 = vld [vmem:[%s196 + $0x50] sm:$0xff]
      %v216 = vld [vmem:[%s196 + $0x58] sm:$0xff]
      %v217 = vld [vmem:[%s196 + $0x60] sm:$0xff]
      %v218 = vld [vmem:[%s196 + $0x68] sm:$0xff]
      %v219 = vld [vmem:[%s196 + $0x70] sm:$0xff]
      %v220 = vmax.f32 %v205, 0.0
      %v221 = vmax.f32 %v206, 0.0
      %v222 = vmax.f32 %v207, 0.0
      %v223 = vmax.f32 %v208, 0.0
      %v224 = vmax.f32 %v209, 0.0
      %v225 = vmax.f32 %v210, 0.0
      %v226 = vmax.f32 %v211, 0.0
      %v227 = vmax.f32 %v212, 0.0
      %v228 = vmax.f32 %v213, 0.0
      %v229 = vmax.f32 %v214, 0.0
      %v230 = vmax.f32 %v215, 0.0
      %v231 = vmax.f32 %v216, 0.0
      %v232 = vmax.f32 %v217, 0.0
      %v233 = vmax.f32 %v218, 0.0
      %v234 = vmax.f32 %v219, 0.0
      %v235 = vld [vmem:[#allocation2] sm:$0x1]
      %s236 = vtos %v235
      %v237 = vmin.f32 %v205, 0.0
      %v238 = vmin.f32 %v206, 0.0
      %v239 = vmin.f32 %v207, 0.0
      %v240 = vmin.f32 %v208, 0.0
      %v241 = vmin.f32 %v209, 0.0
      %v242 = vmin.f32 %v210, 0.0
      %v243 = vmin.f32 %v211, 0.0
      %v244 = vmin.f32 %v212, 0.0
      %v245 = vmin.f32 %v213, 0.0
      %v246 = vmin.f32 %v214, 0.0
      %v247 = vmin.f32 %v215, 0.0
      %v248 = vmin.f32 %v216, 0.0
      %v249 = vmin.f32 %v217, 0.0
      %v250 = vmin.f32 %v218, 0.0
      %v251 = vmin.f32 %v219, 0.0
      %v252 = vstv %s236
      %v253 = vmul.f32 %v252, %v237
      %v254 = vmul.f32 %v252, %v238
      %v255 = vmul.f32 %v252, %v239
      %v256 = vmul.f32 %v252, %v240
      %v257 = vmul.f32 %v252, %v241
      %v258 = vmul.f32 %v252, %v242
      %v259 = vmul.f32 %v252, %v243
      %v260 = vmul.f32 %v252, %v244
      %v261 = vmul.f32 %v252, %v245
      %v262 = vmul.f32 %v252, %v246
      %v263 = vmul.f32 %v252, %v247
      %v264 = vmul.f32 %v252, %v248
      %v265 = vmul.f32 %v252, %v249
      %v266 = vmul.f32 %v252, %v250
      %v267 = vmul.f32 %v252, %v251
      %v268 = vadd.f32 %v220, %v253
      %v269 = vadd.f32 %v221, %v254
      %v270 = vadd.f32 %v222, %v255
      %v271 = vadd.f32 %v223, %v256
      %v272 = vadd.f32 %v224, %v257
      %v273 = vadd.f32 %v225, %v258
      %v274 = vadd.f32 %v226, %v259
      %v275 = vadd.f32 %v227, %v260
      %v276 = vadd.f32 %v228, %v261
      %v277 = vadd.f32 %v229, %v262
      %v278 = vadd.f32 %v230, %v263
      %v279 = vadd.f32 %v231, %v264
      %v280 = vadd.f32 %v232, %v265
      %v281 = vadd.f32 %v233, %v266
      %v282 = vadd.f32 %v234, %v267
      %v283 = vpack.c.bf16 %v269, %v268
      %v284 = vpack.c.bf16 %v271, %v270
      %v285 = vpack.c.bf16 %v273, %v272
      %v286 = vpack.c.bf16 %v275, %v274
      %v287 = vpack.c.bf16 %v277, %v276
      %v288 = vpack.c.bf16 %v279, %v278
      %v289 = vpack.c.bf16 %v281, %v280
      %v290 = vpack.c.bf16 %v282, %v282
      %v291 = vld [vmem:[%s2] sm:$0xff]
      %v292 = vld [vmem:[%s2 + $0x8] sm:$0xff]
      %v293 = vld [vmem:[%s2 + $0x10] sm:$0xff]
      %v294 = vld [vmem:[%s2 + $0x18] sm:$0xff]
      %v295 = vld [vmem:[%s2 + $0x20] sm:$0xff]
      %v296 = vld [vmem:[%s2 + $0x28] sm:$0xff]
      %v297 = vld [vmem:[%s2 + $0x30] sm:$0xff]
      %v298 = vld [vmem:[%s2 + $0x38] sm:$0xff]
      %v299 = vld [vmem:[%s2 + $0x40] sm:$0xff]
      %v300 = vld [vmem:[%s2 + $0x48] sm:$0xff]
      %v301 = vld [vmem:[%s2 + $0x50] sm:$0xff]
      %v302 = vld [vmem:[%s2 + $0x58] sm:$0xff]
      %v303 = vld [vmem:[%s2 + $0x60] sm:$0xff]
      %v304 = vld [vmem:[%s2 + $0x68] sm:$0xff]
      %v305 = vld [vmem:[%s2 + $0x70] sm:$0xff]
      %v306 = vld [vmem:[%s2 + $0x78] sm:$0xff]
      %v307 = vld [vmem:[%s3] sm:$0x3]
      %v309 = vperm.slane %v307, 0
      %v310 = vperm.slane %v307, 1
      %v329 = vunpack.c.l.b16 %v291
      %v330 = vunpack.c.h.b16 %v291
      %v331 = vunpack.c.l.b16 %v292
      %v332 = vunpack.c.h.b16 %v292
      %v333 = vunpack.c.l.b16 %v293
      %v334 = vunpack.c.h.b16 %v293
      %v335 = vunpack.c.l.b16 %v294
      %v336 = vunpack.c.h.b16 %v294
      %v337 = vunpack.c.l.b16 %v295
      %v338 = vunpack.c.h.b16 %v295
      %v339 = vunpack.c.l.b16 %v296
      %v340 = vunpack.c.h.b16 %v296
      %v341 = vunpack.c.l.b16 %v297
      %v342 = vunpack.c.h.b16 %v297
      %v343 = vunpack.c.l.b16 %v298
      %v344 = vunpack.c.h.b16 %v298
      %v345 = vunpack.c.l.b16 %v299
      %v346 = vunpack.c.h.b16 %v299
      %v347 = vunpack.c.l.b16 %v300
      %v348 = vunpack.c.h.b16 %v300
      %v349 = vunpack.c.l.b16 %v301
      %v350 = vunpack.c.h.b16 %v301
      %v351 = vunpack.c.l.b16 %v302
      %v352 = vunpack.c.h.b16 %v302
      %v353 = vunpack.c.l.b16 %v303
      %v354 = vunpack.c.h.b16 %v303
      %v355 = vunpack.c.l.b16 %v304
      %v356 = vunpack.c.h.b16 %v304
      %v357 = vunpack.c.l.b16 %v305
      %v358 = vunpack.c.h.b16 %v305
      %v359 = vunpack.c.l.b16 %v306
      %v360 = vunpack.c.h.b16 %v306
      %v361 = vpack.c.b16 %v331, %v329
      %v362 = vpack.c.b16 %v332, %v330
      %v363 = vpack.c.b16 %v335, %v333
      %v364 = vpack.c.b16 %v336, %v334
      %v365 = vpack.c.b16 %v339, %v337
      %v366 = vpack.c.b16 %v340, %v338
      %v367 = vpack.c.b16 %v343, %v341
      %v368 = vpack.c.b16 %v344, %v342
      %v369 = vpack.c.b16 %v347, %v345
      %v370 = vpack.c.b16 %v348, %v346
      %v371 = vpack.c.b16 %v351, %v349
      %v372 = vpack.c.b16 %v352, %v350
      %v373 = vpack.c.b16 %v355, %v353
      %v374 = vpack.c.b16 %v356, %v354
      %v375 = vpack.c.b16 %v359, %v357
      %v376 = vpack.c.b16 %v360, %v358
      %393 = vmatpush.bf16.msra.mxu0 %v375
      %394 = vmatpush.bf16.msra.mxu0 %v373
      %395 = vmatpush.bf16.msra.mxu0 %v371
      %396 = vmatpush.bf16.msra.mxu0 %v369
      %397 = vmatpush.bf16.msra.mxu0 %v367
      %398 = vmatpush.bf16.msra.mxu0 %v365
      %399 = vmatpush.bf16.msra.mxu0 %v363
      %400 = vmatpush.bf16.msra.mxu0 %v361
      %401 = vmatmul.bf16.gmra.mxu0 %v283
      %v402 = vpop.f32.mrf.mxu0
      %v403 = vadd.f32 %v309, %v402
      %v404 = vpop.f32.mrf.mxu0
      %v405 = vadd.f32 %v309, %v404
      %406 = vmatmul.bf16.gmra.mxu0 %v284
      %v407 = vpop.f32.mrf.mxu0
      %v408 = vadd.f32 %v309, %v407
      %v409 = vpop.f32.mrf.mxu0
      %v410 = vadd.f32 %v309, %v409
      %411 = vmatmul.bf16.gmra.mxu0 %v285
      %v412 = vpop.f32.mrf.mxu0
      %v413 = vadd.f32 %v309, %v412
      %v414 = vpop.f32.mrf.mxu0
      %v415 = vadd.f32 %v309, %v414
      %416 = vmatmul.bf16.gmra.mxu0 %v286
      %v417 = vpop.f32.mrf.mxu0
      %v418 = vadd.f32 %v309, %v417
      %v419 = vpop.f32.mrf.mxu0
      %v420 = vadd.f32 %v309, %v419
      %421 = vmatmul.bf16.gmra.mxu0 %v287
      %v422 = vpop.f32.mrf.mxu0
      %v423 = vadd.f32 %v309, %v422
      %v424 = vpop.f32.mrf.mxu0
      %v425 = vadd.f32 %v309, %v424
      %426 = vmatmul.bf16.gmra.mxu0 %v288
      %v427 = vpop.f32.mrf.mxu0
      %v428 = vadd.f32 %v309, %v427
      %v429 = vpop.f32.mrf.mxu0
      %v430 = vadd.f32 %v309, %v429
      %431 = vmatmul.bf16.gmra.mxu0 %v289
      %v432 = vpop.f32.mrf.mxu0
      %v433 = vadd.f32 %v309, %v432
      %v434 = vpop.f32.mrf.mxu0
      %v435 = vadd.f32 %v309, %v434
      %436 = vmatmul.bf16.gmra.mxu0 %v290
      %v437 = vpop.f32.mrf.mxu0
      %v438 = vadd.f32 %v309, %v437
      %v439 = vpop.f32.mrf.mxu0
      %440 = vdwg.mxu0
      %441 = vmatpush.bf16.msra.mxu0 %v376
      %442 = vmatpush.bf16.msra.mxu0 %v374
      %443 = vmatpush.bf16.msra.mxu0 %v372
      %444 = vmatpush.bf16.msra.mxu0 %v370
      %445 = vmatpush.bf16.msra.mxu0 %v368
      %446 = vmatpush.bf16.msra.mxu0 %v366
      %447 = vmatpush.bf16.msra.mxu0 %v364
      %448 = vmatpush.bf16.msra.mxu0 %v362
      %449 = vmatmul.bf16.gmra.mxu0 %v283
      %v450 = vpop.f32.mrf.mxu0
      %v451 = vadd.f32 %v310, %v450
      %v452 = vpop.f32.mrf.mxu0
      %v453 = vadd.f32 %v310, %v452
      %454 = vmatmul.bf16.gmra.mxu0 %v284
      %v455 = vpop.f32.mrf.mxu0
      %v456 = vadd.f32 %v310, %v455
      %v457 = vpop.f32.mrf.mxu0
      %v458 = vadd.f32 %v310, %v457
      %459 = vmatmul.bf16.gmra.mxu0 %v285
      %v460 = vpop.f32.mrf.mxu0
      %v461 = vadd.f32 %v310, %v460
      %v462 = vpop.f32.mrf.mxu0
      %v463 = vadd.f32 %v310, %v462
      %464 = vmatmul.bf16.gmra.mxu0 %v286
      %v465 = vpop.f32.mrf.mxu0
      %v466 = vadd.f32 %v310, %v465
      %v467 = vpop.f32.mrf.mxu0
      %v468 = vadd.f32 %v310, %v467
      %469 = vmatmul.bf16.gmra.mxu0 %v287
      %v470 = vpop.f32.mrf.mxu0
      %v471 = vadd.f32 %v310, %v470
      %v472 = vpop.f32.mrf.mxu0
      %v473 = vadd.f32 %v310, %v472
      %474 = vmatmul.bf16.gmra.mxu0 %v288
      %v475 = vpop.f32.mrf.mxu0
      %v476 = vadd.f32 %v310, %v475
      %v477 = vpop.f32.mrf.mxu0
      %v478 = vadd.f32 %v310, %v477
      %479 = vmatmul.bf16.gmra.mxu0 %v289
      %v480 = vpop.f32.mrf.mxu0
      %v481 = vadd.f32 %v310, %v480
      %v482 = vpop.f32.mrf.mxu0
      %v483 = vadd.f32 %v310, %v482
      %484 = vmatmul.bf16.gmra.mxu0 %v290
      %v485 = vpop.f32.mrf.mxu0
      %v486 = vadd.f32 %v310, %v485
      %v487 = vpop.f32.mrf.mxu0
      %488 = vdwg.mxu0
      %489 = vst [vmem:[%s203] sm:$0xff] %v403
      %490 = vst [vmem:[%s203 + $0x8] sm:$0xff] %v451
      %491 = vst [vmem:[%s203 + $0x10] sm:$0xff] %v405
      %492 = vst [vmem:[%s203 + $0x18] sm:$0xff] %v453
      %493 = vst [vmem:[%s203 + $0x20] sm:$0xff] %v408
      %494 = vst [vmem:[%s203 + $0x28] sm:$0xff] %v456
      %495 = vst [vmem:[%s203 + $0x30] sm:$0xff] %v410
      %496 = vst [vmem:[%s203 + $0x38] sm:$0xff] %v458
      %497 = vst [vmem:[%s203 + $0x40] sm:$0xff] %v413
      %498 = vst [vmem:[%s203 + $0x48] sm:$0xff] %v461
      %499 = vst [vmem:[%s203 + $0x50] sm:$0xff] %v415
      %500 = vst [vmem:[%s203 + $0x58] sm:$0xff] %v463
      %501 = vst [vmem:[%s203 + $0x60] sm:$0xff] %v418
      %502 = vst [vmem:[%s203 + $0x68] sm:$0xff] %v466
      %503 = vst [vmem:[%s203 + $0x70] sm:$0xff] %v420
      %504 = vst [vmem:[%s203 + $0x78] sm:$0xff] %v468
      %505 = vst [vmem:[%s203 + $0x80] sm:$0xff] %v423
      %506 = vst [vmem:[%s203 + $0x88] sm:$0xff] %v471
      %507 = vst [vmem:[%s203 + $0x90] sm:$0xff] %v425
      %508 = vst [vmem:[%s203 + $0x98] sm:$0xff] %v473
      %509 = vst [vmem:[%s203 + $0xa0] sm:$0xff] %v428
      %510 = vst [vmem:[%s203 + $0xa8] sm:$0xff] %v476
      %511 = vst [vmem:[%s203 + $0xb0] sm:$0xff] %v430
      %512 = vst [vmem:[%s203 + $0xb8] sm:$0xff] %v478
      %513 = vst [vmem:[%s203 + $0xc0] sm:$0xff] %v433
      %514 = vst [vmem:[%s203 + $0xc8] sm:$0xff] %v481
      %515 = vst [vmem:[%s203 + $0xd0] sm:$0xff] %v435
      %516 = vst [vmem:[%s203 + $0xd8] sm:$0xff] %v483
      %517 = vst [vmem:[%s203 + $0xe0] sm:$0xff] %v438
      %518 = vst [vmem:[%s203 + $0xe8] sm:$0xff] %v486
      %s519 = smul.u32 15, %s17
      %p520 = scmp.lt.s32.totalorder %s519, 29
      %s521 = scalar_select %p520, %s519, 29
      %s522 = smul.addr %s521, 2
      %s523 = smul.addr %s522, 8
      %s524 = scalar_lea.vmem %s4, %s523
      // Predicated region
      $region37: #{_lambda_.34} parent=35 // pred_check
        %p525 = pneg %p124
      $region38: #{_lambda_.34} parent=35 // pred_check_branch
        %527 = sbr.rel (%p525) target = $region40
      $region39: #{_lambda_.34} parent=35 // pred_region
        %s528 = smul.u32 15, %s17
      $region40: #{_lambda_.34} parent=35 // pred_fallthru
        _
    $region36: #{_lambda_.34} parent=5 // pred_fallthru
      _
    %p529 = scmp.le.s32.totalorder 2, %s12
    // Predicated region
    $region41: #{_lambda_.34} parent=5 // pred_check
      %p530 = pneg %p529
    $region42: #{_lambda_.34} parent=5 // pred_check_branch
      %532 = sbr.rel (%p530) target = $region44
    $region43: #{_lambda_.34} parent=5 // pred_region
      %s533 = ssub.s32 %s12, 2
      // Predicated region
      $region45: #{_lambda_.34} parent=43 // pred_check
        %p534 = pneg %p130
      $region46: #{_lambda_.34} parent=43 // pred_check_branch
        %536 = sbr.rel (%p534) target = $region48
      $region47: #{_lambda_.34} parent=43 // pred_region
        %s537 = smul.u32 15, %s18
        %p538 = scmp.lt.s32.totalorder %s537, 29
        %s539 = scalar_select %p538, %s537, 29
        %s540 = smul.addr %s539, 2
        %s541 = smul.addr %s540, 8
        %s542 = scalar_lea.vmem %s4, %s541
      $region48: #{_lambda_.34} parent=43 // pred_fallthru
        _
    $region44: #{_lambda_.34} parent=5 // pred_fallthru
      _
  $region6: #{_lambda_.34} parent=0 // loop_footer
    %s16 = sadd.s32 1, %s12
  $region7: #{_lambda_.34} parent=0 // loop_footer_branch
    %11 = sbr.rel target = $region3
  $region8: #{_lambda_.34} parent=0 // loop_exit
    _

// kernel: _lambda_.35
$region0: #{_lambda_.35}
  #allocation0 [shape = 'u32[]', space=smem, size = 0x4, offset = 0x4, fixed_abs, tag = 'smem constant byte address 0x4 - core index']
  #allocation1 [shape = 'u32[72,128]{1,0:T(1,128)}', space=vmem, size = 0x9000, scoped, tag = 'internal scratch']
  %s0 = inlined_call_operand.vmem [shape: f32[126,256], index: 0, kind: input, shape index: {}]
  %s1 = inlined_call_operand.vmem [shape: bf16[128,256], index: 1, kind: input, shape index: {}]
  %s2 = inlined_call_operand.vmem [shape: f32[1,256], index: 2, kind: input, shape index: {}]
  %s3 = inlined_call_operand.vmem [shape: f32[126,128], index: 3, kind: input, shape index: {}]
  %s4 = inlined_call_operand.vmem [shape: bf16[128,2], index: 4, kind: input, shape index: {}]
  %s5 = inlined_call_operand.vmem [shape: f32[2,126,2], index: 5, kind: output, shape index: {}]
  %s6 = sld [smem:[#allocation0]]
  $region91: #{_lambda_.35} parent=0
    _
  %s8 = ssub.s32 1, %s6
  %s9 = scalar_select 0, %s8, %s6
  $region1: #{_lambda_.35} parent=0
    #allocation2 [shape = 'u8[65536]{0}', space=vmem, size = 0x10000, scoped, tag = 'input window, operand 0']
    loop: start=0, step=1, limit=6
    $region2: #{_lambda_.35} parent=1 // loop_pre_header
      _
    $region3: #{_lambda_.35} parent=1 // loop_header
      %s11 = sphi 0, %s15
      %p12 = scmp.ge.s32.totalorder %s11, 6
      %s18 = sphi 0, %s30
      %s19 = sphi 0, %s26
      %s20 = sphi 0, %s18
      %s21 = sphi 0, %s19
      %s22 = sphi 0, %s20
      %s23 = sphi 0, %s21
      %s35 = sphi 0, %s37
      %s38 = sphi 0, %s35
      %s39 = sphi 0, %s38
      %s55 = sphi 0, %s39
      %s59 = sphi 0, %s59
      %s61 = sphi 0, %s59
      %s62 = sphi 0, %s61
      %s76 = sphi 0, %s62
      %s80 = sphi 0, %s80
      %s82 = sphi 0, %s80
      %s83 = sphi 0, %s82
      %s97 = sphi 0, %s83
      %s103 = sphi 0, %s105
      %s106 = sphi 0, %s103
      %s107 = sphi 0, %s106
      %s123 = sphi 0, %s107
      %s127 = sphi 0, %s127
      %s129 = sphi 0, %s127
      %s130 = sphi 0, %s129
      %s144 = sphi 0, %s130
      %s152 = sphi 0, %s154
      %s155 = sphi 0, %s152
      %s156 = sphi 0, %s155
      %s172 = sphi 0, %s156
    $region4: #{_lambda_.35} parent=1 // loop_header_branch
      %14 = sbr.rel (%p12) target = $region8
    $region5: #{_lambda_.35} parent=1 // loop_body
      %s16 = ssub.s32 %s11, 1
      %s17 = ssub.s32 %s11, 2
      %s24 = sadd.s32 1, %s19
      %p25 = scmp.ge.s32.totalorder %s24, 2
      %s26 = scalar_select %p25, 0, %s24
      %s27 = sadd.s32 1, %s18
      %s28 = scalar_select %p25, %s27, %s18
      %p29 = scmp.ge.s32.totalorder %s28, 2
      %s30 = scalar_select %p29, 0, %s28
      %s31 = ssub.s32 %s18, %s30
      %s32 = ssub.s32 %s19, %s26
      %s33 = sor.u32 %s31, %s32
      %p34 = scmp.eq.s32.totalorder %s33, 0
      %s36 = sadd.s32 %s35, 1
      %s37 = scalar_select %p34, %s35, %s36
      %p40 = pneg %p34
      %p41 = scmp.eq.s32.totalorder %s11, 3
      %p42 = por %p40, %p41
      %p43 = scmp.ne.s32.totalorder %s35, %s38
      %p44 = scmp.eq.s32.totalorder %s11, 0
      %p45 = por %p43, %p44
      %p46 = scmp.ne.s32.totalorder %s35, %s38
      %p47 = scmp.eq.s32.totalorder %s16, 3
      %p48 = por %p46, %p47
      %p49 = scmp.ne.s32.totalorder %s38, %s39
      %p50 = scmp.eq.s32.totalorder %s16, 0
      %p51 = por %p49, %p50
      %p52 = scmp.ne.s32.totalorder %s38, %s39
      %p53 = scmp.eq.s32.totalorder %s17, 3
      %p54 = por %p52, %p53
      %p56 = scmp.ne.s32.totalorder %s39, %s55
      %p57 = scmp.eq.s32.totalorder %s17, 0
      %p58 = por %p56, %p57
      %s60 = sadd.s32 %s59, 1
      %p63 = scmp.eq.s32.totalorder %s11, 3
      %p64 = scmp.ne.s32.totalorder %s59, %s61
      %p65 = scmp.eq.s32.totalorder %s11, 0
      %p66 = por %p64, %p65
      %p67 = scmp.ne.s32.totalorder %s59, %s61
      %p68 = scmp.eq.s32.totalorder %s16, 3
      %p69 = por %p67, %p68
      %p70 = scmp.ne.s32.totalorder %s61, %s62
      %p71 = scmp.eq.s32.totalorder %s16, 0
      %p72 = por %p70, %p71
      %p73 = scmp.ne.s32.totalorder %s61, %s62
      %p74 = scmp.eq.s32.totalorder %s17, 3
      %p75 = por %p73, %p74
      %p77 = scmp.ne.s32.totalorder %s62, %s76
      %p78 = scmp.eq.s32.totalorder %s17, 0
      %p79 = por %p77, %p78
      %s81 = sadd.s32 %s80, 1
      %p84 = scmp.eq.s32.totalorder %s11, 3
      %p85 = scmp.ne.s32.totalorder %s80, %s82
      %p86 = scmp.eq.s32.totalorder %s11, 0
      %p87 = por %p85, %p86
      %p88 = scmp.ne.s32.totalorder %s80, %s82
      %p89 = scmp.eq.s32.totalorder %s16, 3
      %p90 = por %p88, %p89
      %p91 = scmp.ne.s32.totalorder %s82, %s83
      %p92 = scmp.eq.s32.totalorder %s16, 0
      %p93 = por %p91, %p92
      %p94 = scmp.ne.s32.totalorder %s82, %s83
      %p95 = scmp.eq.s32.totalorder %s17, 3
      %p96 = por %p94, %p95
      %p98 = scmp.ne.s32.totalorder %s83, %s97
      %p99 = scmp.eq.s32.totalorder %s17, 0
      %p100 = por %p98, %p99
      %s101 = ssub.s32 %s18, %s30
      %p102 = scmp.eq.s32.totalorder %s101, 0
      %s104 = sadd.s32 %s103, 1
      %s105 = scalar_select %p102, %s103, %s104
      %p108 = pneg %p102
      %p109 = scmp.eq.s32.totalorder %s11, 3
      %p110 = por %p108, %p109
      %p111 = scmp.ne.s32.totalorder %s103, %s106
      %p112 = scmp.eq.s32.totalorder %s11, 0
      %p113 = por %p111, %p112
      %p114 = scmp.ne.s32.totalorder %s103, %s106
      %p115 = scmp.eq.s32.totalorder %s16, 3
      %p116 = por %p114, %p115
      %p117 = scmp.ne.s32.totalorder %s106, %s107
      %p118 = scmp.eq.s32.totalorder %s16, 0
      %p119 = por %p117, %p118
      %p120 = scmp.ne.s32.totalorder %s106, %s107
      %p121 = scmp.eq.s32.totalorder %s17, 3
      %p122 = por %p120, %p121
      %p124 = scmp.ne.s32.totalorder %s107, %s123
      %p125 = scmp.eq.s32.totalorder %s17, 0
      %p126 = por %p124, %p125
      %s128 = sadd.s32 %s127, 1
      %p131 = scmp.eq.s32.totalorder %s11, 3
      %p132 = scmp.ne.s32.totalorder %s127, %s129
      %p133 = scmp.eq.s32.totalorder %s11, 0
      %p134 = por %p132, %p133
      %p135 = scmp.ne.s32.totalorder %s127, %s129
      %p136 = scmp.eq.s32.totalorder %s16, 3
      %p137 = por %p135, %p136
      %p138 = scmp.ne.s32.totalorder %s129, %s130
      %p139 = scmp.eq.s32.totalorder %s16, 0
      %p140 = por %p138, %p139
      %p141 = scmp.ne.s32.totalorder %s129, %s130
      %p142 = scmp.eq.s32.totalorder %s17, 3
      %p143 = por %p141, %p142
      %p145 = scmp.ne.s32.totalorder %s130, %s144
      %p146 = scmp.eq.s32.totalorder %s17, 0
      %p147 = por %p145, %p146
      %s148 = ssub.s32 %s19, %s26
      %s149 = ssub.s32 %s18, %s30
      %s150 = sor.u32 %s148, %s149
      %p151 = scmp.eq.s32.totalorder %s150, 0
      %s153 = sadd.s32 %s152, 1
      %s154 = scalar_select %p151, %s152, %s153
      %p157 = pneg %p151
      %p158 = scmp.eq.s32.totalorder %s11, 3
      %p159 = por %p157, %p158
      %p160 = scmp.ne.s32.totalorder %s152, %s155
      %p161 = scmp.eq.s32.totalorder %s11, 0
      %p162 = por %p160, %p161
      %p163 = scmp.ne.s32.totalorder %s152, %s155
      %p164 = scmp.eq.s32.totalorder %s16, 3
      %p165 = por %p163, %p164
      %p166 = scmp.ne.s32.totalorder %s155, %s156
      %p167 = scmp.eq.s32.totalorder %s16, 0
      %p168 = por %p166, %p167
      %p169 = scmp.ne.s32.totalorder %s155, %s156
      %p170 = scmp.eq.s32.totalorder %s17, 3
      %p171 = por %p169, %p170
      %p173 = scmp.ne.s32.totalorder %s156, %s172
      %p174 = scmp.eq.s32.totalorder %s17, 0
      %p175 = por %p173, %p174
      %p176 = scmp.le.s32.totalorder 1, %s11
      %p177 = scmp.lt.s32.totalorder %s11, 5
      %p178 = pnand %p176, %p177
      %p179 = pneg %p178
      // Predicated region
      $region9: #{_lambda_.35} parent=5 // pred_check
        _
      $region10: #{_lambda_.35} parent=5 // pred_check_branch
        %181 = sbr.rel (%p178) target = $region12
      $region11: #{_lambda_.35} parent=5 // pred_region
        %s182 = ssub.s32 %s11, 1
        // Predicated region
        $region13: #{_lambda_.35} parent=11 // pred_check
          %p183 = pneg %p72
        $region14: #{_lambda_.35} parent=11 // pred_check_branch
          %185 = sbr.rel (%p183) target = $region16
        $region15: #{_lambda_.35} parent=11 // pred_region
          _
        $region16: #{_lambda_.35} parent=11 // pred_fallthru
          _
        // Predicated region
        $region17: #{_lambda_.35} parent=11 // pred_check
          %p186 = pneg %p93
        $region18: #{_lambda_.35} parent=11 // pred_check_branch
          %188 = sbr.rel (%p186) target = $region20
        $region19: #{_lambda_.35} parent=11 // pred_region
          _
        $region20: #{_lambda_.35} parent=11 // pred_fallthru
          _
        // Predicated region
        $region21: #{_lambda_.35} parent=11 // pred_check
          %p189 = pneg %p140
        $region22: #{_lambda_.35} parent=11 // pred_check_branch
          %191 = sbr.rel (%p189) target = $region24
        $region23: #{_lambda_.35} parent=11 // pred_region
          _
        $region24: #{_lambda_.35} parent=11 // pred_fallthru
          _
      $region12: #{_lambda_.35} parent=5 // pred_fallthru
        _
      %p192 = scmp.lt.s32.totalorder %s11, 4
      // Predicated region
      $region25: #{_lambda_.35} parent=5 // pred_check
        %p193 = pneg %p192
      $region26: #{_lambda_.35} parent=5 // pred_check_branch
        %195 = sbr.rel (%p193) target = $region28
      $region27: #{_lambda_.35} parent=5 // pred_region
        // Predicated region
        $region29: #{_lambda_.35} parent=27 // pred_check
          %p196 = pneg %p45
        $region30: #{_lambda_.35} parent=27 // pred_check_branch
          %198 = sbr.rel (%p196) target = $region32
        $region31: #{_lambda_.35} parent=27 // pred_region
          %s199 = sand.u32 %s35, 1
          %s200 = sand.u32 %s35, 1
          %s201 = smul.addr %s200, 64
          %s202 = scalar_lea.vmem [#allocation2], %s201
          %s203 = smul.u32 8, %s18
          %s204 = smul.addr %s203, 2
          %s205 = sadd.s32 %s19, %s204
          %s206 = smul.addr %s205, 8
          %s207 = scalar_lea.vmem %s0, %s206
          // Predicated region
          $region33: #{_lambda_.35} parent=31 // pred_check
            _
          $region34: #{_lambda_.35} parent=31 // pred_check_branch
            %209 = sbr.rel (0) target = $region36
          $region35: #{_lambda_.35} parent=31 // pred_region
            // Predicated region
            $region37: #{_lambda_.35} parent=35 // pred_check
              _
            $region38: #{_lambda_.35} parent=35 // pred_check_branch
              %211 = sbr.rel (0) target = $region40
            $region39: #{_lambda_.35} parent=35 // pred_region
              // Predicated region
              $region52: #{_lambda_.35} parent=39 // pred_check
                _
              $region53: #{_lambda_.35} parent=39 // pred_check_branch
                %241 = sbr.rel (0) target = $region55
              $region54: #{_lambda_.35} parent=39 // pred_region
                loop: start=0, step=1, limit=1
                $region56: #{_lambda_.35} parent=54 // loop_pre_header
                  _
                $region57: #{_lambda_.35} parent=54 // loop_header
                  %s243 = sphi 0, %s247
                  %p244 = scmp.ge.s32.totalorder %s243, 1
                  %s248 = sphi %s207, %s207
                  %s249 = sphi %s202, %s202
                $region58: #{_lambda_.35} parent=54 // loop_header_branch
                  %246 = sbr.rel (%p244) target = $region62
                $region59: #{_lambda_.35} parent=54 // loop_body
                  %v250 = vld [vmem:[%s248] sm:$0xff]
                  %251 = vst [vmem:[%s249] sm:$0xff] %v250
                  %v252 = vld [vmem:[%s248 + $0x10] sm:$0xff]
                  %253 = vst [vmem:[%s249 + $0x8] sm:$0xff] %v252
                  %v254 = vld [vmem:[%s248 + $0x20] sm:$0xff]
                  %255 = vst [vmem:[%s249 + $0x10] sm:$0xff] %v254
                  %v256 = vld [vmem:[%s248 + $0x30] sm:$0xff]
                  %257 = vst [vmem:[%s249 + $0x18] sm:$0xff] %v256
                  %v258 = vld [vmem:[%s248 + $0x40] sm:$0xff]
                  %259 = vst [vmem:[%s249 + $0x20] sm:$0xff] %v258
                  %v260 = vld [vmem:[%s248 + $0x50] sm:$0xff]
                  %261 = vst [vmem:[%s249 + $0x28] sm:$0xff] %v260
                  %v262 = vld [vmem:[%s248 + $0x60] sm:$0xff]
                  %263 = vst [vmem:[%s249 + $0x30] sm:$0xff] %v262
                  %v264 = vld [vmem:[%s248 + $0x70] sm:$0xff]
                  %265 = vst [vmem:[%s249 + $0x38] sm:$0xff] %v264
                $region60: #{_lambda_.35} parent=54 // loop_footer
                  %s247 = sadd.s32 1, %s243
                $region61: #{_lambda_.35} parent=54 // loop_footer_branch
                  %242 = sbr.rel target = $region57
                $region62: #{_lambda_.35} parent=54 // loop_exit
                  _
              $region55: #{_lambda_.35} parent=39 // pred_fallthru
                _
              // Predicated region
              $region63: #{_lambda_.35} parent=39 // pred_check
                _
              $region64: #{_lambda_.35} parent=39 // pred_check_branch
                %267 = sbr.rel target = $region66
              $region65: #{_lambda_.35} parent=39 // pred_region
                _
              $region66: #{_lambda_.35} parent=39 // pred_fallthru
                _
            $region40: #{_lambda_.35} parent=35 // pred_fallthru
              _
            // Predicated region
            $region41: #{_lambda_.35} parent=35 // pred_check
              _
            $region42: #{_lambda_.35} parent=35 // pred_check_branch
              %213 = sbr.rel target = $region44
            $region43: #{_lambda_.35} parent=35 // pred_region
              %s215 = ssub.s32 256, 1
              loop: start=0, step=1, limit=1
              $region45: #{_lambda_.35} parent=43 // loop_pre_header
                _
              $region46: #{_lambda_.35} parent=43 // loop_header
                %s217 = sphi 0, %s221
                %p218 = scmp.ge.s32.totalorder %s217, 1
                %s222 = sphi %s207, %s207
                %s223 = sphi %s202, %s202
              $region47: #{_lambda_.35} parent=43 // loop_header_branch
                %220 = sbr.rel (%p218) target = $region51
              $region48: #{_lambda_.35} parent=43 // loop_body
                %v224 = vld [vmem:[%s222] sm:%s215]
                %225 = vst [vmem:[%s223] sm:%s215] %v224
                %v226 = vld [vmem:[%s222 + $0x10] sm:%s215]
                %227 = vst [vmem:[%s223 + $0x8] sm:%s215] %v226
                %v228 = vld [vmem:[%s222 + $0x20] sm:%s215]
                %229 = vst [vmem:[%s223 + $0x10] sm:%s215] %v228
                %v230 = vld [vmem:[%s222 + $0x30] sm:%s215]
                %231 = vst [vmem:[%s223 + $0x18] sm:%s215] %v230
                %v232 = vld [vmem:[%s222 + $0x40] sm:%s215]
                %233 = vst [vmem:[%s223 + $0x20] sm:%s215] %v232
                %v234 = vld [vmem:[%s222 + $0x50] sm:%s215]
                %235 = vst [vmem:[%s223 + $0x28] sm:%s215] %v234
                %v236 = vld [vmem:[%s222 + $0x60] sm:%s215]
                %237 = vst [vmem:[%s223 + $0x30] sm:%s215] %v236
                %v238 = vld [vmem:[%s222 + $0x70] sm:%s215]
                %239 = vst [vmem:[%s223 + $0x38] sm:%s215] %v238
              $region49: #{_lambda_.35} parent=43 // loop_footer
                %s221 = sadd.s32 1, %s217
              $region50: #{_lambda_.35} parent=43 // loop_footer_branch
                %216 = sbr.rel target = $region46
              $region51: #{_lambda_.35} parent=43 // loop_exit
                _
            $region44: #{_lambda_.35} parent=35 // pred_fallthru
              _
          $region36: #{_lambda_.35} parent=31 // pred_fallthru
            _
          %268 = vnop
        $region32: #{_lambda_.35} parent=27 // pred_fallthru
          _
        // Predicated region
        $region67: #{_lambda_.35} parent=27 // pred_check
          %p269 = pneg %p113
        $region68: #{_lambda_.35} parent=27 // pred_check_branch
          %271 = sbr.rel (%p269) target = $region70
        $region69: #{_lambda_.35} parent=27 // pred_region
          %s272 = smul.u32 8, %s18
          %p273 = scmp.lt.s32.totalorder %s272, 15
          %s274 = scalar_select %p273, %s272, 15
          %s275 = smul.addr %s274, 8
          %s276 = scalar_lea.vmem %s3, %s275
          %s277 = smul.u32 8, %s18
        $region70: #{_lambda_.35} parent=27 // pred_fallthru
          _
      $region28: #{_lambda_.35} parent=5 // pred_fallthru
        _
      %p278 = scmp.le.s32.totalorder 1, %s11
      %p279 = scmp.lt.s32.totalorder %s11, 5
      %p280 = pnand %p278, %p279
      %p281 = pneg %p280
      // Predicated region
      $region71: #{_lambda_.35} parent=5 // pred_check
        _
      $region72: #{_lambda_.35} parent=5 // pred_check_branch
        %283 = sbr.rel (%p280) target = $region74
      $region73: #{_lambda_.35} parent=5 // pred_region
        %s284 = ssub.s32 %s11, 1
        %s285 = sand.u32 %s38, 1
        %s286 = sand.u32 %s38, 1
        %s287 = smul.addr %s286, 64
        %s288 = scalar_lea.vmem [#allocation2], %s287
        // Predicated region
        $region75: #{_lambda_.35} parent=73 // pred_check
          %p289 = pneg %p51
        $region76: #{_lambda_.35} parent=73 // pred_check_branch
          %291 = sbr.rel (%p289) target = $region78
        $region77: #{_lambda_.35} parent=73 // pred_region
          _
        $region78: #{_lambda_.35} parent=73 // pred_fallthru
          _
        %s292 = sand.u32 %s38, 1
        %s293 = sand.u32 %s38, 1
        %s294 = smul.addr %s293, 64
        %s295 = scalar_lea.vmem [#allocation2], %s294
        %p296 = pneg %p51
        %p297 = pneg %p48
        %p298 = pneg %p72
        %p299 = pneg %p69
        %p300 = pneg %p93
        %p301 = pneg %p90
        %s302 = smul.u32 8, %s20
        %p303 = scmp.lt.s32.totalorder %s302, 15
        %s304 = scalar_select %p303, %s302, 15
        %s305 = smul.addr %s304, 8
        %s306 = scalar_lea.vmem %s3, %s305
        %p307 = pneg %p119
        %p308 = pneg %p116
        %p309 = pneg %p140
        %p310 = pneg %p137
        %p311 = pneg %p168
        %p312 = pneg %p165
        %s313 = smul.u32 8, %s20
        %p314 = scmp.lt.s32.totalorder %s21, 1
        %s315 = scalar_select %p314, %s21, 1
        %p316 = scmp.lt.s32.totalorder %s313, 15
        %s317 = scalar_select %p316, %s313, 15
        %s318 = smul.addr %s315, 16
        %s319 = sadd.s32 %s317, %s318
        %s320 = smul.addr %s319, 8
        %s321 = scalar_lea.vmem %s5, %s320
        %s322 = smul.u32 8, %s20
        %s323 = smul.u32 8, %s20
        %p324 = scmp.lt.s32.totalorder %s323, 15
        %s325 = scalar_select %p324, %s323, 15
        %s326 = smul.addr %s325, 8
        %s327 = scalar_lea.vmem %s3, %s326
        %s328 = smul.u32 8, %s20
        %s329 = smul.u32 8, %s20
        %p330 = scmp.lt.s32.totalorder %s21, 1
        %s331 = scalar_select %p330, %s21, 1
        %p332 = scmp.lt.s32.totalorder %s329, 15
        %s333 = scalar_select %p332, %s329, 15
        %s334 = smul.addr %s331, 16
        %s335 = sadd.s32 %s333, %s334
        %s336 = smul.addr %s335, 8
        %s337 = scalar_lea.vmem %s5, %s336
        %s338 = smul.u32 8, %s20
        %v339 = vld [vmem:[%s288] sm:$0xff]
        %v340 = vld [vmem:[%s288 + $0x8] sm:$0xff]
        %v341 = vld [vmem:[%s288 + $0x10] sm:$0xff]
        %v342 = vld [vmem:[%s288 + $0x18] sm:$0xff]
        %v343 = vld [vmem:[%s288 + $0x20] sm:$0xff]
        %v344 = vld [vmem:[%s288 + $0x28] sm:$0xff]
        %v345 = vld [vmem:[%s288 + $0x30] sm:$0xff]
        %v346 = vld [vmem:[%s288 + $0x38] sm:$0xff]
        %v347 = vpack.c.bf16 %v340, %v339
        %v348 = vpack.c.bf16 %v342, %v341
        %v349 = vpack.c.bf16 %v344, %v343
        %v350 = vpack.c.bf16 %v346, %v345
        %v351 = vld [vmem:[%s1] sm:$0xff]
        %v352 = vld [vmem:[%s1 + $0x8] sm:$0xff]
        %v353 = vld [vmem:[%s1 + $0x10] sm:$0xff]
        %v354 = vld [vmem:[%s1 + $0x18] sm:$0xff]
        %v355 = vld [vmem:[%s1 + $0x20] sm:$0xff]
        %v356 = vld [vmem:[%s1 + $0x28] sm:$0xff]
        %v357 = vld [vmem:[%s1 + $0x30] sm:$0xff]
        %v358 = vld [vmem:[%s1 + $0x38] sm:$0xff]
        %v359 = vld [vmem:[%s1 + $0x40] sm:$0xff]
        %v360 = vld [vmem:[%s1 + $0x48] sm:$0xff]
        %v361 = vld [vmem:[%s1 + $0x50] sm:$0xff]
        %v362 = vld [vmem:[%s1 + $0x58] sm:$0xff]
        %v363 = vld [vmem:[%s1 + $0x60] sm:$0xff]
        %v364 = vld [vmem:[%s1 + $0x68] sm:$0xff]
        %v365 = vld [vmem:[%s1 + $0x70] sm:$0xff]
        %v366 = vld [vmem:[%s1 + $0x78] sm:$0xff]
        %v367 = vld [vmem:[%s2] sm:$0x3]
        %v369 = vperm.slane %v367, 0
        %v370 = vperm.slane %v367, 1
        %v389 = vunpack.c.l.b16 %v351
        %v390 = vunpack.c.h.b16 %v351
        %v391 = vunpack.c.l.b16 %v352
        %v392 = vunpack.c.h.b16 %v352
        %v393 = vunpack.c.l.b16 %v353
        %v394 = vunpack.c.h.b16 %v353
        %v395 = vunpack.c.l.b16 %v354
        %v396 = vunpack.c.h.b16 %v354
        %v397 = vunpack.c.l.b16 %v355
        %v398 = vunpack.c.h.b16 %v355
        %v399 = vunpack.c.l.b16 %v356
        %v400 = vunpack.c.h.b16 %v356
        %v401 = vunpack.c.l.b16 %v357
        %v402 = vunpack.c.h.b16 %v357
        %v403 = vunpack.c.l.b16 %v358
        %v404 = vunpack.c.h.b16 %v358
        %v405 = vunpack.c.l.b16 %v359
        %v406 = vunpack.c.h.b16 %v359
        %v407 = vunpack.c.l.b16 %v360
        %v408 = vunpack.c.h.b16 %v360
        %v409 = vunpack.c.l.b16 %v361
        %v410 = vunpack.c.h.b16 %v361
        %v411 = vunpack.c.l.b16 %v362
        %v412 = vunpack.c.h.b16 %v362
        %v413 = vunpack.c.l.b16 %v363
        %v414 = vunpack.c.h.b16 %v363
        %v415 = vunpack.c.l.b16 %v364
        %v416 = vunpack.c.h.b16 %v364
        %v417 = vunpack.c.l.b16 %v365
        %v418 = vunpack.c.h.b16 %v365
        %v419 = vunpack.c.l.b16 %v366
        %v420 = vunpack.c.h.b16 %v366
        %v421 = vpack.c.b16 %v391, %v389
        %v422 = vpack.c.b16 %v392, %v390
        %v423 = vpack.c.b16 %v395, %v393
        %v424 = vpack.c.b16 %v396, %v394
        %v425 = vpack.c.b16 %v399, %v397
        %v426 = vpack.c.b16 %v400, %v398
        %v427 = vpack.c.b16 %v403, %v401
        %v428 = vpack.c.b16 %v404, %v402
        %v429 = vpack.c.b16 %v407, %v405
        %v430 = vpack.c.b16 %v408, %v406
        %v431 = vpack.c.b16 %v411, %v409
        %v432 = vpack.c.b16 %v412, %v410
        %v433 = vpack.c.b16 %v415, %v413
        %v434 = vpack.c.b16 %v416, %v414
        %v435 = vpack.c.b16 %v419, %v417
        %v436 = vpack.c.b16 %v420, %v418
        %453 = vmatpush.bf16.msra.mxu0 %v435
        %454 = vmatpush.bf16.msra.mxu0 %v433
        %455 = vmatpush.bf16.msra.mxu0 %v431
        %456 = vmatpush.bf16.msra.mxu0 %v429
        %457 = vmatpush.bf16.msra.mxu0 %v427
        %458 = vmatpush.bf16.msra.mxu0 %v425
        %459 = vmatpush.bf16.msra.mxu0 %v423
        %460 = vmatpush.bf16.msra.mxu0 %v421
        %461 = vmatmul.bf16.gmra.mxu0 %v347
        %v462 = vpop.f32.mrf.mxu0
        %v463 = vadd.f32 %v369, %v462
        %v464 = vpop.f32.mrf.mxu0
        %v465 = vadd.f32 %v369, %v464
        %466 = vmatmul.bf16.gmra.mxu0 %v348
        %v467 = vpop.f32.mrf.mxu0
        %v468 = vadd.f32 %v369, %v467
        %v469 = vpop.f32.mrf.mxu0
        %v470 = vadd.f32 %v369, %v469
        %471 = vmatmul.bf16.gmra.mxu0 %v349
        %v472 = vpop.f32.mrf.mxu0
        %v473 = vadd.f32 %v369, %v472
        %v474 = vpop.f32.mrf.mxu0
        %v475 = vadd.f32 %v369, %v474
        %476 = vmatmul.bf16.gmra.mxu0 %v350
        %v477 = vpop.f32.mrf.mxu0
        %v478 = vadd.f32 %v369, %v477
        %v479 = vpop.f32.mrf.mxu0
        %v480 = vadd.f32 %v369, %v479
        %481 = vdwg.mxu0
        %482 = vmatpush.bf16.msra.mxu0 %v436
        %483 = vmatpush.bf16.msra.mxu0 %v434
        %484 = vmatpush.bf16.msra.mxu0 %v432
        %485 = vmatpush.bf16.msra.mxu0 %v430
        %486 = vmatpush.bf16.msra.mxu0 %v428
        %487 = vmatpush.bf16.msra.mxu0 %v426
        %488 = vmatpush.bf16.msra.mxu0 %v424
        %489 = vmatpush.bf16.msra.mxu0 %v422
        %490 = vmatmul.bf16.gmra.mxu0 %v347
        %v491 = vpop.f32.mrf.mxu0
        %v492 = vadd.f32 %v370, %v491
        %v493 = vpop.f32.mrf.mxu0
        %v494 = vadd.f32 %v370, %v493
        %495 = vmatmul.bf16.gmra.mxu0 %v348
        %v496 = vpop.f32.mrf.mxu0
        %v497 = vadd.f32 %v370, %v496
        %v498 = vpop.f32.mrf.mxu0
        %v499 = vadd.f32 %v370, %v498
        %500 = vmatmul.bf16.gmra.mxu0 %v349
        %v501 = vpop.f32.mrf.mxu0
        %v502 = vadd.f32 %v370, %v501
        %v503 = vpop.f32.mrf.mxu0
        %v504 = vadd.f32 %v370, %v503
        %505 = vmatmul.bf16.gmra.mxu0 %v350
        %v506 = vpop.f32.mrf.mxu0
        %v507 = vadd.f32 %v370, %v506
        %v508 = vpop.f32.mrf.mxu0
        %v509 = vadd.f32 %v370, %v508
        %510 = vdwg.mxu0
        %v511 = vtanh.pop %v463
        %v512 = vtanh.pop %v465
        %v513 = vtanh.pop %v468
        %v514 = vtanh.pop %v470
        %v515 = vtanh.pop %v473
        %v516 = vtanh.pop %v475
        %v517 = vtanh.pop %v478
        %v518 = vtanh.pop %v480
        %v519 = vxor.u32 %v492, 2147483648
        %v520 = vxor.u32 %v494, 2147483648
        %v521 = vxor.u32 %v497, 2147483648
        %v522 = vxor.u32 %v499, 2147483648
        %v523 = vxor.u32 %v502, 2147483648
        %v524 = vxor.u32 %v504, 2147483648
        %v525 = vxor.u32 %v507, 2147483648
        %v526 = vxor.u32 %v509, 2147483648
        %v527 = vmul.f32 %v519, 1.442695
        %v528 = vpow.pop %v527
        %v529 = vmul.f32 %v520, 1.442695
        %v530 = vpow.pop %v529
        %v531 = vmul.f32 %v521, 1.442695
        %v532 = vpow.pop %v531
        %v533 = vmul.f32 %v522, 1.442695
        %v534 = vpow.pop %v533
        %v535 = vmul.f32 %v523, 1.442695
        %v536 = vpow.pop %v535
        %v537 = vmul.f32 %v524, 1.442695
        %v538 = vpow.pop %v537
        %v539 = vmul.f32 %v525, 1.442695
        %v540 = vpow.pop %v539
        %v541 = vmul.f32 %v526, 1.442695
        %v542 = vpow.pop %v541
        %v543 = vadd.f32 %v528, 1.0
        %v544 = vadd.f32 %v530, 1.0
        %v545 = vadd.f32 %v532, 1.0
        %v546 = vadd.f32 %v534, 1.0
        %v547 = vadd.f32 %v536, 1.0
        %v548 = vadd.f32 %v538, 1.0
        %v549 = vadd.f32 %v540, 1.0
        %v550 = vadd.f32 %v542, 1.0
        %v551 = vrcp.pop %v543
        %v552 = vmul.f32 %v543, %v551
        %v553 = vsub.f32 1.0, %v552
        %v554 = vmul.f32 %v551, %v553
        %v555 = vadd.f32 %v551, %v554
        %vm556 = vweird.f32 %v543
        %vm557 = vweird.f32 %v551
        %vm558 = vmor %vm556, %vm557
        %v559 = vsel %vm558, %v551, %v555
        %v560 = vand.u32 2147483647, %v543
        %vm561 = vcmp.eq.f32.partialorder %v560, 8.507059e+37
        %v562 = vand.u32 %v543, 2147483648
        %v563 = vor.u32 1.1754944e-38, %v562
        %v564 = vsel %vm561, %v563, %v559
        %v565 = vmul.f32 1.0, %v564
        %v566 = vrcp.pop %v544
        %v567 = vmul.f32 %v544, %v566
        %v568 = vsub.f32 1.0, %v567
        %v569 = vmul.f32 %v566, %v568
        %v570 = vadd.f32 %v566, %v569
        %vm571 = vweird.f32 %v544
        %vm572 = vweird.f32 %v566
        %vm573 = vmor %vm571, %vm572
        %v574 = vsel %vm573, %v566, %v570
        %v575 = vand.u32 2147483647, %v544
        %vm576 = vcmp.eq.f32.partialorder %v575, 8.507059e+37
        %v577 = vand.u32 %v544, 2147483648
        %v578 = vor.u32 1.1754944e-38, %v577
        %v579 = vsel %vm576, %v578, %v574
        %v580 = vmul.f32 1.0, %v579
        %v581 = vrcp.pop %v545
        %v582 = vmul.f32 %v545, %v581
        %v583 = vsub.f32 1.0, %v582
        %v584 = vmul.f32 %v581, %v583
        %v585 = vadd.f32 %v581, %v584
        %vm586 = vweird.f32 %v545
        %vm587 = vweird.f32 %v581
        %vm588 = vmor %vm586, %vm587
        %v589 = vsel %vm588, %v581, %v585
        %v590 = vand.u32 2147483647, %v545
        %vm591 = vcmp.eq.f32.partialorder %v590, 8.507059e+37
        %v592 = vand.u32 %v545, 2147483648
        %v593 = vor.u32 1.1754944e-38, %v592
        %v594 = vsel %vm591, %v593, %v589
        %v595 = vmul.f32 1.0, %v594
        %v596 = vrcp.pop %v546
        %v597 = vmul.f32 %v546, %v596
        %v598 = vsub.f32 1.0, %v597
        %v599 = vmul.f32 %v596, %v598
        %v600 = vadd.f32 %v596, %v599
        %vm601 = vweird.f32 %v546
        %vm602 = vweird.f32 %v596
        %vm603 = vmor %vm601, %vm602
        %v604 = vsel %vm603, %v596, %v600
        %v605 = vand.u32 2147483647, %v546
        %vm606 = vcmp.eq.f32.partialorder %v605, 8.507059e+37
        %v607 = vand.u32 %v546, 2147483648
        %v608 = vor.u32 1.1754944e-38, %v607
        %v609 = vsel %vm606, %v608, %v604
        %v610 = vmul.f32 1.0, %v609
        %v611 = vrcp.pop %v547
        %v612 = vmul.f32 %v547, %v611
        %v613 = vsub.f32 1.0, %v612
        %v614 = vmul.f32 %v611, %v613
        %v615 = vadd.f32 %v611, %v614
        %vm616 = vweird.f32 %v547
        %vm617 = vweird.f32 %v611
        %vm618 = vmor %vm616, %vm617
        %v619 = vsel %vm618, %v611, %v615
        %v620 = vand.u32 2147483647, %v547
        %vm621 = vcmp.eq.f32.partialorder %v620, 8.507059e+37
        %v622 = vand.u32 %v547, 2147483648
        %v623 = vor.u32 1.1754944e-38, %v622
        %v624 = vsel %vm621, %v623, %v619
        %v625 = vmul.f32 1.0, %v624
        %v626 = vrcp.pop %v548
        %v627 = vmul.f32 %v548, %v626
        %v628 = vsub.f32 1.0, %v627
        %v629 = vmul.f32 %v626, %v628
        %v630 = vadd.f32 %v626, %v629
        %vm631 = vweird.f32 %v548
        %vm632 = vweird.f32 %v626
        %vm633 = vmor %vm631, %vm632
        %v634 = vsel %vm633, %v626, %v630
        %v635 = vand.u32 2147483647, %v548
        %vm636 = vcmp.eq.f32.partialorder %v635, 8.507059e+37
        %v637 = vand.u32 %v548, 2147483648
        %v638 = vor.u32 1.1754944e-38, %v637
        %v639 = vsel %vm636, %v638, %v634
        %v640 = vmul.f32 1.0, %v639
        %v641 = vrcp.pop %v549
        %v642 = vmul.f32 %v549, %v641
        %v643 = vsub.f32 1.0, %v642
        %v644 = vmul.f32 %v641, %v643
        %v645 = vadd.f32 %v641, %v644
        %vm646 = vweird.f32 %v549
        %vm647 = vweird.f32 %v641
        %vm648 = vmor %vm646, %vm647
        %v649 = vsel %vm648, %v641, %v645
        %v650 = vand.u32 2147483647, %v549
        %vm651 = vcmp.eq.f32.partialorder %v650, 8.507059e+37
        %v652 = vand.u32 %v549, 2147483648
        %v653 = vor.u32 1.1754944e-38, %v652
        %v654 = vsel %vm651, %v653, %v649
        %v655 = vmul.f32 1.0, %v654
        %v656 = vrcp.pop %v550
        %v657 = vmul.f32 %v550, %v656
        %v658 = vsub.f32 1.0, %v657
        %v659 = vmul.f32 %v656, %v658
        %v660 = vadd.f32 %v656, %v659
        %vm661 = vweird.f32 %v550
        %vm662 = vweird.f32 %v656
        %vm663 = vmor %vm661, %vm662
        %v664 = vsel %vm663, %v656, %v660
        %v665 = vand.u32 2147483647, %v550
        %vm666 = vcmp.eq.f32.partialorder %v665, 8.507059e+37
        %v667 = vand.u32 %v550, 2147483648
        %v668 = vor.u32 1.1754944e-38, %v667
        %v669 = vsel %vm666, %v668, %v664
        %v670 = vmul.f32 1.0, %v669
        %v671 = vmul.f32 %v511, %v565
        %v672 = vmul.f32 %v512, %v580
        %v673 = vmul.f32 %v513, %v595
        %v674 = vmul.f32 %v514, %v610
        %v675 = vmul.f32 %v515, %v625
        %v676 = vmul.f32 %v516, %v640
        %v677 = vmul.f32 %v517, %v655
        %v678 = vmul.f32 %v518, %v670
        %v679 = vmax.f32 %v671, 0.0
        %v680 = vmax.f32 %v672, 0.0
        %v681 = vmax.f32 %v673, 0.0
        %v682 = vmax.f32 %v674, 0.0
        %v683 = vmax.f32 %v675, 0.0
        %v684 = vmax.f32 %v676, 0.0
        %v685 = vmax.f32 %v677, 0.0
        %v686 = vmax.f32 %v678, 0.0
        %v687 = vld [vmem:[%s327] sm:$0xff]
        %v688 = vld [vmem:[%s327 + $0x8] sm:$0xff]
        %v689 = vld [vmem:[%s327 + $0x10] sm:$0xff]
        %v690 = vld [vmem:[%s327 + $0x18] sm:$0xff]
        %v691 = vld [vmem:[%s327 + $0x20] sm:$0xff]
        %v692 = vld [vmem:[%s327 + $0x28] sm:$0xff]
        %v693 = vld [vmem:[%s327 + $0x30] sm:$0xff]
        %v694 = vld [vmem:[%s327 + $0x38] sm:$0xff]
        %v695 = vmul.f32 %v679, %v687
        %v696 = vmul.f32 %v680, %v688
        %v697 = vmul.f32 %v681, %v689
        %v698 = vmul.f32 %v682, %v690
        %v699 = vmul.f32 %v683, %v691
        %v700 = vmul.f32 %v684, %v692
        %v701 = vmul.f32 %v685, %v693
        %v702 = vmul.f32 %v686, %v694
        %v703 = vpack.c.bf16 %v696, %v695
        %v704 = vpack.c.bf16 %v698, %v697
        %v705 = vpack.c.bf16 %v700, %v699
        %v706 = vpack.c.bf16 %v702, %v701
        %v707 = vld [vmem:[%s4] sm:$0xf]
        %v708 = vld [vmem:[%s4 + $0x4] sm:$0xf]
        %v709 = vld [vmem:[%s4 + $0x8] sm:$0xf]
        %v710 = vld [vmem:[%s4 + $0xc] sm:$0xf]
        %v711 = vld [vmem:[%s4 + $0x10] sm:$0xf]
        %v712 = vld [vmem:[%s4 + $0x14] sm:$0xf]
        %v713 = vld [vmem:[%s4 + $0x18] sm:$0xf]
        %v714 = vld [vmem:[%s4 + $0x1c] sm:$0xf]
        %v715 = vld [vmem:[%s4 + $0x20] sm:$0xf]
        %v716 = vld [vmem:[%s4 + $0x24] sm:$0xf]
        %v717 = vld [vmem:[%s4 + $0x28] sm:$0xf]
        %v718 = vld [vmem:[%s4 + $0x2c] sm:$0xf]
        %v719 = vld [vmem:[%s4 + $0x30] sm:$0xf]
        %v720 = vld [vmem:[%s4 + $0x34] sm:$0xf]
        %v721 = vld [vmem:[%s4 + $0x38] sm:$0xf]
        %v722 = vld [vmem:[%s4 + $0x3c] sm:$0xf]
        %v739 = vunpack.c.l.b16 %v707
        %v740 = vunpack.c.l.b16 %v708
        %v741 = vunpack.c.l.b16 %v709
        %v742 = vunpack.c.l.b16 %v710
        %v743 = vunpack.c.l.b16 %v711
        %v744 = vunpack.c.l.b16 %v712
        %v745 = vunpack.c.l.b16 %v713
        %v746 = vunpack.c.l.b16 %v714
        %v747 = vunpack.c.l.b16 %v715
        %v748 = vunpack.c.l.b16 %v716
        %v749 = vunpack.c.l.b16 %v717
        %v750 = vunpack.c.l.b16 %v718
        %v751 = vunpack.c.l.b16 %v719
        %v752 = vunpack.c.l.b16 %v720
        %v753 = vunpack.c.l.b16 %v721
        %v754 = vunpack.c.l.b16 %v722
        %v755 = vpack.c.b16 %v740, %v739
        %v756 = vpack.c.b16 %v742, %v741
        %v757 = vpack.c.b16 %v744, %v743
        %v758 = vpack.c.b16 %v746, %v745
        %v759 = vpack.c.b16 %v748, %v747
        %v760 = vpack.c.b16 %v750, %v749
        %v761 = vpack.c.b16 %v752, %v751
        %v762 = vpack.c.b16 %v754, %v753
        %771 = vmatpush.bf16.msra.mxu0 %v762
        %772 = vmatpush.bf16.msra.mxu0 %v761
        %773 = vmatpush.bf16.msra.mxu0 %v760
        %774 = vmatpush.bf16.msra.mxu0 %v759
        %775 = vmatpush.bf16.msra.mxu0 %v758
        %776 = vmatpush.bf16.msra.mxu0 %v757
        %777 = vmatpush.bf16.msra.mxu0 %v756
        %778 = vmatpush.bf16.msra.mxu0 %v755
        %779 = vmatmul.bf16.gmra.mxu0 %v703
        %v780 = vpop.f32.mrf.mxu0
        %v781 = vadd.f32 0.0, %v780
        %v782 = vpop.f32.mrf.mxu0
        %v783 = vadd.f32 0.0, %v782
        %784 = vmatmul.bf16.gmra.mxu0 %v704
        %v785 = vpop.f32.mrf.mxu0
        %v786 = vadd.f32 0.0, %v785
        %v787 = vpop.f32.mrf.mxu0
        %v788 = vadd.f32 0.0, %v787
        %789 = vmatmul.bf16.gmra.mxu0 %v705
        %v790 = vpop.f32.mrf.mxu0
        %v791 = vadd.f32 0.0, %v790
        %v792 = vpop.f32.mrf.mxu0
        %v793 = vadd.f32 0.0, %v792
        %794 = vmatmul.bf16.gmra.mxu0 %v706
        %v795 = vpop.f32.mrf.mxu0
        %v796 = vadd.f32 0.0, %v795
        %v797 = vpop.f32.mrf.mxu0
        %v798 = vadd.f32 0.0, %v797
        %799 = vdwg.mxu0
        %vm800 = vcmask 15360
        %801 = vst.msk [vmem:[%s337] sm:$0xff] %vm800, %v781
        %802 = vst.msk [vmem:[%s337 + $0x8] sm:$0xff] %vm800, %v783
        %803 = vst.msk [vmem:[%s337 + $0x10] sm:$0xff] %vm800, %v786
        %804 = vst.msk [vmem:[%s337 + $0x18] sm:$0xff] %vm800, %v788
        %805 = vst.msk [vmem:[%s337 + $0x20] sm:$0xff] %vm800, %v791
        %806 = vst.msk [vmem:[%s337 + $0x28] sm:$0xff] %vm800, %v793
        %807 = vst.msk [vmem:[%s337 + $0x30] sm:$0xff] %vm800, %v796
        %808 = vst.msk [vmem:[%s337 + $0x38] sm:$0xff] %vm800, %v798
        %s809 = smul.u32 8, %s20
        %p810 = scmp.lt.s32.totalorder %s21, 1
        %s811 = scalar_select %p810, %s21, 1
        %p812 = scmp.lt.s32.totalorder %s809, 15
        %s813 = scalar_select %p812, %s809, 15
        %s814 = smul.addr %s811, 16
        %s815 = sadd.s32 %s813, %s814
        %s816 = smul.addr %s815, 8
        %s817 = scalar_lea.vmem %s5, %s816
        // Predicated region
        $region79: #{_lambda_.35} parent=73 // pred_check
          %p818 = pneg %p165
        $region80: #{_lambda_.35} parent=73 // pred_check_branch
          %820 = sbr.rel (%p818) target = $region82
        $region81: #{_lambda_.35} parent=73 // pred_region
          %s821 = smul.u32 8, %s20
        $region82: #{_lambda_.35} parent=73 // pred_fallthru
          _
      $region74: #{_lambda_.35} parent=5 // pred_fallthru
        _
      %p822 = scmp.le.s32.totalorder 2, %s11
      // Predicated region
      $region83: #{_lambda_.35} parent=5 // pred_check
        %p823 = pneg %p822
      $region84: #{_lambda_.35} parent=5 // pred_check_branch
        %825 = sbr.rel (%p823) target = $region86
      $region85: #{_lambda_.35} parent=5 // pred_region
        %s826 = ssub.s32 %s11, 2
        // Predicated region
        $region87: #{_lambda_.35} parent=85 // pred_check
          %p827 = pneg %p171
        $region88: #{_lambda_.35} parent=85 // pred_check_branch
          %829 = sbr.rel (%p827) target = $region90
        $region89: #{_lambda_.35} parent=85 // pred_region
          %s830 = smul.u32 8, %s22
          %p831 = scmp.lt.s32.totalorder %s23, 1
          %s832 = scalar_select %p831, %s23, 1
          %p833 = scmp.lt.s32.totalorder %s830, 15
          %s834 = scalar_select %p833, %s830, 15
          %s835 = smul.addr %s832, 16
          %s836 = sadd.s32 %s834, %s835
          %s837 = smul.addr %s836, 8
          %s838 = scalar_lea.vmem %s5, %s837
        $region90: #{_lambda_.35} parent=85 // pred_fallthru
          _
      $region86: #{_lambda_.35} parent=5 // pred_fallthru
        _
    $region6: #{_lambda_.35} parent=1 // loop_footer
      %s15 = sadd.s32 1, %s11
    $region7: #{_lambda_.35} parent=1 // loop_footer_branch
      %10 = sbr.rel target = $region3
    $region8: #{_lambda_.35} parent=1 // loop_exit
      _

</llo_original>
